<compile_context>
chip_gen: v6e
topology: v6e:2x2x1
jax: 0.10.0
libtpu: 0.0.40
codegen_flags: <defaults>
</compile_context>

<pallas_src>
import functools
import math

import jax
import jax.numpy as jnp
from jax.experimental import pallas as pl
from jax.experimental.pallas import tpu as pltpu

EMB = 64
PATCH = 8
HEADS = 4
HEAD_DIM = EMB // HEADS
DEPTH = 4
FF_EXP = 4
FF_DIM = FF_EXP * EMB          # 256
WPAD = 512                     # padded width of the fused [Wff1|Wq|Wk|Wv] blob
LN_EPS = 1e-5


# ---------------------------------------------------------------------------
# In-kernel math helpers (bf16 MXU operands, f32 accumulation & elementwise)
# ---------------------------------------------------------------------------
def _mm(a, w_bf16):
    """MXU matmul: bf16 operands, f32 accumulation."""
    return jnp.dot(a.astype(jnp.bfloat16), w_bf16,
                   preferred_element_type=jnp.float32)


def _erf(x):
    # Abramowitz & Stegun 7.1.26 (|error| < 1.5e-7): numerically equivalent to
    # exact-erf GELU at f32 precision; built from exp/mul/add/div only.
    p = 0.3275911
    a1, a2, a3, a4, a5 = (0.254829592, -0.284496736, 1.421413741,
                          -1.453152027, 1.061405429)
    ax = jnp.abs(x)
    t = 1.0 / (1.0 + p * ax)
    poly = t * (a1 + t * (a2 + t * (a3 + t * (a4 + t * a5))))
    y = 1.0 - poly * jnp.exp(-ax * ax)
    return jnp.where(x >= 0.0, y, -y)


def _gelu_exact(x):
    return 0.5 * x * (1.0 + _erf(x * (1.0 / math.sqrt(2.0))))


def _layernorm(x, g, b):
    mean = jnp.mean(x, axis=-1, keepdims=True)
    d = x - mean
    var = jnp.mean(d * d, axis=-1, keepdims=True)
    return d * jax.lax.rsqrt(var + LN_EPS) * g + b


# ---------------------------------------------------------------------------
# The single fused forward kernel
# ---------------------------------------------------------------------------
def _fused_forward_kernel(
    patches_ref,                 # (L*Nb, P*P)   f32  Mtf+Mtv patch matrix
    mt_ref,                      # (2*rows, 64)  f32  [mtf_rows ; mtv_rows]
    pw_ref, pb_ref,              # (P*P, E) bf16 / (1, E) f32
    w_big_ref, b_big_ref,        # (D, E, 512) bf16 / (D, 1, 512) f32  [Wff1|Wq|Wk|Wv|0]
    w_out_ref,                   # (D, E, E)   bf16
    w_ff1_ref,                   # (D, E, 4E)  bf16
    w_ff2_ref,                   # (D, 4E, E)  bf16
    misc_ref,                    # (D, 4, E)   f32  rows: ln_g, ln_b, b_out, b_ff2
    head_ones_ref,               # (E, E) bf16  block-diagonal 0/1
    sel_ref,                     # (rows, L*Nb) bf16  epilogue gather, w0/w1 folded
    conv_b_ref,                  # (1,) f32 SMEM: conv bias
    out_ref,                     # (rows, 64) f32
    *, seq_b, tokens,
):
    # nn.MultiheadAttention default batch_first=False: the (B, S, E) tensor is
    # read as (seq_len=B, batch=S, emb)  ->  L = B, Nb = S (quirk reproduced).
    L, Nb = seq_b, tokens
    rows_out = out_ref.shape[0]
    head_ones = head_ones_ref[...]                                 # (E, E) bf16

    # ---- patch embedding: Mtf & Mtv patches of every batch in ONE matmul ----
    x = _mm(patches_ref[...], pw_ref[...]) + pb_ref[...]           # (L*Nb, E) f32

    # ---- DEPTH unrolled encoder layers, all weights VMEM-resident ----------
    for layer in range(DEPTH):
        misc = misc_ref[layer]                                     # (4, E) f32
        ln_g, ln_b = misc[0:1, :], misc[1:2, :]
        b_out, b_ff2 = misc[2:3, :], misc[3:4, :]
        b_big = b_big_ref[layer]                                   # (1, 512) f32

        xn = _layernorm(x, ln_g, ln_b)                             # (L*Nb, E)

        # One fused projection: [FF1 pre-act | q(scaled) | k | v | pad]
        big = _mm(xn, w_big_ref[layer]) + b_big                    # (L*Nb, 512)
        h1a = big[:, 0:FF_DIM]
        q = big[:, FF_DIM:FF_DIM + EMB]
        k = big[:, FF_DIM + EMB:FF_DIM + 2 * EMB]
        v = big[:, FF_DIM + 2 * EMB:FF_DIM + 3 * EMB]

        q_seq = [q[i * Nb:(i + 1) * Nb, :] for i in range(L)]      # 8-row aligned
        k_seq = [k[i * Nb:(i + 1) * Nb, :] for i in range(L)]
        v_seq = [v[i * Nb:(i + 1) * Nb, :] for i in range(L)]

        # -- multi-head self-attention: all L*L logit blocks in ONE matmul.
        # (q*k) @ head_ones both reduces each head's 16 lanes AND broadcasts
        # the per-head logit back across them (no unaligned lane slicing).
        qk = jnp.concatenate([q_seq[i] * k_seq[j]
                              for i in range(L) for j in range(L)], axis=0)
        logits_all = jnp.dot(qk.astype(jnp.bfloat16), head_ones,
                             preferred_element_type=jnp.float32)   # (L*L*Nb, E)

        ctx = []
        for i in range(L):
            logit = [logits_all[(i * L + j) * Nb:(i * L + j + 1) * Nb, :]
                     for j in range(L)]
            m = logit[0]
            for j in range(1, L):
                m = jnp.maximum(m, logit[j])
            e = [jnp.exp(t - m) for t in logit]
            den = e[0]
            num = e[0] * v_seq[0]
            for j in range(1, L):
                den = den + e[j]
                num = num + e[j] * v_seq[j]
            # den >= 1 (max-subtracted), approx reciprocal is safe here.
            ctx.append(num * pl.reciprocal(den, approx=True))      # (Nb, E)
        attn = jnp.concatenate(ctx, axis=0)                        # (L*Nb, E)

        # out-projection with residual add
        x = x + _mm(attn, w_out_ref[layer]) + b_out

        # -- feed-forward applied TWICE exactly as in the reference forward --
        ffa = _mm(_gelu_exact(h1a), w_ff2_ref[layer]) + b_ff2      # ff(xn)
        x_norm2 = x + ffa
        h1b = _mm(x_norm2, w_ff1_ref[layer]) + b_big[:, 0:FF_DIM]
        ffb = _mm(_gelu_exact(h1b), w_ff2_ref[layer]) + b_ff2      # ff(x_norm2)
        x = x_norm2 + ffb

    # ---- fused epilogue: 0.5*(Mtf+Mtv) + 1x1 conv over the reshaped output --
    # reshape((B,2N,E)->(B,2,H,W)) + Conv2d(2->1,k=1) is a weighted row-gather
    # of x; sel (precomputed, w0/w1 folded) expresses it as one tiny matmul.
    mtf = mt_ref[0:rows_out, :]
    mtv = mt_ref[rows_out:2 * rows_out, :]
    conv = jnp.dot(sel_ref[...], x.astype(jnp.bfloat16),
                   preferred_element_type=jnp.float32)             # (rows, 64)
    out_ref[...] = 0.5 * (mtf + mtv) + conv + conv_b_ref[0]


# ---------------------------------------------------------------------------
# Host-side wrapper (layout plumbing only; all compute is in the kernel)
# ---------------------------------------------------------------------------
def _extract_patches(img):
    """(B, C, H, W) -> (B, hp*wp, C*P*P) matching Conv2d(k=P, s=P)+flatten+T."""
    B, C, H, W = img.shape
    hp, wp = H // PATCH, W // PATCH
    p = img.reshape(B, C, hp, PATCH, wp, PATCH)
    p = jnp.transpose(p, (0, 2, 4, 1, 3, 5))
    return p.reshape(B, hp * wp, C * PATCH * PATCH)


def restrans_forward(kp, mtf, mtv):
    """Full ResTrans forward.  mtf, mtv: (B, 1, H, W) f32 -> (B, 1, H, W)."""
    B, C, H, W = mtf.shape
    n_patch = (H // PATCH) * (W // PATCH)
    tokens = 2 * n_patch                       # = S of the (B, S, E) tensor
    lane = PATCH * PATCH                       # 64 (== EMB for this model)
    assert (H * W) % lane == 0
    rows_out = (B * H * W) // lane
    assert kp["sel"].shape == (rows_out, B * tokens), "prepare_params shape mismatch"

    patches = jnp.concatenate(
        [_extract_patches(mtf), _extract_patches(mtv)], axis=1)    # (B, 2N, CPP)
    patches = patches.reshape(B * tokens, C * PATCH * PATCH)
    mt_rows = jnp.concatenate([mtf.reshape(rows_out, lane),
                               mtv.reshape(rows_out, lane)], axis=0)

    vmem = pl.BlockSpec(memory_space=pltpu.MemorySpace.VMEM)
    smem = pl.BlockSpec(memory_space=pltpu.MemorySpace.SMEM)
    kern = functools.partial(_fused_forward_kernel, seq_b=B, tokens=tokens)

    out = pl.pallas_call(
        kern,
        out_shape=jax.ShapeDtypeStruct((rows_out, lane), jnp.float32),
        in_specs=[vmem, vmem,                  # patches, [mtf;mtv] rows
                  vmem, vmem,                  # patch-embed weight / bias
                  vmem, vmem,                  # fused [Wff1|Wq|Wk|Wv] weight / bias
                  vmem, vmem, vmem,            # Wout, Wff1, Wff2 stacks
                  vmem,                        # ln_g / ln_b / b_out / b_ff2
                  vmem, vmem,                  # head_ones, sel
                  smem],                       # conv bias scalar
        out_specs=vmem,
    )(patches, mt_rows,
      kp["pw"], kp["pb"], kp["w_big"], kp["b_big"], kp["w_out"], kp["w_ff1"],
      kp["w_ff2"], kp["misc"], kp["head_ones"], kp["sel"], kp["conv_b"])
    return out.reshape(B, 1, H, W)


# ---------------------------------------------------------------------------
# Parameter preparation (ONE-TIME, outside the hot path): transpose to (K, N),
# fold the attention scale into q, fuse/pad/stack weights, cast MXU operands
# to bf16, and precompute head_ones + the epilogue selection matrix.
# ---------------------------------------------------------------------------
def prepare_params(p, *, batch, height, width):
    bf, f32 = jnp.bfloat16, jnp.float32
    ls = p["layers"]
    scale = 1.0 / math.sqrt(HEAD_DIM)
    pad_cols = WPAD - (FF_DIM + 3 * EMB)       # 64 zero columns

    w_big, b_big, w_out, w_ff1, w_ff2, misc = [], [], [], [], [], []
    for l in ls:
        wq = l["in_w"][0:EMB].T * scale                    # scale folded in
        wk = l["in_w"][EMB:2 * EMB].T
        wv = l["in_w"][2 * EMB:3 * EMB].T
        bq = l["in_b"][0:EMB] * scale
        bk = l["in_b"][EMB:2 * EMB]
        bv = l["in_b"][2 * EMB:3 * EMB]
        wf1 = l["ff1_w"].T                                 # (E, 4E)
        w_big.append(jnp.concatenate(
            [wf1, wq, wk, wv, jnp.zeros((EMB, pad_cols), f32)], axis=1))
        b_big.append(jnp.concatenate(
            [l["ff1_b"], bq, bk, bv, jnp.zeros((pad_cols,), f32)]))
        w_out.append(l["out_w"].T)
        w_ff1.append(wf1)
        w_ff2.append(l["ff2_w"].T)
        misc.append(jnp.stack([l["ln1_g"], l["ln1_b"], l["out_b"], l["ff2_b"]]))

    # Block-diagonal head-segment matrix (exact 0/1 -> lossless in bf16).
    di = jnp.arange(EMB)[:, None] // HEAD_DIM
    dj = jnp.arange(EMB)[None, :] // HEAD_DIM
    head_ones = (di == dj).astype(bf)

    # Epilogue selection matrix with the 1x1-conv weights w0/w1 folded in.
    n_patch = (height // PATCH) * (width // PATCH)
    tokens = 2 * n_patch
    half = n_patch
    rows_out = batch * half
    w0 = p["conv_w"][0, 0, 0, 0]
    w1 = p["conv_w"][0, 1, 0, 0]
    oi = jnp.arange(rows_out)[:, None]
    oj = jnp.arange(batch * tokens)[None, :]
    src0 = (oi // half) * tokens + (oi % half)
    sel = (jnp.where(oj == src0, w0, 0.0)
           + jnp.where(oj == src0 + half, w1, 0.0)).astype(bf)

    return {
        "pw": p["patch_w"].reshape(EMB, -1).T.astype(bf),          # (P*P, EMB)
        "pb": p["patch_b"].reshape(1, EMB).astype(f32),
        "w_big": jnp.stack(w_big).astype(bf),                      # (D, 64, 512)
        "b_big": jnp.stack(b_big).reshape(DEPTH, 1, WPAD).astype(f32),
        "w_out": jnp.stack(w_out).astype(bf),                      # (D, 64, 64)
        "w_ff1": jnp.stack(w_ff1).astype(bf),                      # (D, 64, 256)
        "w_ff2": jnp.stack(w_ff2).astype(bf),                      # (D, 256, 64)
        "misc": jnp.stack(misc).astype(f32),                       # (D, 4, 64)
        "head_ones": head_ones,                                    # (64, 64)
        "sel": sel,                                                # (rows, B*2N)
        "conv_b": p["conv_b"].reshape(1).astype(f32),
    }


# ---------------------------------------------------------------------------
# Deterministic synthetic parameters (PyTorch layout, shapes from __init__)
# ---------------------------------------------------------------------------
def init_params(key):
    keys = iter(jax.random.split(key, 64))

    def nrm(shape, scale=0.05):
        return jax.random.normal(next(keys), shape, dtype=jnp.float32) * scale

    params = {
        "patch_w": nrm((EMB, 1, PATCH, PATCH)),
        "patch_b": nrm((EMB,)),
        "conv_w": nrm((1, 2, 1, 1)),
        "conv_b": nrm((1,)),
        "layers": [],
    }
    for _ in range(DEPTH):
        params["layers"].append({
            "ln1_g": jnp.ones((EMB,), jnp.float32),
            "ln1_b": jnp.zeros((EMB,), jnp.float32),
            "in_w": nrm((3 * EMB, EMB)),
            "in_b": nrm((3 * EMB,)),
            "out_w": nrm((EMB, EMB)),
            "out_b": nrm((EMB,)),
            "ff1_w": nrm((FF_EXP * EMB, EMB)),
            "ff1_b": nrm((FF_EXP * EMB,)),
            "ff2_w": nrm((EMB, FF_EXP * EMB)),
            "ff2_b": nrm((EMB,)),
        })
    return params


if __name__ == "__main__":
    key = jax.random.PRNGKey(0)
    kparam, k1, k2 = jax.random.split(key, 3)
    params = init_params(kparam)

    B, H, W = 2, 16, 16                        # H, W multiples of patch_size=8
    kernel_params = prepare_params(params, batch=B, height=H, width=W)

    Mtf = jax.random.normal(k1, (B, 1, H, W), dtype=jnp.float32)
    Mtv = jax.random.normal(k2, (B, 1, H, W), dtype=jnp.float32)

    fwd = jax.jit(restrans_forward)
    out = jax.block_until_ready(fwd(kernel_params, Mtf, Mtv))

    assert out.shape == (B, 1, H, W), out.shape
    assert bool(jnp.all(jnp.isfinite(out)))
    print("KERNEL_OK")
</pallas_src>

<mosaic_0001>
module attributes {stable_mosaic.version = 11 : i64} {
  func.func @_fused_forward_kernel(%arg0: memref<16x64xf32, #tpu.memory_space<vmem>>, %arg1: memref<16x64xf32, #tpu.memory_space<vmem>>, %arg2: memref<64x64xbf16, #tpu.memory_space<vmem>>, %arg3: memref<1x64xf32, #tpu.memory_space<vmem>>, %arg4: memref<4x64x512xbf16, #tpu.memory_space<vmem>>, %arg5: memref<4x1x512xf32, #tpu.memory_space<vmem>>, %arg6: memref<4x64x64xbf16, #tpu.memory_space<vmem>>, %arg7: memref<4x64x256xbf16, #tpu.memory_space<vmem>>, %arg8: memref<4x256x64xbf16, #tpu.memory_space<vmem>>, %arg9: memref<4x4x64xf32, #tpu.memory_space<vmem>>, %arg10: memref<64x64xbf16, #tpu.memory_space<vmem>>, %arg11: memref<8x16xbf16, #tpu.memory_space<vmem>>, %arg12: memref<1xf32, #tpu.memory_space<smem>>, %arg13: memref<8x64xf32, #tpu.memory_space<vmem>>) attributes {dimension_semantics = [], scalar_prefetch = 0 : i64, scratch_operands = 0 : i64, tpu.core_type = #tpu.core_type<tc>} {
    %c0 = arith.constant 0 : index
    %c0_0 = arith.constant 0 : index
    %0 = vector.load %arg10[%c0, %c0_0] : memref<64x64xbf16, #tpu.memory_space<vmem>>, vector<64x64xbf16>
    %c0_1 = arith.constant 0 : index
    %c0_2 = arith.constant 0 : index
    %1 = vector.load %arg0[%c0_1, %c0_2] : memref<16x64xf32, #tpu.memory_space<vmem>>, vector<16x64xf32>
    %c0_3 = arith.constant 0 : index
    %c0_4 = arith.constant 0 : index
    %2 = vector.load %arg2[%c0_3, %c0_4] : memref<64x64xbf16, #tpu.memory_space<vmem>>, vector<64x64xbf16>
    %3 = arith.truncf %1 : vector<16x64xf32> to vector<16x64xbf16>
    %cst = arith.constant dense<0.000000e+00> : vector<16x64xf32>
    %4 = tpu.matmul %3, %2, %cst {dimension_numbers = #tpu.dot_dimension_numbers<[1], [0], [0], [1], [0, 0, 1, 1], [], []>} : vector<16x64xbf16>, vector<64x64xbf16>, vector<16x64xf32> -> vector<16x64xf32>
    %c0_5 = arith.constant 0 : index
    %c0_6 = arith.constant 0 : index
    %5 = vector.load %arg3[%c0_5, %c0_6] : memref<1x64xf32, #tpu.memory_space<vmem>>, vector<1x64xf32>
    %6 = vector.broadcast %5 : vector<1x64xf32> to vector<16x64xf32>
    %7 = arith.addf %4, %6 : vector<16x64xf32>
    %c0_7 = arith.constant 0 : index
    %c0_8 = arith.constant 0 : index
    %c0_9 = arith.constant 0 : index
    %8 = vector.load %arg9[%c0_7, %c0_8, %c0_9] : memref<4x4x64xf32, #tpu.memory_space<vmem>>, vector<1x4x64xf32>
    %9 = vector.shape_cast %8 : vector<1x4x64xf32> to vector<4x64xf32>
    %10 = vector.extract_strided_slice %9 {offsets = [0, 0], sizes = [1, 64], strides = [1, 1]} : vector<4x64xf32> to vector<1x64xf32>
    %11 = vector.extract_strided_slice %9 {offsets = [1, 0], sizes = [1, 64], strides = [1, 1]} : vector<4x64xf32> to vector<1x64xf32>
    %12 = vector.extract_strided_slice %9 {offsets = [2, 0], sizes = [1, 64], strides = [1, 1]} : vector<4x64xf32> to vector<1x64xf32>
    %13 = vector.extract_strided_slice %9 {offsets = [3, 0], sizes = [1, 64], strides = [1, 1]} : vector<4x64xf32> to vector<1x64xf32>
    %c0_10 = arith.constant 0 : index
    %c0_11 = arith.constant 0 : index
    %c0_12 = arith.constant 0 : index
    %14 = vector.load %arg5[%c0_10, %c0_11, %c0_12] : memref<4x1x512xf32, #tpu.memory_space<vmem>>, vector<1x1x512xf32>
    %15 = vector.shape_cast %14 : vector<1x1x512xf32> to vector<1x512xf32>
    %cst_13 = arith.constant dense<0.000000e+00> : vector<16xf32>
    %16 = vector.multi_reduction <add>, %7, %cst_13 [1] : vector<16x64xf32> to vector<16xf32>
    %17 = vector.shape_cast %16 : vector<16xf32> to vector<16x1xf32>
    %cst_14 = arith.constant 6.400000e+01 : f32
    %18 = vector.broadcast %cst_14 : f32 to vector<16x1xf32>
    %19 = arith.divf %17, %18 : vector<16x1xf32>
    %20 = vector.broadcast %19 : vector<16x1xf32> to vector<16x64xf32>
    %21 = arith.subf %7, %20 : vector<16x64xf32>
    %22 = arith.mulf %21, %21 : vector<16x64xf32>
    %cst_15 = arith.constant dense<0.000000e+00> : vector<16xf32>
    %23 = vector.multi_reduction <add>, %22, %cst_15 [1] : vector<16x64xf32> to vector<16xf32>
    %24 = vector.shape_cast %23 : vector<16xf32> to vector<16x1xf32>
    %cst_16 = arith.constant 6.400000e+01 : f32
    %25 = vector.broadcast %cst_16 : f32 to vector<16x1xf32>
    %26 = arith.divf %24, %25 : vector<16x1xf32>
    %cst_17 = arith.constant 9.99999974E-6 : f32
    %27 = vector.broadcast %cst_17 : f32 to vector<16x1xf32>
    %28 = arith.addf %26, %27 : vector<16x1xf32>
    %29 = math.rsqrt %28 : vector<16x1xf32>
    %30 = vector.broadcast %29 : vector<16x1xf32> to vector<16x64xf32>
    %31 = arith.mulf %21, %30 : vector<16x64xf32>
    %32 = vector.broadcast %10 : vector<1x64xf32> to vector<16x64xf32>
    %33 = arith.mulf %31, %32 : vector<16x64xf32>
    %34 = vector.broadcast %11 : vector<1x64xf32> to vector<16x64xf32>
    %35 = arith.addf %33, %34 : vector<16x64xf32>
    %c0_18 = arith.constant 0 : index
    %c0_19 = arith.constant 0 : index
    %c0_20 = arith.constant 0 : index
    %36 = vector.load %arg4[%c0_18, %c0_19, %c0_20] : memref<4x64x512xbf16, #tpu.memory_space<vmem>>, vector<1x64x512xbf16>
    %37 = vector.shape_cast %36 : vector<1x64x512xbf16> to vector<64x512xbf16>
    %38 = arith.truncf %35 : vector<16x64xf32> to vector<16x64xbf16>
    %cst_21 = arith.constant dense<0.000000e+00> : vector<16x512xf32>
    %39 = tpu.matmul %38, %37, %cst_21 {dimension_numbers = #tpu.dot_dimension_numbers<[1], [0], [0], [1], [0, 0, 1, 1], [], []>} : vector<16x64xbf16>, vector<64x512xbf16>, vector<16x512xf32> -> vector<16x512xf32>
    %40 = vector.broadcast %15 : vector<1x512xf32> to vector<16x512xf32>
    %41 = arith.addf %39, %40 : vector<16x512xf32>
    %42 = vector.extract_strided_slice %41 {offsets = [0, 0], sizes = [16, 256], strides = [1, 1]} : vector<16x512xf32> to vector<16x256xf32>
    %43 = vector.extract_strided_slice %41 {offsets = [0, 256], sizes = [16, 64], strides = [1, 1]} : vector<16x512xf32> to vector<16x64xf32>
    %44 = vector.extract_strided_slice %41 {offsets = [0, 320], sizes = [16, 64], strides = [1, 1]} : vector<16x512xf32> to vector<16x64xf32>
    %45 = vector.extract_strided_slice %41 {offsets = [0, 384], sizes = [16, 64], strides = [1, 1]} : vector<16x512xf32> to vector<16x64xf32>
    %46 = vector.extract_strided_slice %43 {offsets = [0, 0], sizes = [8, 64], strides = [1, 1]} : vector<16x64xf32> to vector<8x64xf32>
    %47 = vector.extract_strided_slice %43 {offsets = [8, 0], sizes = [8, 64], strides = [1, 1]} : vector<16x64xf32> to vector<8x64xf32>
    %48 = vector.extract_strided_slice %44 {offsets = [0, 0], sizes = [8, 64], strides = [1, 1]} : vector<16x64xf32> to vector<8x64xf32>
    %49 = vector.extract_strided_slice %44 {offsets = [8, 0], sizes = [8, 64], strides = [1, 1]} : vector<16x64xf32> to vector<8x64xf32>
    %50 = vector.extract_strided_slice %45 {offsets = [0, 0], sizes = [8, 64], strides = [1, 1]} : vector<16x64xf32> to vector<8x64xf32>
    %51 = vector.extract_strided_slice %45 {offsets = [8, 0], sizes = [8, 64], strides = [1, 1]} : vector<16x64xf32> to vector<8x64xf32>
    %52 = arith.mulf %46, %48 : vector<8x64xf32>
    %53 = arith.mulf %46, %49 : vector<8x64xf32>
    %54 = arith.mulf %47, %48 : vector<8x64xf32>
    %55 = arith.mulf %47, %49 : vector<8x64xf32>
    %56 = tpu.concatenate %52, %53, %54, %55 in 0 : vector<8x64xf32>, vector<8x64xf32>, vector<8x64xf32>, vector<8x64xf32> -> vector<32x64xf32>
    %57 = arith.truncf %56 : vector<32x64xf32> to vector<32x64xbf16>
    %cst_22 = arith.constant dense<0.000000e+00> : vector<32x64xf32>
    %58 = tpu.matmul %57, %0, %cst_22 {dimension_numbers = #tpu.dot_dimension_numbers<[1], [0], [0], [1], [0, 0, 1, 1], [], []>} : vector<32x64xbf16>, vector<64x64xbf16>, vector<32x64xf32> -> vector<32x64xf32>
    %59 = vector.extract_strided_slice %58 {offsets = [0, 0], sizes = [8, 64], strides = [1, 1]} : vector<32x64xf32> to vector<8x64xf32>
    %60 = vector.extract_strided_slice %58 {offsets = [8, 0], sizes = [8, 64], strides = [1, 1]} : vector<32x64xf32> to vector<8x64xf32>
    %61 = arith.maximumf %59, %60 : vector<8x64xf32>
    %62 = arith.subf %59, %61 : vector<8x64xf32>
    %63 = math.exp %62 : vector<8x64xf32>
    %64 = arith.subf %60, %61 : vector<8x64xf32>
    %65 = math.exp %64 : vector<8x64xf32>
    %66 = arith.mulf %63, %50 : vector<8x64xf32>
    %67 = arith.addf %63, %65 : vector<8x64xf32>
    %68 = arith.mulf %65, %51 : vector<8x64xf32>
    %69 = arith.addf %66, %68 : vector<8x64xf32>
    %70 = tpu.reciprocal %67 {approx = true} : vector<8x64xf32> -> vector<8x64xf32>
    %71 = arith.mulf %69, %70 : vector<8x64xf32>
    %72 = vector.extract_strided_slice %58 {offsets = [16, 0], sizes = [8, 64], strides = [1, 1]} : vector<32x64xf32> to vector<8x64xf32>
    %73 = vector.extract_strided_slice %58 {offsets = [24, 0], sizes = [8, 64], strides = [1, 1]} : vector<32x64xf32> to vector<8x64xf32>
    %74 = arith.maximumf %72, %73 : vector<8x64xf32>
    %75 = arith.subf %72, %74 : vector<8x64xf32>
    %76 = math.exp %75 : vector<8x64xf32>
    %77 = arith.subf %73, %74 : vector<8x64xf32>
    %78 = math.exp %77 : vector<8x64xf32>
    %79 = arith.mulf %76, %50 : vector<8x64xf32>
    %80 = arith.addf %76, %78 : vector<8x64xf32>
    %81 = arith.mulf %78, %51 : vector<8x64xf32>
    %82 = arith.addf %79, %81 : vector<8x64xf32>
    %83 = tpu.reciprocal %80 {approx = true} : vector<8x64xf32> -> vector<8x64xf32>
    %84 = arith.mulf %82, %83 : vector<8x64xf32>
    %85 = tpu.concatenate %71, %84 in 0 : vector<8x64xf32>, vector<8x64xf32> -> vector<16x64xf32>
    %c0_23 = arith.constant 0 : index
    %c0_24 = arith.constant 0 : index
    %c0_25 = arith.constant 0 : index
    %86 = vector.load %arg6[%c0_23, %c0_24, %c0_25] : memref<4x64x64xbf16, #tpu.memory_space<vmem>>, vector<1x64x64xbf16>
    %87 = vector.shape_cast %86 : vector<1x64x64xbf16> to vector<64x64xbf16>
    %88 = arith.truncf %85 : vector<16x64xf32> to vector<16x64xbf16>
    %cst_26 = arith.constant dense<0.000000e+00> : vector<16x64xf32>
    %89 = tpu.matmul %88, %87, %cst_26 {dimension_numbers = #tpu.dot_dimension_numbers<[1], [0], [0], [1], [0, 0, 1, 1], [], []>} : vector<16x64xbf16>, vector<64x64xbf16>, vector<16x64xf32> -> vector<16x64xf32>
    %90 = arith.addf %7, %89 : vector<16x64xf32>
    %91 = vector.broadcast %12 : vector<1x64xf32> to vector<16x64xf32>
    %92 = arith.addf %90, %91 : vector<16x64xf32>
    %cst_27 = arith.constant 5.000000e-01 : f32
    %93 = vector.broadcast %cst_27 : f32 to vector<16x256xf32>
    %94 = arith.mulf %93, %42 : vector<16x256xf32>
    %cst_28 = arith.constant 0.707106769 : f32
    %95 = vector.broadcast %cst_28 : f32 to vector<16x256xf32>
    %96 = arith.mulf %42, %95 : vector<16x256xf32>
    %97 = math.absf %96 : vector<16x256xf32>
    %cst_29 = arith.constant 0.327591091 : f32
    %98 = vector.broadcast %cst_29 : f32 to vector<16x256xf32>
    %99 = arith.mulf %98, %97 : vector<16x256xf32>
    %cst_30 = arith.constant 1.000000e+00 : f32
    %100 = vector.broadcast %cst_30 : f32 to vector<16x256xf32>
    %101 = arith.addf %100, %99 : vector<16x256xf32>
    %cst_31 = arith.constant 1.000000e+00 : f32
    %102 = vector.broadcast %cst_31 : f32 to vector<16x256xf32>
    %103 = arith.divf %102, %101 : vector<16x256xf32>
    %cst_32 = arith.constant 1.06140542 : f32
    %104 = vector.broadcast %cst_32 : f32 to vector<16x256xf32>
    %105 = arith.mulf %103, %104 : vector<16x256xf32>
    %cst_33 = arith.constant -1.45315206 : f32
    %106 = vector.broadcast %cst_33 : f32 to vector<16x256xf32>
    %107 = arith.addf %106, %105 : vector<16x256xf32>
    %108 = arith.mulf %103, %107 : vector<16x256xf32>
    %cst_34 = arith.constant 1.42141378 : f32
    %109 = vector.broadcast %cst_34 : f32 to vector<16x256xf32>
    %110 = arith.addf %109, %108 : vector<16x256xf32>
    %111 = arith.mulf %103, %110 : vector<16x256xf32>
    %cst_35 = arith.constant -0.284496725 : f32
    %112 = vector.broadcast %cst_35 : f32 to vector<16x256xf32>
    %113 = arith.addf %112, %111 : vector<16x256xf32>
    %114 = arith.mulf %103, %113 : vector<16x256xf32>
    %cst_36 = arith.constant 0.254829586 : f32
    %115 = vector.broadcast %cst_36 : f32 to vector<16x256xf32>
    %116 = arith.addf %115, %114 : vector<16x256xf32>
    %117 = arith.mulf %103, %116 : vector<16x256xf32>
    %cst_37 = arith.constant 0.000000e+00 : f32
    %118 = vector.broadcast %cst_37 : f32 to vector<16x256xf32>
    %119 = arith.subf %118, %97 : vector<16x256xf32>
    %120 = arith.mulf %119, %97 : vector<16x256xf32>
    %121 = math.exp %120 : vector<16x256xf32>
    %122 = arith.mulf %117, %121 : vector<16x256xf32>
    %cst_38 = arith.constant 1.000000e+00 : f32
    %123 = vector.broadcast %cst_38 : f32 to vector<16x256xf32>
    %124 = arith.subf %123, %122 : vector<16x256xf32>
    %cst_39 = arith.constant 0.000000e+00 : f32
    %125 = vector.broadcast %cst_39 : f32 to vector<16x256xf32>
    %126 = arith.cmpf oge, %96, %125 : vector<16x256xf32>
    %cst_40 = arith.constant 0.000000e+00 : f32
    %127 = vector.broadcast %cst_40 : f32 to vector<16x256xf32>
    %128 = arith.subf %127, %124 : vector<16x256xf32>
    %129 = arith.select %126, %124, %128 : vector<16x256xi1>, vector<16x256xf32>
    %cst_41 = arith.constant 1.000000e+00 : f32
    %130 = vector.broadcast %cst_41 : f32 to vector<16x256xf32>
    %131 = arith.addf %130, %129 : vector<16x256xf32>
    %132 = arith.mulf %94, %131 : vector<16x256xf32>
    %c0_42 = arith.constant 0 : index
    %c0_43 = arith.constant 0 : index
    %c0_44 = arith.constant 0 : index
    %133 = vector.load %arg8[%c0_42, %c0_43, %c0_44] : memref<4x256x64xbf16, #tpu.memory_space<vmem>>, vector<1x256x64xbf16>
    %134 = vector.shape_cast %133 : vector<1x256x64xbf16> to vector<256x64xbf16>
    %135 = arith.truncf %132 : vector<16x256xf32> to vector<16x256xbf16>
    %cst_45 = arith.constant dense<0.000000e+00> : vector<16x64xf32>
    %136 = tpu.matmul %135, %134, %cst_45 {dimension_numbers = #tpu.dot_dimension_numbers<[1], [0], [0], [1], [0, 0, 1, 1], [], []>} : vector<16x256xbf16>, vector<256x64xbf16>, vector<16x64xf32> -> vector<16x64xf32>
    %137 = vector.broadcast %13 : vector<1x64xf32> to vector<16x64xf32>
    %138 = arith.addf %136, %137 : vector<16x64xf32>
    %139 = arith.addf %92, %138 : vector<16x64xf32>
    %c0_46 = arith.constant 0 : index
    %c0_47 = arith.constant 0 : index
    %c0_48 = arith.constant 0 : index
    %140 = vector.load %arg7[%c0_46, %c0_47, %c0_48] : memref<4x64x256xbf16, #tpu.memory_space<vmem>>, vector<1x64x256xbf16>
    %141 = vector.shape_cast %140 : vector<1x64x256xbf16> to vector<64x256xbf16>
    %142 = arith.truncf %139 : vector<16x64xf32> to vector<16x64xbf16>
    %cst_49 = arith.constant dense<0.000000e+00> : vector<16x256xf32>
    %143 = tpu.matmul %142, %141, %cst_49 {dimension_numbers = #tpu.dot_dimension_numbers<[1], [0], [0], [1], [0, 0, 1, 1], [], []>} : vector<16x64xbf16>, vector<64x256xbf16>, vector<16x256xf32> -> vector<16x256xf32>
    %144 = vector.extract_strided_slice %15 {offsets = [0, 0], sizes = [1, 256], strides = [1, 1]} : vector<1x512xf32> to vector<1x256xf32>
    %145 = vector.broadcast %144 : vector<1x256xf32> to vector<16x256xf32>
    %146 = arith.addf %143, %145 : vector<16x256xf32>
    %cst_50 = arith.constant 5.000000e-01 : f32
    %147 = vector.broadcast %cst_50 : f32 to vector<16x256xf32>
    %148 = arith.mulf %147, %146 : vector<16x256xf32>
    %cst_51 = arith.constant 0.707106769 : f32
    %149 = vector.broadcast %cst_51 : f32 to vector<16x256xf32>
    %150 = arith.mulf %146, %149 : vector<16x256xf32>
    %151 = math.absf %150 : vector<16x256xf32>
    %cst_52 = arith.constant 0.327591091 : f32
    %152 = vector.broadcast %cst_52 : f32 to vector<16x256xf32>
    %153 = arith.mulf %152, %151 : vector<16x256xf32>
    %cst_53 = arith.constant 1.000000e+00 : f32
    %154 = vector.broadcast %cst_53 : f32 to vector<16x256xf32>
    %155 = arith.addf %154, %153 : vector<16x256xf32>
    %cst_54 = arith.constant 1.000000e+00 : f32
    %156 = vector.broadcast %cst_54 : f32 to vector<16x256xf32>
    %157 = arith.divf %156, %155 : vector<16x256xf32>
    %cst_55 = arith.constant 1.06140542 : f32
    %158 = vector.broadcast %cst_55 : f32 to vector<16x256xf32>
    %159 = arith.mulf %157, %158 : vector<16x256xf32>
    %cst_56 = arith.constant -1.45315206 : f32
    %160 = vector.broadcast %cst_56 : f32 to vector<16x256xf32>
    %161 = arith.addf %160, %159 : vector<16x256xf32>
    %162 = arith.mulf %157, %161 : vector<16x256xf32>
    %cst_57 = arith.constant 1.42141378 : f32
    %163 = vector.broadcast %cst_57 : f32 to vector<16x256xf32>
    %164 = arith.addf %163, %162 : vector<16x256xf32>
    %165 = arith.mulf %157, %164 : vector<16x256xf32>
    %cst_58 = arith.constant -0.284496725 : f32
    %166 = vector.broadcast %cst_58 : f32 to vector<16x256xf32>
    %167 = arith.addf %166, %165 : vector<16x256xf32>
    %168 = arith.mulf %157, %167 : vector<16x256xf32>
    %cst_59 = arith.constant 0.254829586 : f32
    %169 = vector.broadcast %cst_59 : f32 to vector<16x256xf32>
    %170 = arith.addf %169, %168 : vector<16x256xf32>
    %171 = arith.mulf %157, %170 : vector<16x256xf32>
    %cst_60 = arith.constant 0.000000e+00 : f32
    %172 = vector.broadcast %cst_60 : f32 to vector<16x256xf32>
    %173 = arith.subf %172, %151 : vector<16x256xf32>
    %174 = arith.mulf %173, %151 : vector<16x256xf32>
    %175 = math.exp %174 : vector<16x256xf32>
    %176 = arith.mulf %171, %175 : vector<16x256xf32>
    %cst_61 = arith.constant 1.000000e+00 : f32
    %177 = vector.broadcast %cst_61 : f32 to vector<16x256xf32>
    %178 = arith.subf %177, %176 : vector<16x256xf32>
    %cst_62 = arith.constant 0.000000e+00 : f32
    %179 = vector.broadcast %cst_62 : f32 to vector<16x256xf32>
    %180 = arith.cmpf oge, %150, %179 : vector<16x256xf32>
    %cst_63 = arith.constant 0.000000e+00 : f32
    %181 = vector.broadcast %cst_63 : f32 to vector<16x256xf32>
    %182 = arith.subf %181, %178 : vector<16x256xf32>
    %183 = arith.select %180, %178, %182 : vector<16x256xi1>, vector<16x256xf32>
    %cst_64 = arith.constant 1.000000e+00 : f32
    %184 = vector.broadcast %cst_64 : f32 to vector<16x256xf32>
    %185 = arith.addf %184, %183 : vector<16x256xf32>
    %186 = arith.mulf %148, %185 : vector<16x256xf32>
    %c0_65 = arith.constant 0 : index
    %c0_66 = arith.constant 0 : index
    %c0_67 = arith.constant 0 : index
    %187 = vector.load %arg8[%c0_65, %c0_66, %c0_67] : memref<4x256x64xbf16, #tpu.memory_space<vmem>>, vector<1x256x64xbf16>
    %188 = vector.shape_cast %187 : vector<1x256x64xbf16> to vector<256x64xbf16>
    %189 = arith.truncf %186 : vector<16x256xf32> to vector<16x256xbf16>
    %cst_68 = arith.constant dense<0.000000e+00> : vector<16x64xf32>
    %190 = tpu.matmul %189, %188, %cst_68 {dimension_numbers = #tpu.dot_dimension_numbers<[1], [0], [0], [1], [0, 0, 1, 1], [], []>} : vector<16x256xbf16>, vector<256x64xbf16>, vector<16x64xf32> -> vector<16x64xf32>
    %191 = vector.broadcast %13 : vector<1x64xf32> to vector<16x64xf32>
    %192 = arith.addf %190, %191 : vector<16x64xf32>
    %193 = arith.addf %139, %192 : vector<16x64xf32>
    %c1 = arith.constant 1 : index
    %c0_69 = arith.constant 0 : index
    %c0_70 = arith.constant 0 : index
    %194 = vector.load %arg9[%c1, %c0_69, %c0_70] : memref<4x4x64xf32, #tpu.memory_space<vmem>>, vector<1x4x64xf32>
    %195 = vector.shape_cast %194 : vector<1x4x64xf32> to vector<4x64xf32>
    %196 = vector.extract_strided_slice %195 {offsets = [0, 0], sizes = [1, 64], strides = [1, 1]} : vector<4x64xf32> to vector<1x64xf32>
    %197 = vector.extract_strided_slice %195 {offsets = [1, 0], sizes = [1, 64], strides = [1, 1]} : vector<4x64xf32> to vector<1x64xf32>
    %198 = vector.extract_strided_slice %195 {offsets = [2, 0], sizes = [1, 64], strides = [1, 1]} : vector<4x64xf32> to vector<1x64xf32>
    %199 = vector.extract_strided_slice %195 {offsets = [3, 0], sizes = [1, 64], strides = [1, 1]} : vector<4x64xf32> to vector<1x64xf32>
    %c1_71 = arith.constant 1 : index
    %c0_72 = arith.constant 0 : index
    %c0_73 = arith.constant 0 : index
    %200 = vector.load %arg5[%c1_71, %c0_72, %c0_73] : memref<4x1x512xf32, #tpu.memory_space<vmem>>, vector<1x1x512xf32>
    %201 = vector.shape_cast %200 : vector<1x1x512xf32> to vector<1x512xf32>
    %cst_74 = arith.constant dense<0.000000e+00> : vector<16xf32>
    %202 = vector.multi_reduction <add>, %193, %cst_74 [1] : vector<16x64xf32> to vector<16xf32>
    %203 = vector.shape_cast %202 : vector<16xf32> to vector<16x1xf32>
    %cst_75 = arith.constant 6.400000e+01 : f32
    %204 = vector.broadcast %cst_75 : f32 to vector<16x1xf32>
    %205 = arith.divf %203, %204 : vector<16x1xf32>
    %206 = vector.broadcast %205 : vector<16x1xf32> to vector<16x64xf32>
    %207 = arith.subf %193, %206 : vector<16x64xf32>
    %208 = arith.mulf %207, %207 : vector<16x64xf32>
    %cst_76 = arith.constant dense<0.000000e+00> : vector<16xf32>
    %209 = vector.multi_reduction <add>, %208, %cst_76 [1] : vector<16x64xf32> to vector<16xf32>
    %210 = vector.shape_cast %209 : vector<16xf32> to vector<16x1xf32>
    %cst_77 = arith.constant 6.400000e+01 : f32
    %211 = vector.broadcast %cst_77 : f32 to vector<16x1xf32>
    %212 = arith.divf %210, %211 : vector<16x1xf32>
    %cst_78 = arith.constant 9.99999974E-6 : f32
    %213 = vector.broadcast %cst_78 : f32 to vector<16x1xf32>
    %214 = arith.addf %212, %213 : vector<16x1xf32>
    %215 = math.rsqrt %214 : vector<16x1xf32>
    %216 = vector.broadcast %215 : vector<16x1xf32> to vector<16x64xf32>
    %217 = arith.mulf %207, %216 : vector<16x64xf32>
    %218 = vector.broadcast %196 : vector<1x64xf32> to vector<16x64xf32>
    %219 = arith.mulf %217, %218 : vector<16x64xf32>
    %220 = vector.broadcast %197 : vector<1x64xf32> to vector<16x64xf32>
    %221 = arith.addf %219, %220 : vector<16x64xf32>
    %c1_79 = arith.constant 1 : index
    %c0_80 = arith.constant 0 : index
    %c0_81 = arith.constant 0 : index
    %222 = vector.load %arg4[%c1_79, %c0_80, %c0_81] : memref<4x64x512xbf16, #tpu.memory_space<vmem>>, vector<1x64x512xbf16>
    %223 = vector.shape_cast %222 : vector<1x64x512xbf16> to vector<64x512xbf16>
    %224 = arith.truncf %221 : vector<16x64xf32> to vector<16x64xbf16>
    %cst_82 = arith.constant dense<0.000000e+00> : vector<16x512xf32>
    %225 = tpu.matmul %224, %223, %cst_82 {dimension_numbers = #tpu.dot_dimension_numbers<[1], [0], [0], [1], [0, 0, 1, 1], [], []>} : vector<16x64xbf16>, vector<64x512xbf16>, vector<16x512xf32> -> vector<16x512xf32>
    %226 = vector.broadcast %201 : vector<1x512xf32> to vector<16x512xf32>
    %227 = arith.addf %225, %226 : vector<16x512xf32>
    %228 = vector.extract_strided_slice %227 {offsets = [0, 0], sizes = [16, 256], strides = [1, 1]} : vector<16x512xf32> to vector<16x256xf32>
    %229 = vector.extract_strided_slice %227 {offsets = [0, 256], sizes = [16, 64], strides = [1, 1]} : vector<16x512xf32> to vector<16x64xf32>
    %230 = vector.extract_strided_slice %227 {offsets = [0, 320], sizes = [16, 64], strides = [1, 1]} : vector<16x512xf32> to vector<16x64xf32>
    %231 = vector.extract_strided_slice %227 {offsets = [0, 384], sizes = [16, 64], strides = [1, 1]} : vector<16x512xf32> to vector<16x64xf32>
    %232 = vector.extract_strided_slice %229 {offsets = [0, 0], sizes = [8, 64], strides = [1, 1]} : vector<16x64xf32> to vector<8x64xf32>
    %233 = vector.extract_strided_slice %229 {offsets = [8, 0], sizes = [8, 64], strides = [1, 1]} : vector<16x64xf32> to vector<8x64xf32>
    %234 = vector.extract_strided_slice %230 {offsets = [0, 0], sizes = [8, 64], strides = [1, 1]} : vector<16x64xf32> to vector<8x64xf32>
    %235 = vector.extract_strided_slice %230 {offsets = [8, 0], sizes = [8, 64], strides = [1, 1]} : vector<16x64xf32> to vector<8x64xf32>
    %236 = vector.extract_strided_slice %231 {offsets = [0, 0], sizes = [8, 64], strides = [1, 1]} : vector<16x64xf32> to vector<8x64xf32>
    %237 = vector.extract_strided_slice %231 {offsets = [8, 0], sizes = [8, 64], strides = [1, 1]} : vector<16x64xf32> to vector<8x64xf32>
    %238 = arith.mulf %232, %234 : vector<8x64xf32>
    %239 = arith.mulf %232, %235 : vector<8x64xf32>
    %240 = arith.mulf %233, %234 : vector<8x64xf32>
    %241 = arith.mulf %233, %235 : vector<8x64xf32>
    %242 = tpu.concatenate %238, %239, %240, %241 in 0 : vector<8x64xf32>, vector<8x64xf32>, vector<8x64xf32>, vector<8x64xf32> -> vector<32x64xf32>
    %243 = arith.truncf %242 : vector<32x64xf32> to vector<32x64xbf16>
    %cst_83 = arith.constant dense<0.000000e+00> : vector<32x64xf32>
    %244 = tpu.matmul %243, %0, %cst_83 {dimension_numbers = #tpu.dot_dimension_numbers<[1], [0], [0], [1], [0, 0, 1, 1], [], []>} : vector<32x64xbf16>, vector<64x64xbf16>, vector<32x64xf32> -> vector<32x64xf32>
    %245 = vector.extract_strided_slice %244 {offsets = [0, 0], sizes = [8, 64], strides = [1, 1]} : vector<32x64xf32> to vector<8x64xf32>
    %246 = vector.extract_strided_slice %244 {offsets = [8, 0], sizes = [8, 64], strides = [1, 1]} : vector<32x64xf32> to vector<8x64xf32>
    %247 = arith.maximumf %245, %246 : vector<8x64xf32>
    %248 = arith.subf %245, %247 : vector<8x64xf32>
    %249 = math.exp %248 : vector<8x64xf32>
    %250 = arith.subf %246, %247 : vector<8x64xf32>
    %251 = math.exp %250 : vector<8x64xf32>
    %252 = arith.mulf %249, %236 : vector<8x64xf32>
    %253 = arith.addf %249, %251 : vector<8x64xf32>
    %254 = arith.mulf %251, %237 : vector<8x64xf32>
    %255 = arith.addf %252, %254 : vector<8x64xf32>
    %256 = tpu.reciprocal %253 {approx = true} : vector<8x64xf32> -> vector<8x64xf32>
    %257 = arith.mulf %255, %256 : vector<8x64xf32>
    %258 = vector.extract_strided_slice %244 {offsets = [16, 0], sizes = [8, 64], strides = [1, 1]} : vector<32x64xf32> to vector<8x64xf32>
    %259 = vector.extract_strided_slice %244 {offsets = [24, 0], sizes = [8, 64], strides = [1, 1]} : vector<32x64xf32> to vector<8x64xf32>
    %260 = arith.maximumf %258, %259 : vector<8x64xf32>
    %261 = arith.subf %258, %260 : vector<8x64xf32>
    %262 = math.exp %261 : vector<8x64xf32>
    %263 = arith.subf %259, %260 : vector<8x64xf32>
    %264 = math.exp %263 : vector<8x64xf32>
    %265 = arith.mulf %262, %236 : vector<8x64xf32>
    %266 = arith.addf %262, %264 : vector<8x64xf32>
    %267 = arith.mulf %264, %237 : vector<8x64xf32>
    %268 = arith.addf %265, %267 : vector<8x64xf32>
    %269 = tpu.reciprocal %266 {approx = true} : vector<8x64xf32> -> vector<8x64xf32>
    %270 = arith.mulf %268, %269 : vector<8x64xf32>
    %271 = tpu.concatenate %257, %270 in 0 : vector<8x64xf32>, vector<8x64xf32> -> vector<16x64xf32>
    %c1_84 = arith.constant 1 : index
    %c0_85 = arith.constant 0 : index
    %c0_86 = arith.constant 0 : index
    %272 = vector.load %arg6[%c1_84, %c0_85, %c0_86] : memref<4x64x64xbf16, #tpu.memory_space<vmem>>, vector<1x64x64xbf16>
    %273 = vector.shape_cast %272 : vector<1x64x64xbf16> to vector<64x64xbf16>
    %274 = arith.truncf %271 : vector<16x64xf32> to vector<16x64xbf16>
    %cst_87 = arith.constant dense<0.000000e+00> : vector<16x64xf32>
    %275 = tpu.matmul %274, %273, %cst_87 {dimension_numbers = #tpu.dot_dimension_numbers<[1], [0], [0], [1], [0, 0, 1, 1], [], []>} : vector<16x64xbf16>, vector<64x64xbf16>, vector<16x64xf32> -> vector<16x64xf32>
    %276 = arith.addf %193, %275 : vector<16x64xf32>
    %277 = vector.broadcast %198 : vector<1x64xf32> to vector<16x64xf32>
    %278 = arith.addf %276, %277 : vector<16x64xf32>
    %cst_88 = arith.constant 5.000000e-01 : f32
    %279 = vector.broadcast %cst_88 : f32 to vector<16x256xf32>
    %280 = arith.mulf %279, %228 : vector<16x256xf32>
    %cst_89 = arith.constant 0.707106769 : f32
    %281 = vector.broadcast %cst_89 : f32 to vector<16x256xf32>
    %282 = arith.mulf %228, %281 : vector<16x256xf32>
    %283 = math.absf %282 : vector<16x256xf32>
    %cst_90 = arith.constant 0.327591091 : f32
    %284 = vector.broadcast %cst_90 : f32 to vector<16x256xf32>
    %285 = arith.mulf %284, %283 : vector<16x256xf32>
    %cst_91 = arith.constant 1.000000e+00 : f32
    %286 = vector.broadcast %cst_91 : f32 to vector<16x256xf32>
    %287 = arith.addf %286, %285 : vector<16x256xf32>
    %cst_92 = arith.constant 1.000000e+00 : f32
    %288 = vector.broadcast %cst_92 : f32 to vector<16x256xf32>
    %289 = arith.divf %288, %287 : vector<16x256xf32>
    %cst_93 = arith.constant 1.06140542 : f32
    %290 = vector.broadcast %cst_93 : f32 to vector<16x256xf32>
    %291 = arith.mulf %289, %290 : vector<16x256xf32>
    %cst_94 = arith.constant -1.45315206 : f32
    %292 = vector.broadcast %cst_94 : f32 to vector<16x256xf32>
    %293 = arith.addf %292, %291 : vector<16x256xf32>
    %294 = arith.mulf %289, %293 : vector<16x256xf32>
    %cst_95 = arith.constant 1.42141378 : f32
    %295 = vector.broadcast %cst_95 : f32 to vector<16x256xf32>
    %296 = arith.addf %295, %294 : vector<16x256xf32>
    %297 = arith.mulf %289, %296 : vector<16x256xf32>
    %cst_96 = arith.constant -0.284496725 : f32
    %298 = vector.broadcast %cst_96 : f32 to vector<16x256xf32>
    %299 = arith.addf %298, %297 : vector<16x256xf32>
    %300 = arith.mulf %289, %299 : vector<16x256xf32>
    %cst_97 = arith.constant 0.254829586 : f32
    %301 = vector.broadcast %cst_97 : f32 to vector<16x256xf32>
    %302 = arith.addf %301, %300 : vector<16x256xf32>
    %303 = arith.mulf %289, %302 : vector<16x256xf32>
    %cst_98 = arith.constant 0.000000e+00 : f32
    %304 = vector.broadcast %cst_98 : f32 to vector<16x256xf32>
    %305 = arith.subf %304, %283 : vector<16x256xf32>
    %306 = arith.mulf %305, %283 : vector<16x256xf32>
    %307 = math.exp %306 : vector<16x256xf32>
    %308 = arith.mulf %303, %307 : vector<16x256xf32>
    %cst_99 = arith.constant 1.000000e+00 : f32
    %309 = vector.broadcast %cst_99 : f32 to vector<16x256xf32>
    %310 = arith.subf %309, %308 : vector<16x256xf32>
    %cst_100 = arith.constant 0.000000e+00 : f32
    %311 = vector.broadcast %cst_100 : f32 to vector<16x256xf32>
    %312 = arith.cmpf oge, %282, %311 : vector<16x256xf32>
    %cst_101 = arith.constant 0.000000e+00 : f32
    %313 = vector.broadcast %cst_101 : f32 to vector<16x256xf32>
    %314 = arith.subf %313, %310 : vector<16x256xf32>
    %315 = arith.select %312, %310, %314 : vector<16x256xi1>, vector<16x256xf32>
    %cst_102 = arith.constant 1.000000e+00 : f32
    %316 = vector.broadcast %cst_102 : f32 to vector<16x256xf32>
    %317 = arith.addf %316, %315 : vector<16x256xf32>
    %318 = arith.mulf %280, %317 : vector<16x256xf32>
    %c1_103 = arith.constant 1 : index
    %c0_104 = arith.constant 0 : index
    %c0_105 = arith.constant 0 : index
    %319 = vector.load %arg8[%c1_103, %c0_104, %c0_105] : memref<4x256x64xbf16, #tpu.memory_space<vmem>>, vector<1x256x64xbf16>
    %320 = vector.shape_cast %319 : vector<1x256x64xbf16> to vector<256x64xbf16>
    %321 = arith.truncf %318 : vector<16x256xf32> to vector<16x256xbf16>
    %cst_106 = arith.constant dense<0.000000e+00> : vector<16x64xf32>
    %322 = tpu.matmul %321, %320, %cst_106 {dimension_numbers = #tpu.dot_dimension_numbers<[1], [0], [0], [1], [0, 0, 1, 1], [], []>} : vector<16x256xbf16>, vector<256x64xbf16>, vector<16x64xf32> -> vector<16x64xf32>
    %323 = vector.broadcast %199 : vector<1x64xf32> to vector<16x64xf32>
    %324 = arith.addf %322, %323 : vector<16x64xf32>
    %325 = arith.addf %278, %324 : vector<16x64xf32>
    %c1_107 = arith.constant 1 : index
    %c0_108 = arith.constant 0 : index
    %c0_109 = arith.constant 0 : index
    %326 = vector.load %arg7[%c1_107, %c0_108, %c0_109] : memref<4x64x256xbf16, #tpu.memory_space<vmem>>, vector<1x64x256xbf16>
    %327 = vector.shape_cast %326 : vector<1x64x256xbf16> to vector<64x256xbf16>
    %328 = arith.truncf %325 : vector<16x64xf32> to vector<16x64xbf16>
    %cst_110 = arith.constant dense<0.000000e+00> : vector<16x256xf32>
    %329 = tpu.matmul %328, %327, %cst_110 {dimension_numbers = #tpu.dot_dimension_numbers<[1], [0], [0], [1], [0, 0, 1, 1], [], []>} : vector<16x64xbf16>, vector<64x256xbf16>, vector<16x256xf32> -> vector<16x256xf32>
    %330 = vector.extract_strided_slice %201 {offsets = [0, 0], sizes = [1, 256], strides = [1, 1]} : vector<1x512xf32> to vector<1x256xf32>
    %331 = vector.broadcast %330 : vector<1x256xf32> to vector<16x256xf32>
    %332 = arith.addf %329, %331 : vector<16x256xf32>
    %cst_111 = arith.constant 5.000000e-01 : f32
    %333 = vector.broadcast %cst_111 : f32 to vector<16x256xf32>
    %334 = arith.mulf %333, %332 : vector<16x256xf32>
    %cst_112 = arith.constant 0.707106769 : f32
    %335 = vector.broadcast %cst_112 : f32 to vector<16x256xf32>
    %336 = arith.mulf %332, %335 : vector<16x256xf32>
    %337 = math.absf %336 : vector<16x256xf32>
    %cst_113 = arith.constant 0.327591091 : f32
    %338 = vector.broadcast %cst_113 : f32 to vector<16x256xf32>
    %339 = arith.mulf %338, %337 : vector<16x256xf32>
    %cst_114 = arith.constant 1.000000e+00 : f32
    %340 = vector.broadcast %cst_114 : f32 to vector<16x256xf32>
    %341 = arith.addf %340, %339 : vector<16x256xf32>
    %cst_115 = arith.constant 1.000000e+00 : f32
    %342 = vector.broadcast %cst_115 : f32 to vector<16x256xf32>
    %343 = arith.divf %342, %341 : vector<16x256xf32>
    %cst_116 = arith.constant 1.06140542 : f32
    %344 = vector.broadcast %cst_116 : f32 to vector<16x256xf32>
    %345 = arith.mulf %343, %344 : vector<16x256xf32>
    %cst_117 = arith.constant -1.45315206 : f32
    %346 = vector.broadcast %cst_117 : f32 to vector<16x256xf32>
    %347 = arith.addf %346, %345 : vector<16x256xf32>
    %348 = arith.mulf %343, %347 : vector<16x256xf32>
    %cst_118 = arith.constant 1.42141378 : f32
    %349 = vector.broadcast %cst_118 : f32 to vector<16x256xf32>
    %350 = arith.addf %349, %348 : vector<16x256xf32>
    %351 = arith.mulf %343, %350 : vector<16x256xf32>
    %cst_119 = arith.constant -0.284496725 : f32
    %352 = vector.broadcast %cst_119 : f32 to vector<16x256xf32>
    %353 = arith.addf %352, %351 : vector<16x256xf32>
    %354 = arith.mulf %343, %353 : vector<16x256xf32>
    %cst_120 = arith.constant 0.254829586 : f32
    %355 = vector.broadcast %cst_120 : f32 to vector<16x256xf32>
    %356 = arith.addf %355, %354 : vector<16x256xf32>
    %357 = arith.mulf %343, %356 : vector<16x256xf32>
    %cst_121 = arith.constant 0.000000e+00 : f32
    %358 = vector.broadcast %cst_121 : f32 to vector<16x256xf32>
    %359 = arith.subf %358, %337 : vector<16x256xf32>
    %360 = arith.mulf %359, %337 : vector<16x256xf32>
    %361 = math.exp %360 : vector<16x256xf32>
    %362 = arith.mulf %357, %361 : vector<16x256xf32>
    %cst_122 = arith.constant 1.000000e+00 : f32
    %363 = vector.broadcast %cst_122 : f32 to vector<16x256xf32>
    %364 = arith.subf %363, %362 : vector<16x256xf32>
    %cst_123 = arith.constant 0.000000e+00 : f32
    %365 = vector.broadcast %cst_123 : f32 to vector<16x256xf32>
    %366 = arith.cmpf oge, %336, %365 : vector<16x256xf32>
    %cst_124 = arith.constant 0.000000e+00 : f32
    %367 = vector.broadcast %cst_124 : f32 to vector<16x256xf32>
    %368 = arith.subf %367, %364 : vector<16x256xf32>
    %369 = arith.select %366, %364, %368 : vector<16x256xi1>, vector<16x256xf32>
    %cst_125 = arith.constant 1.000000e+00 : f32
    %370 = vector.broadcast %cst_125 : f32 to vector<16x256xf32>
    %371 = arith.addf %370, %369 : vector<16x256xf32>
    %372 = arith.mulf %334, %371 : vector<16x256xf32>
    %c1_126 = arith.constant 1 : index
    %c0_127 = arith.constant 0 : index
    %c0_128 = arith.constant 0 : index
    %373 = vector.load %arg8[%c1_126, %c0_127, %c0_128] : memref<4x256x64xbf16, #tpu.memory_space<vmem>>, vector<1x256x64xbf16>
    %374 = vector.shape_cast %373 : vector<1x256x64xbf16> to vector<256x64xbf16>
    %375 = arith.truncf %372 : vector<16x256xf32> to vector<16x256xbf16>
    %cst_129 = arith.constant dense<0.000000e+00> : vector<16x64xf32>
    %376 = tpu.matmul %375, %374, %cst_129 {dimension_numbers = #tpu.dot_dimension_numbers<[1], [0], [0], [1], [0, 0, 1, 1], [], []>} : vector<16x256xbf16>, vector<256x64xbf16>, vector<16x64xf32> -> vector<16x64xf32>
    %377 = vector.broadcast %199 : vector<1x64xf32> to vector<16x64xf32>
    %378 = arith.addf %376, %377 : vector<16x64xf32>
    %379 = arith.addf %325, %378 : vector<16x64xf32>
    %c2 = arith.constant 2 : index
    %c0_130 = arith.constant 0 : index
    %c0_131 = arith.constant 0 : index
    %380 = vector.load %arg9[%c2, %c0_130, %c0_131] : memref<4x4x64xf32, #tpu.memory_space<vmem>>, vector<1x4x64xf32>
    %381 = vector.shape_cast %380 : vector<1x4x64xf32> to vector<4x64xf32>
    %382 = vector.extract_strided_slice %381 {offsets = [0, 0], sizes = [1, 64], strides = [1, 1]} : vector<4x64xf32> to vector<1x64xf32>
    %383 = vector.extract_strided_slice %381 {offsets = [1, 0], sizes = [1, 64], strides = [1, 1]} : vector<4x64xf32> to vector<1x64xf32>
    %384 = vector.extract_strided_slice %381 {offsets = [2, 0], sizes = [1, 64], strides = [1, 1]} : vector<4x64xf32> to vector<1x64xf32>
    %385 = vector.extract_strided_slice %381 {offsets = [3, 0], sizes = [1, 64], strides = [1, 1]} : vector<4x64xf32> to vector<1x64xf32>
    %c2_132 = arith.constant 2 : index
    %c0_133 = arith.constant 0 : index
    %c0_134 = arith.constant 0 : index
    %386 = vector.load %arg5[%c2_132, %c0_133, %c0_134] : memref<4x1x512xf32, #tpu.memory_space<vmem>>, vector<1x1x512xf32>
    %387 = vector.shape_cast %386 : vector<1x1x512xf32> to vector<1x512xf32>
    %cst_135 = arith.constant dense<0.000000e+00> : vector<16xf32>
    %388 = vector.multi_reduction <add>, %379, %cst_135 [1] : vector<16x64xf32> to vector<16xf32>
    %389 = vector.shape_cast %388 : vector<16xf32> to vector<16x1xf32>
    %cst_136 = arith.constant 6.400000e+01 : f32
    %390 = vector.broadcast %cst_136 : f32 to vector<16x1xf32>
    %391 = arith.divf %389, %390 : vector<16x1xf32>
    %392 = vector.broadcast %391 : vector<16x1xf32> to vector<16x64xf32>
    %393 = arith.subf %379, %392 : vector<16x64xf32>
    %394 = arith.mulf %393, %393 : vector<16x64xf32>
    %cst_137 = arith.constant dense<0.000000e+00> : vector<16xf32>
    %395 = vector.multi_reduction <add>, %394, %cst_137 [1] : vector<16x64xf32> to vector<16xf32>
    %396 = vector.shape_cast %395 : vector<16xf32> to vector<16x1xf32>
    %cst_138 = arith.constant 6.400000e+01 : f32
    %397 = vector.broadcast %cst_138 : f32 to vector<16x1xf32>
    %398 = arith.divf %396, %397 : vector<16x1xf32>
    %cst_139 = arith.constant 9.99999974E-6 : f32
    %399 = vector.broadcast %cst_139 : f32 to vector<16x1xf32>
    %400 = arith.addf %398, %399 : vector<16x1xf32>
    %401 = math.rsqrt %400 : vector<16x1xf32>
    %402 = vector.broadcast %401 : vector<16x1xf32> to vector<16x64xf32>
    %403 = arith.mulf %393, %402 : vector<16x64xf32>
    %404 = vector.broadcast %382 : vector<1x64xf32> to vector<16x64xf32>
    %405 = arith.mulf %403, %404 : vector<16x64xf32>
    %406 = vector.broadcast %383 : vector<1x64xf32> to vector<16x64xf32>
    %407 = arith.addf %405, %406 : vector<16x64xf32>
    %c2_140 = arith.constant 2 : index
    %c0_141 = arith.constant 0 : index
    %c0_142 = arith.constant 0 : index
    %408 = vector.load %arg4[%c2_140, %c0_141, %c0_142] : memref<4x64x512xbf16, #tpu.memory_space<vmem>>, vector<1x64x512xbf16>
    %409 = vector.shape_cast %408 : vector<1x64x512xbf16> to vector<64x512xbf16>
    %410 = arith.truncf %407 : vector<16x64xf32> to vector<16x64xbf16>
    %cst_143 = arith.constant dense<0.000000e+00> : vector<16x512xf32>
    %411 = tpu.matmul %410, %409, %cst_143 {dimension_numbers = #tpu.dot_dimension_numbers<[1], [0], [0], [1], [0, 0, 1, 1], [], []>} : vector<16x64xbf16>, vector<64x512xbf16>, vector<16x512xf32> -> vector<16x512xf32>
    %412 = vector.broadcast %387 : vector<1x512xf32> to vector<16x512xf32>
    %413 = arith.addf %411, %412 : vector<16x512xf32>
    %414 = vector.extract_strided_slice %413 {offsets = [0, 0], sizes = [16, 256], strides = [1, 1]} : vector<16x512xf32> to vector<16x256xf32>
    %415 = vector.extract_strided_slice %413 {offsets = [0, 256], sizes = [16, 64], strides = [1, 1]} : vector<16x512xf32> to vector<16x64xf32>
    %416 = vector.extract_strided_slice %413 {offsets = [0, 320], sizes = [16, 64], strides = [1, 1]} : vector<16x512xf32> to vector<16x64xf32>
    %417 = vector.extract_strided_slice %413 {offsets = [0, 384], sizes = [16, 64], strides = [1, 1]} : vector<16x512xf32> to vector<16x64xf32>
    %418 = vector.extract_strided_slice %415 {offsets = [0, 0], sizes = [8, 64], strides = [1, 1]} : vector<16x64xf32> to vector<8x64xf32>
    %419 = vector.extract_strided_slice %415 {offsets = [8, 0], sizes = [8, 64], strides = [1, 1]} : vector<16x64xf32> to vector<8x64xf32>
    %420 = vector.extract_strided_slice %416 {offsets = [0, 0], sizes = [8, 64], strides = [1, 1]} : vector<16x64xf32> to vector<8x64xf32>
    %421 = vector.extract_strided_slice %416 {offsets = [8, 0], sizes = [8, 64], strides = [1, 1]} : vector<16x64xf32> to vector<8x64xf32>
    %422 = vector.extract_strided_slice %417 {offsets = [0, 0], sizes = [8, 64], strides = [1, 1]} : vector<16x64xf32> to vector<8x64xf32>
    %423 = vector.extract_strided_slice %417 {offsets = [8, 0], sizes = [8, 64], strides = [1, 1]} : vector<16x64xf32> to vector<8x64xf32>
    %424 = arith.mulf %418, %420 : vector<8x64xf32>
    %425 = arith.mulf %418, %421 : vector<8x64xf32>
    %426 = arith.mulf %419, %420 : vector<8x64xf32>
    %427 = arith.mulf %419, %421 : vector<8x64xf32>
    %428 = tpu.concatenate %424, %425, %426, %427 in 0 : vector<8x64xf32>, vector<8x64xf32>, vector<8x64xf32>, vector<8x64xf32> -> vector<32x64xf32>
    %429 = arith.truncf %428 : vector<32x64xf32> to vector<32x64xbf16>
    %cst_144 = arith.constant dense<0.000000e+00> : vector<32x64xf32>
    %430 = tpu.matmul %429, %0, %cst_144 {dimension_numbers = #tpu.dot_dimension_numbers<[1], [0], [0], [1], [0, 0, 1, 1], [], []>} : vector<32x64xbf16>, vector<64x64xbf16>, vector<32x64xf32> -> vector<32x64xf32>
    %431 = vector.extract_strided_slice %430 {offsets = [0, 0], sizes = [8, 64], strides = [1, 1]} : vector<32x64xf32> to vector<8x64xf32>
    %432 = vector.extract_strided_slice %430 {offsets = [8, 0], sizes = [8, 64], strides = [1, 1]} : vector<32x64xf32> to vector<8x64xf32>
    %433 = arith.maximumf %431, %432 : vector<8x64xf32>
    %434 = arith.subf %431, %433 : vector<8x64xf32>
    %435 = math.exp %434 : vector<8x64xf32>
    %436 = arith.subf %432, %433 : vector<8x64xf32>
    %437 = math.exp %436 : vector<8x64xf32>
    %438 = arith.mulf %435, %422 : vector<8x64xf32>
    %439 = arith.addf %435, %437 : vector<8x64xf32>
    %440 = arith.mulf %437, %423 : vector<8x64xf32>
    %441 = arith.addf %438, %440 : vector<8x64xf32>
    %442 = tpu.reciprocal %439 {approx = true} : vector<8x64xf32> -> vector<8x64xf32>
    %443 = arith.mulf %441, %442 : vector<8x64xf32>
    %444 = vector.extract_strided_slice %430 {offsets = [16, 0], sizes = [8, 64], strides = [1, 1]} : vector<32x64xf32> to vector<8x64xf32>
    %445 = vector.extract_strided_slice %430 {offsets = [24, 0], sizes = [8, 64], strides = [1, 1]} : vector<32x64xf32> to vector<8x64xf32>
    %446 = arith.maximumf %444, %445 : vector<8x64xf32>
    %447 = arith.subf %444, %446 : vector<8x64xf32>
    %448 = math.exp %447 : vector<8x64xf32>
    %449 = arith.subf %445, %446 : vector<8x64xf32>
    %450 = math.exp %449 : vector<8x64xf32>
    %451 = arith.mulf %448, %422 : vector<8x64xf32>
    %452 = arith.addf %448, %450 : vector<8x64xf32>
    %453 = arith.mulf %450, %423 : vector<8x64xf32>
    %454 = arith.addf %451, %453 : vector<8x64xf32>
    %455 = tpu.reciprocal %452 {approx = true} : vector<8x64xf32> -> vector<8x64xf32>
    %456 = arith.mulf %454, %455 : vector<8x64xf32>
    %457 = tpu.concatenate %443, %456 in 0 : vector<8x64xf32>, vector<8x64xf32> -> vector<16x64xf32>
    %c2_145 = arith.constant 2 : index
    %c0_146 = arith.constant 0 : index
    %c0_147 = arith.constant 0 : index
    %458 = vector.load %arg6[%c2_145, %c0_146, %c0_147] : memref<4x64x64xbf16, #tpu.memory_space<vmem>>, vector<1x64x64xbf16>
    %459 = vector.shape_cast %458 : vector<1x64x64xbf16> to vector<64x64xbf16>
    %460 = arith.truncf %457 : vector<16x64xf32> to vector<16x64xbf16>
    %cst_148 = arith.constant dense<0.000000e+00> : vector<16x64xf32>
    %461 = tpu.matmul %460, %459, %cst_148 {dimension_numbers = #tpu.dot_dimension_numbers<[1], [0], [0], [1], [0, 0, 1, 1], [], []>} : vector<16x64xbf16>, vector<64x64xbf16>, vector<16x64xf32> -> vector<16x64xf32>
    %462 = arith.addf %379, %461 : vector<16x64xf32>
    %463 = vector.broadcast %384 : vector<1x64xf32> to vector<16x64xf32>
    %464 = arith.addf %462, %463 : vector<16x64xf32>
    %cst_149 = arith.constant 5.000000e-01 : f32
    %465 = vector.broadcast %cst_149 : f32 to vector<16x256xf32>
    %466 = arith.mulf %465, %414 : vector<16x256xf32>
    %cst_150 = arith.constant 0.707106769 : f32
    %467 = vector.broadcast %cst_150 : f32 to vector<16x256xf32>
    %468 = arith.mulf %414, %467 : vector<16x256xf32>
    %469 = math.absf %468 : vector<16x256xf32>
    %cst_151 = arith.constant 0.327591091 : f32
    %470 = vector.broadcast %cst_151 : f32 to vector<16x256xf32>
    %471 = arith.mulf %470, %469 : vector<16x256xf32>
    %cst_152 = arith.constant 1.000000e+00 : f32
    %472 = vector.broadcast %cst_152 : f32 to vector<16x256xf32>
    %473 = arith.addf %472, %471 : vector<16x256xf32>
    %cst_153 = arith.constant 1.000000e+00 : f32
    %474 = vector.broadcast %cst_153 : f32 to vector<16x256xf32>
    %475 = arith.divf %474, %473 : vector<16x256xf32>
    %cst_154 = arith.constant 1.06140542 : f32
    %476 = vector.broadcast %cst_154 : f32 to vector<16x256xf32>
    %477 = arith.mulf %475, %476 : vector<16x256xf32>
    %cst_155 = arith.constant -1.45315206 : f32
    %478 = vector.broadcast %cst_155 : f32 to vector<16x256xf32>
    %479 = arith.addf %478, %477 : vector<16x256xf32>
    %480 = arith.mulf %475, %479 : vector<16x256xf32>
    %cst_156 = arith.constant 1.42141378 : f32
    %481 = vector.broadcast %cst_156 : f32 to vector<16x256xf32>
    %482 = arith.addf %481, %480 : vector<16x256xf32>
    %483 = arith.mulf %475, %482 : vector<16x256xf32>
    %cst_157 = arith.constant -0.284496725 : f32
    %484 = vector.broadcast %cst_157 : f32 to vector<16x256xf32>
    %485 = arith.addf %484, %483 : vector<16x256xf32>
    %486 = arith.mulf %475, %485 : vector<16x256xf32>
    %cst_158 = arith.constant 0.254829586 : f32
    %487 = vector.broadcast %cst_158 : f32 to vector<16x256xf32>
    %488 = arith.addf %487, %486 : vector<16x256xf32>
    %489 = arith.mulf %475, %488 : vector<16x256xf32>
    %cst_159 = arith.constant 0.000000e+00 : f32
    %490 = vector.broadcast %cst_159 : f32 to vector<16x256xf32>
    %491 = arith.subf %490, %469 : vector<16x256xf32>
    %492 = arith.mulf %491, %469 : vector<16x256xf32>
    %493 = math.exp %492 : vector<16x256xf32>
    %494 = arith.mulf %489, %493 : vector<16x256xf32>
    %cst_160 = arith.constant 1.000000e+00 : f32
    %495 = vector.broadcast %cst_160 : f32 to vector<16x256xf32>
    %496 = arith.subf %495, %494 : vector<16x256xf32>
    %cst_161 = arith.constant 0.000000e+00 : f32
    %497 = vector.broadcast %cst_161 : f32 to vector<16x256xf32>
    %498 = arith.cmpf oge, %468, %497 : vector<16x256xf32>
    %cst_162 = arith.constant 0.000000e+00 : f32
    %499 = vector.broadcast %cst_162 : f32 to vector<16x256xf32>
    %500 = arith.subf %499, %496 : vector<16x256xf32>
    %501 = arith.select %498, %496, %500 : vector<16x256xi1>, vector<16x256xf32>
    %cst_163 = arith.constant 1.000000e+00 : f32
    %502 = vector.broadcast %cst_163 : f32 to vector<16x256xf32>
    %503 = arith.addf %502, %501 : vector<16x256xf32>
    %504 = arith.mulf %466, %503 : vector<16x256xf32>
    %c2_164 = arith.constant 2 : index
    %c0_165 = arith.constant 0 : index
    %c0_166 = arith.constant 0 : index
    %505 = vector.load %arg8[%c2_164, %c0_165, %c0_166] : memref<4x256x64xbf16, #tpu.memory_space<vmem>>, vector<1x256x64xbf16>
    %506 = vector.shape_cast %505 : vector<1x256x64xbf16> to vector<256x64xbf16>
    %507 = arith.truncf %504 : vector<16x256xf32> to vector<16x256xbf16>
    %cst_167 = arith.constant dense<0.000000e+00> : vector<16x64xf32>
    %508 = tpu.matmul %507, %506, %cst_167 {dimension_numbers = #tpu.dot_dimension_numbers<[1], [0], [0], [1], [0, 0, 1, 1], [], []>} : vector<16x256xbf16>, vector<256x64xbf16>, vector<16x64xf32> -> vector<16x64xf32>
    %509 = vector.broadcast %385 : vector<1x64xf32> to vector<16x64xf32>
    %510 = arith.addf %508, %509 : vector<16x64xf32>
    %511 = arith.addf %464, %510 : vector<16x64xf32>
    %c2_168 = arith.constant 2 : index
    %c0_169 = arith.constant 0 : index
    %c0_170 = arith.constant 0 : index
    %512 = vector.load %arg7[%c2_168, %c0_169, %c0_170] : memref<4x64x256xbf16, #tpu.memory_space<vmem>>, vector<1x64x256xbf16>
    %513 = vector.shape_cast %512 : vector<1x64x256xbf16> to vector<64x256xbf16>
    %514 = arith.truncf %511 : vector<16x64xf32> to vector<16x64xbf16>
    %cst_171 = arith.constant dense<0.000000e+00> : vector<16x256xf32>
    %515 = tpu.matmul %514, %513, %cst_171 {dimension_numbers = #tpu.dot_dimension_numbers<[1], [0], [0], [1], [0, 0, 1, 1], [], []>} : vector<16x64xbf16>, vector<64x256xbf16>, vector<16x256xf32> -> vector<16x256xf32>
    %516 = vector.extract_strided_slice %387 {offsets = [0, 0], sizes = [1, 256], strides = [1, 1]} : vector<1x512xf32> to vector<1x256xf32>
    %517 = vector.broadcast %516 : vector<1x256xf32> to vector<16x256xf32>
    %518 = arith.addf %515, %517 : vector<16x256xf32>
    %cst_172 = arith.constant 5.000000e-01 : f32
    %519 = vector.broadcast %cst_172 : f32 to vector<16x256xf32>
    %520 = arith.mulf %519, %518 : vector<16x256xf32>
    %cst_173 = arith.constant 0.707106769 : f32
    %521 = vector.broadcast %cst_173 : f32 to vector<16x256xf32>
    %522 = arith.mulf %518, %521 : vector<16x256xf32>
    %523 = math.absf %522 : vector<16x256xf32>
    %cst_174 = arith.constant 0.327591091 : f32
    %524 = vector.broadcast %cst_174 : f32 to vector<16x256xf32>
    %525 = arith.mulf %524, %523 : vector<16x256xf32>
    %cst_175 = arith.constant 1.000000e+00 : f32
    %526 = vector.broadcast %cst_175 : f32 to vector<16x256xf32>
    %527 = arith.addf %526, %525 : vector<16x256xf32>
    %cst_176 = arith.constant 1.000000e+00 : f32
    %528 = vector.broadcast %cst_176 : f32 to vector<16x256xf32>
    %529 = arith.divf %528, %527 : vector<16x256xf32>
    %cst_177 = arith.constant 1.06140542 : f32
    %530 = vector.broadcast %cst_177 : f32 to vector<16x256xf32>
    %531 = arith.mulf %529, %530 : vector<16x256xf32>
    %cst_178 = arith.constant -1.45315206 : f32
    %532 = vector.broadcast %cst_178 : f32 to vector<16x256xf32>
    %533 = arith.addf %532, %531 : vector<16x256xf32>
    %534 = arith.mulf %529, %533 : vector<16x256xf32>
    %cst_179 = arith.constant 1.42141378 : f32
    %535 = vector.broadcast %cst_179 : f32 to vector<16x256xf32>
    %536 = arith.addf %535, %534 : vector<16x256xf32>
    %537 = arith.mulf %529, %536 : vector<16x256xf32>
    %cst_180 = arith.constant -0.284496725 : f32
    %538 = vector.broadcast %cst_180 : f32 to vector<16x256xf32>
    %539 = arith.addf %538, %537 : vector<16x256xf32>
    %540 = arith.mulf %529, %539 : vector<16x256xf32>
    %cst_181 = arith.constant 0.254829586 : f32
    %541 = vector.broadcast %cst_181 : f32 to vector<16x256xf32>
    %542 = arith.addf %541, %540 : vector<16x256xf32>
    %543 = arith.mulf %529, %542 : vector<16x256xf32>
    %cst_182 = arith.constant 0.000000e+00 : f32
    %544 = vector.broadcast %cst_182 : f32 to vector<16x256xf32>
    %545 = arith.subf %544, %523 : vector<16x256xf32>
    %546 = arith.mulf %545, %523 : vector<16x256xf32>
    %547 = math.exp %546 : vector<16x256xf32>
    %548 = arith.mulf %543, %547 : vector<16x256xf32>
    %cst_183 = arith.constant 1.000000e+00 : f32
    %549 = vector.broadcast %cst_183 : f32 to vector<16x256xf32>
    %550 = arith.subf %549, %548 : vector<16x256xf32>
    %cst_184 = arith.constant 0.000000e+00 : f32
    %551 = vector.broadcast %cst_184 : f32 to vector<16x256xf32>
    %552 = arith.cmpf oge, %522, %551 : vector<16x256xf32>
    %cst_185 = arith.constant 0.000000e+00 : f32
    %553 = vector.broadcast %cst_185 : f32 to vector<16x256xf32>
    %554 = arith.subf %553, %550 : vector<16x256xf32>
    %555 = arith.select %552, %550, %554 : vector<16x256xi1>, vector<16x256xf32>
    %cst_186 = arith.constant 1.000000e+00 : f32
    %556 = vector.broadcast %cst_186 : f32 to vector<16x256xf32>
    %557 = arith.addf %556, %555 : vector<16x256xf32>
    %558 = arith.mulf %520, %557 : vector<16x256xf32>
    %c2_187 = arith.constant 2 : index
    %c0_188 = arith.constant 0 : index
    %c0_189 = arith.constant 0 : index
    %559 = vector.load %arg8[%c2_187, %c0_188, %c0_189] : memref<4x256x64xbf16, #tpu.memory_space<vmem>>, vector<1x256x64xbf16>
    %560 = vector.shape_cast %559 : vector<1x256x64xbf16> to vector<256x64xbf16>
    %561 = arith.truncf %558 : vector<16x256xf32> to vector<16x256xbf16>
    %cst_190 = arith.constant dense<0.000000e+00> : vector<16x64xf32>
    %562 = tpu.matmul %561, %560, %cst_190 {dimension_numbers = #tpu.dot_dimension_numbers<[1], [0], [0], [1], [0, 0, 1, 1], [], []>} : vector<16x256xbf16>, vector<256x64xbf16>, vector<16x64xf32> -> vector<16x64xf32>
    %563 = vector.broadcast %385 : vector<1x64xf32> to vector<16x64xf32>
    %564 = arith.addf %562, %563 : vector<16x64xf32>
    %565 = arith.addf %511, %564 : vector<16x64xf32>
    %c3 = arith.constant 3 : index
    %c0_191 = arith.constant 0 : index
    %c0_192 = arith.constant 0 : index
    %566 = vector.load %arg9[%c3, %c0_191, %c0_192] : memref<4x4x64xf32, #tpu.memory_space<vmem>>, vector<1x4x64xf32>
    %567 = vector.shape_cast %566 : vector<1x4x64xf32> to vector<4x64xf32>
    %568 = vector.extract_strided_slice %567 {offsets = [0, 0], sizes = [1, 64], strides = [1, 1]} : vector<4x64xf32> to vector<1x64xf32>
    %569 = vector.extract_strided_slice %567 {offsets = [1, 0], sizes = [1, 64], strides = [1, 1]} : vector<4x64xf32> to vector<1x64xf32>
    %570 = vector.extract_strided_slice %567 {offsets = [2, 0], sizes = [1, 64], strides = [1, 1]} : vector<4x64xf32> to vector<1x64xf32>
    %571 = vector.extract_strided_slice %567 {offsets = [3, 0], sizes = [1, 64], strides = [1, 1]} : vector<4x64xf32> to vector<1x64xf32>
    %c3_193 = arith.constant 3 : index
    %c0_194 = arith.constant 0 : index
    %c0_195 = arith.constant 0 : index
    %572 = vector.load %arg5[%c3_193, %c0_194, %c0_195] : memref<4x1x512xf32, #tpu.memory_space<vmem>>, vector<1x1x512xf32>
    %573 = vector.shape_cast %572 : vector<1x1x512xf32> to vector<1x512xf32>
    %cst_196 = arith.constant dense<0.000000e+00> : vector<16xf32>
    %574 = vector.multi_reduction <add>, %565, %cst_196 [1] : vector<16x64xf32> to vector<16xf32>
    %575 = vector.shape_cast %574 : vector<16xf32> to vector<16x1xf32>
    %cst_197 = arith.constant 6.400000e+01 : f32
    %576 = vector.broadcast %cst_197 : f32 to vector<16x1xf32>
    %577 = arith.divf %575, %576 : vector<16x1xf32>
    %578 = vector.broadcast %577 : vector<16x1xf32> to vector<16x64xf32>
    %579 = arith.subf %565, %578 : vector<16x64xf32>
    %580 = arith.mulf %579, %579 : vector<16x64xf32>
    %cst_198 = arith.constant dense<0.000000e+00> : vector<16xf32>
    %581 = vector.multi_reduction <add>, %580, %cst_198 [1] : vector<16x64xf32> to vector<16xf32>
    %582 = vector.shape_cast %581 : vector<16xf32> to vector<16x1xf32>
    %cst_199 = arith.constant 6.400000e+01 : f32
    %583 = vector.broadcast %cst_199 : f32 to vector<16x1xf32>
    %584 = arith.divf %582, %583 : vector<16x1xf32>
    %cst_200 = arith.constant 9.99999974E-6 : f32
    %585 = vector.broadcast %cst_200 : f32 to vector<16x1xf32>
    %586 = arith.addf %584, %585 : vector<16x1xf32>
    %587 = math.rsqrt %586 : vector<16x1xf32>
    %588 = vector.broadcast %587 : vector<16x1xf32> to vector<16x64xf32>
    %589 = arith.mulf %579, %588 : vector<16x64xf32>
    %590 = vector.broadcast %568 : vector<1x64xf32> to vector<16x64xf32>
    %591 = arith.mulf %589, %590 : vector<16x64xf32>
    %592 = vector.broadcast %569 : vector<1x64xf32> to vector<16x64xf32>
    %593 = arith.addf %591, %592 : vector<16x64xf32>
    %c3_201 = arith.constant 3 : index
    %c0_202 = arith.constant 0 : index
    %c0_203 = arith.constant 0 : index
    %594 = vector.load %arg4[%c3_201, %c0_202, %c0_203] : memref<4x64x512xbf16, #tpu.memory_space<vmem>>, vector<1x64x512xbf16>
    %595 = vector.shape_cast %594 : vector<1x64x512xbf16> to vector<64x512xbf16>
    %596 = arith.truncf %593 : vector<16x64xf32> to vector<16x64xbf16>
    %cst_204 = arith.constant dense<0.000000e+00> : vector<16x512xf32>
    %597 = tpu.matmul %596, %595, %cst_204 {dimension_numbers = #tpu.dot_dimension_numbers<[1], [0], [0], [1], [0, 0, 1, 1], [], []>} : vector<16x64xbf16>, vector<64x512xbf16>, vector<16x512xf32> -> vector<16x512xf32>
    %598 = vector.broadcast %573 : vector<1x512xf32> to vector<16x512xf32>
    %599 = arith.addf %597, %598 : vector<16x512xf32>
    %600 = vector.extract_strided_slice %599 {offsets = [0, 0], sizes = [16, 256], strides = [1, 1]} : vector<16x512xf32> to vector<16x256xf32>
    %601 = vector.extract_strided_slice %599 {offsets = [0, 256], sizes = [16, 64], strides = [1, 1]} : vector<16x512xf32> to vector<16x64xf32>
    %602 = vector.extract_strided_slice %599 {offsets = [0, 320], sizes = [16, 64], strides = [1, 1]} : vector<16x512xf32> to vector<16x64xf32>
    %603 = vector.extract_strided_slice %599 {offsets = [0, 384], sizes = [16, 64], strides = [1, 1]} : vector<16x512xf32> to vector<16x64xf32>
    %604 = vector.extract_strided_slice %601 {offsets = [0, 0], sizes = [8, 64], strides = [1, 1]} : vector<16x64xf32> to vector<8x64xf32>
    %605 = vector.extract_strided_slice %601 {offsets = [8, 0], sizes = [8, 64], strides = [1, 1]} : vector<16x64xf32> to vector<8x64xf32>
    %606 = vector.extract_strided_slice %602 {offsets = [0, 0], sizes = [8, 64], strides = [1, 1]} : vector<16x64xf32> to vector<8x64xf32>
    %607 = vector.extract_strided_slice %602 {offsets = [8, 0], sizes = [8, 64], strides = [1, 1]} : vector<16x64xf32> to vector<8x64xf32>
    %608 = vector.extract_strided_slice %603 {offsets = [0, 0], sizes = [8, 64], strides = [1, 1]} : vector<16x64xf32> to vector<8x64xf32>
    %609 = vector.extract_strided_slice %603 {offsets = [8, 0], sizes = [8, 64], strides = [1, 1]} : vector<16x64xf32> to vector<8x64xf32>
    %610 = arith.mulf %604, %606 : vector<8x64xf32>
    %611 = arith.mulf %604, %607 : vector<8x64xf32>
    %612 = arith.mulf %605, %606 : vector<8x64xf32>
    %613 = arith.mulf %605, %607 : vector<8x64xf32>
    %614 = tpu.concatenate %610, %611, %612, %613 in 0 : vector<8x64xf32>, vector<8x64xf32>, vector<8x64xf32>, vector<8x64xf32> -> vector<32x64xf32>
    %615 = arith.truncf %614 : vector<32x64xf32> to vector<32x64xbf16>
    %cst_205 = arith.constant dense<0.000000e+00> : vector<32x64xf32>
    %616 = tpu.matmul %615, %0, %cst_205 {dimension_numbers = #tpu.dot_dimension_numbers<[1], [0], [0], [1], [0, 0, 1, 1], [], []>} : vector<32x64xbf16>, vector<64x64xbf16>, vector<32x64xf32> -> vector<32x64xf32>
    %617 = vector.extract_strided_slice %616 {offsets = [0, 0], sizes = [8, 64], strides = [1, 1]} : vector<32x64xf32> to vector<8x64xf32>
    %618 = vector.extract_strided_slice %616 {offsets = [8, 0], sizes = [8, 64], strides = [1, 1]} : vector<32x64xf32> to vector<8x64xf32>
    %619 = arith.maximumf %617, %618 : vector<8x64xf32>
    %620 = arith.subf %617, %619 : vector<8x64xf32>
    %621 = math.exp %620 : vector<8x64xf32>
    %622 = arith.subf %618, %619 : vector<8x64xf32>
    %623 = math.exp %622 : vector<8x64xf32>
    %624 = arith.mulf %621, %608 : vector<8x64xf32>
    %625 = arith.addf %621, %623 : vector<8x64xf32>
    %626 = arith.mulf %623, %609 : vector<8x64xf32>
    %627 = arith.addf %624, %626 : vector<8x64xf32>
    %628 = tpu.reciprocal %625 {approx = true} : vector<8x64xf32> -> vector<8x64xf32>
    %629 = arith.mulf %627, %628 : vector<8x64xf32>
    %630 = vector.extract_strided_slice %616 {offsets = [16, 0], sizes = [8, 64], strides = [1, 1]} : vector<32x64xf32> to vector<8x64xf32>
    %631 = vector.extract_strided_slice %616 {offsets = [24, 0], sizes = [8, 64], strides = [1, 1]} : vector<32x64xf32> to vector<8x64xf32>
    %632 = arith.maximumf %630, %631 : vector<8x64xf32>
    %633 = arith.subf %630, %632 : vector<8x64xf32>
    %634 = math.exp %633 : vector<8x64xf32>
    %635 = arith.subf %631, %632 : vector<8x64xf32>
    %636 = math.exp %635 : vector<8x64xf32>
    %637 = arith.mulf %634, %608 : vector<8x64xf32>
    %638 = arith.addf %634, %636 : vector<8x64xf32>
    %639 = arith.mulf %636, %609 : vector<8x64xf32>
    %640 = arith.addf %637, %639 : vector<8x64xf32>
    %641 = tpu.reciprocal %638 {approx = true} : vector<8x64xf32> -> vector<8x64xf32>
    %642 = arith.mulf %640, %641 : vector<8x64xf32>
    %643 = tpu.concatenate %629, %642 in 0 : vector<8x64xf32>, vector<8x64xf32> -> vector<16x64xf32>
    %c3_206 = arith.constant 3 : index
    %c0_207 = arith.constant 0 : index
    %c0_208 = arith.constant 0 : index
    %644 = vector.load %arg6[%c3_206, %c0_207, %c0_208] : memref<4x64x64xbf16, #tpu.memory_space<vmem>>, vector<1x64x64xbf16>
    %645 = vector.shape_cast %644 : vector<1x64x64xbf16> to vector<64x64xbf16>
    %646 = arith.truncf %643 : vector<16x64xf32> to vector<16x64xbf16>
    %cst_209 = arith.constant dense<0.000000e+00> : vector<16x64xf32>
    %647 = tpu.matmul %646, %645, %cst_209 {dimension_numbers = #tpu.dot_dimension_numbers<[1], [0], [0], [1], [0, 0, 1, 1], [], []>} : vector<16x64xbf16>, vector<64x64xbf16>, vector<16x64xf32> -> vector<16x64xf32>
    %648 = arith.addf %565, %647 : vector<16x64xf32>
    %649 = vector.broadcast %570 : vector<1x64xf32> to vector<16x64xf32>
    %650 = arith.addf %648, %649 : vector<16x64xf32>
    %cst_210 = arith.constant 5.000000e-01 : f32
    %651 = vector.broadcast %cst_210 : f32 to vector<16x256xf32>
    %652 = arith.mulf %651, %600 : vector<16x256xf32>
    %cst_211 = arith.constant 0.707106769 : f32
    %653 = vector.broadcast %cst_211 : f32 to vector<16x256xf32>
    %654 = arith.mulf %600, %653 : vector<16x256xf32>
    %655 = math.absf %654 : vector<16x256xf32>
    %cst_212 = arith.constant 0.327591091 : f32
    %656 = vector.broadcast %cst_212 : f32 to vector<16x256xf32>
    %657 = arith.mulf %656, %655 : vector<16x256xf32>
    %cst_213 = arith.constant 1.000000e+00 : f32
    %658 = vector.broadcast %cst_213 : f32 to vector<16x256xf32>
    %659 = arith.addf %658, %657 : vector<16x256xf32>
    %cst_214 = arith.constant 1.000000e+00 : f32
    %660 = vector.broadcast %cst_214 : f32 to vector<16x256xf32>
    %661 = arith.divf %660, %659 : vector<16x256xf32>
    %cst_215 = arith.constant 1.06140542 : f32
    %662 = vector.broadcast %cst_215 : f32 to vector<16x256xf32>
    %663 = arith.mulf %661, %662 : vector<16x256xf32>
    %cst_216 = arith.constant -1.45315206 : f32
    %664 = vector.broadcast %cst_216 : f32 to vector<16x256xf32>
    %665 = arith.addf %664, %663 : vector<16x256xf32>
    %666 = arith.mulf %661, %665 : vector<16x256xf32>
    %cst_217 = arith.constant 1.42141378 : f32
    %667 = vector.broadcast %cst_217 : f32 to vector<16x256xf32>
    %668 = arith.addf %667, %666 : vector<16x256xf32>
    %669 = arith.mulf %661, %668 : vector<16x256xf32>
    %cst_218 = arith.constant -0.284496725 : f32
    %670 = vector.broadcast %cst_218 : f32 to vector<16x256xf32>
    %671 = arith.addf %670, %669 : vector<16x256xf32>
    %672 = arith.mulf %661, %671 : vector<16x256xf32>
    %cst_219 = arith.constant 0.254829586 : f32
    %673 = vector.broadcast %cst_219 : f32 to vector<16x256xf32>
    %674 = arith.addf %673, %672 : vector<16x256xf32>
    %675 = arith.mulf %661, %674 : vector<16x256xf32>
    %cst_220 = arith.constant 0.000000e+00 : f32
    %676 = vector.broadcast %cst_220 : f32 to vector<16x256xf32>
    %677 = arith.subf %676, %655 : vector<16x256xf32>
    %678 = arith.mulf %677, %655 : vector<16x256xf32>
    %679 = math.exp %678 : vector<16x256xf32>
    %680 = arith.mulf %675, %679 : vector<16x256xf32>
    %cst_221 = arith.constant 1.000000e+00 : f32
    %681 = vector.broadcast %cst_221 : f32 to vector<16x256xf32>
    %682 = arith.subf %681, %680 : vector<16x256xf32>
    %cst_222 = arith.constant 0.000000e+00 : f32
    %683 = vector.broadcast %cst_222 : f32 to vector<16x256xf32>
    %684 = arith.cmpf oge, %654, %683 : vector<16x256xf32>
    %cst_223 = arith.constant 0.000000e+00 : f32
    %685 = vector.broadcast %cst_223 : f32 to vector<16x256xf32>
    %686 = arith.subf %685, %682 : vector<16x256xf32>
    %687 = arith.select %684, %682, %686 : vector<16x256xi1>, vector<16x256xf32>
    %cst_224 = arith.constant 1.000000e+00 : f32
    %688 = vector.broadcast %cst_224 : f32 to vector<16x256xf32>
    %689 = arith.addf %688, %687 : vector<16x256xf32>
    %690 = arith.mulf %652, %689 : vector<16x256xf32>
    %c3_225 = arith.constant 3 : index
    %c0_226 = arith.constant 0 : index
    %c0_227 = arith.constant 0 : index
    %691 = vector.load %arg8[%c3_225, %c0_226, %c0_227] : memref<4x256x64xbf16, #tpu.memory_space<vmem>>, vector<1x256x64xbf16>
    %692 = vector.shape_cast %691 : vector<1x256x64xbf16> to vector<256x64xbf16>
    %693 = arith.truncf %690 : vector<16x256xf32> to vector<16x256xbf16>
    %cst_228 = arith.constant dense<0.000000e+00> : vector<16x64xf32>
    %694 = tpu.matmul %693, %692, %cst_228 {dimension_numbers = #tpu.dot_dimension_numbers<[1], [0], [0], [1], [0, 0, 1, 1], [], []>} : vector<16x256xbf16>, vector<256x64xbf16>, vector<16x64xf32> -> vector<16x64xf32>
    %695 = vector.broadcast %571 : vector<1x64xf32> to vector<16x64xf32>
    %696 = arith.addf %694, %695 : vector<16x64xf32>
    %697 = arith.addf %650, %696 : vector<16x64xf32>
    %c3_229 = arith.constant 3 : index
    %c0_230 = arith.constant 0 : index
    %c0_231 = arith.constant 0 : index
    %698 = vector.load %arg7[%c3_229, %c0_230, %c0_231] : memref<4x64x256xbf16, #tpu.memory_space<vmem>>, vector<1x64x256xbf16>
    %699 = vector.shape_cast %698 : vector<1x64x256xbf16> to vector<64x256xbf16>
    %700 = arith.truncf %697 : vector<16x64xf32> to vector<16x64xbf16>
    %cst_232 = arith.constant dense<0.000000e+00> : vector<16x256xf32>
    %701 = tpu.matmul %700, %699, %cst_232 {dimension_numbers = #tpu.dot_dimension_numbers<[1], [0], [0], [1], [0, 0, 1, 1], [], []>} : vector<16x64xbf16>, vector<64x256xbf16>, vector<16x256xf32> -> vector<16x256xf32>
    %702 = vector.extract_strided_slice %573 {offsets = [0, 0], sizes = [1, 256], strides = [1, 1]} : vector<1x512xf32> to vector<1x256xf32>
    %703 = vector.broadcast %702 : vector<1x256xf32> to vector<16x256xf32>
    %704 = arith.addf %701, %703 : vector<16x256xf32>
    %cst_233 = arith.constant 5.000000e-01 : f32
    %705 = vector.broadcast %cst_233 : f32 to vector<16x256xf32>
    %706 = arith.mulf %705, %704 : vector<16x256xf32>
    %cst_234 = arith.constant 0.707106769 : f32
    %707 = vector.broadcast %cst_234 : f32 to vector<16x256xf32>
    %708 = arith.mulf %704, %707 : vector<16x256xf32>
    %709 = math.absf %708 : vector<16x256xf32>
    %cst_235 = arith.constant 0.327591091 : f32
    %710 = vector.broadcast %cst_235 : f32 to vector<16x256xf32>
    %711 = arith.mulf %710, %709 : vector<16x256xf32>
    %cst_236 = arith.constant 1.000000e+00 : f32
    %712 = vector.broadcast %cst_236 : f32 to vector<16x256xf32>
    %713 = arith.addf %712, %711 : vector<16x256xf32>
    %cst_237 = arith.constant 1.000000e+00 : f32
    %714 = vector.broadcast %cst_237 : f32 to vector<16x256xf32>
    %715 = arith.divf %714, %713 : vector<16x256xf32>
    %cst_238 = arith.constant 1.06140542 : f32
    %716 = vector.broadcast %cst_238 : f32 to vector<16x256xf32>
    %717 = arith.mulf %715, %716 : vector<16x256xf32>
    %cst_239 = arith.constant -1.45315206 : f32
    %718 = vector.broadcast %cst_239 : f32 to vector<16x256xf32>
    %719 = arith.addf %718, %717 : vector<16x256xf32>
    %720 = arith.mulf %715, %719 : vector<16x256xf32>
    %cst_240 = arith.constant 1.42141378 : f32
    %721 = vector.broadcast %cst_240 : f32 to vector<16x256xf32>
    %722 = arith.addf %721, %720 : vector<16x256xf32>
    %723 = arith.mulf %715, %722 : vector<16x256xf32>
    %cst_241 = arith.constant -0.284496725 : f32
    %724 = vector.broadcast %cst_241 : f32 to vector<16x256xf32>
    %725 = arith.addf %724, %723 : vector<16x256xf32>
    %726 = arith.mulf %715, %725 : vector<16x256xf32>
    %cst_242 = arith.constant 0.254829586 : f32
    %727 = vector.broadcast %cst_242 : f32 to vector<16x256xf32>
    %728 = arith.addf %727, %726 : vector<16x256xf32>
    %729 = arith.mulf %715, %728 : vector<16x256xf32>
    %cst_243 = arith.constant 0.000000e+00 : f32
    %730 = vector.broadcast %cst_243 : f32 to vector<16x256xf32>
    %731 = arith.subf %730, %709 : vector<16x256xf32>
    %732 = arith.mulf %731, %709 : vector<16x256xf32>
    %733 = math.exp %732 : vector<16x256xf32>
    %734 = arith.mulf %729, %733 : vector<16x256xf32>
    %cst_244 = arith.constant 1.000000e+00 : f32
    %735 = vector.broadcast %cst_244 : f32 to vector<16x256xf32>
    %736 = arith.subf %735, %734 : vector<16x256xf32>
    %cst_245 = arith.constant 0.000000e+00 : f32
    %737 = vector.broadcast %cst_245 : f32 to vector<16x256xf32>
    %738 = arith.cmpf oge, %708, %737 : vector<16x256xf32>
    %cst_246 = arith.constant 0.000000e+00 : f32
    %739 = vector.broadcast %cst_246 : f32 to vector<16x256xf32>
    %740 = arith.subf %739, %736 : vector<16x256xf32>
    %741 = arith.select %738, %736, %740 : vector<16x256xi1>, vector<16x256xf32>
    %cst_247 = arith.constant 1.000000e+00 : f32
    %742 = vector.broadcast %cst_247 : f32 to vector<16x256xf32>
    %743 = arith.addf %742, %741 : vector<16x256xf32>
    %744 = arith.mulf %706, %743 : vector<16x256xf32>
    %c3_248 = arith.constant 3 : index
    %c0_249 = arith.constant 0 : index
    %c0_250 = arith.constant 0 : index
    %745 = vector.load %arg8[%c3_248, %c0_249, %c0_250] : memref<4x256x64xbf16, #tpu.memory_space<vmem>>, vector<1x256x64xbf16>
    %746 = vector.shape_cast %745 : vector<1x256x64xbf16> to vector<256x64xbf16>
    %747 = arith.truncf %744 : vector<16x256xf32> to vector<16x256xbf16>
    %cst_251 = arith.constant dense<0.000000e+00> : vector<16x64xf32>
    %748 = tpu.matmul %747, %746, %cst_251 {dimension_numbers = #tpu.dot_dimension_numbers<[1], [0], [0], [1], [0, 0, 1, 1], [], []>} : vector<16x256xbf16>, vector<256x64xbf16>, vector<16x64xf32> -> vector<16x64xf32>
    %749 = vector.broadcast %571 : vector<1x64xf32> to vector<16x64xf32>
    %750 = arith.addf %748, %749 : vector<16x64xf32>
    %751 = arith.addf %697, %750 : vector<16x64xf32>
    %c0_252 = arith.constant 0 : index
    %c0_253 = arith.constant 0 : index
    %752 = vector.load %arg1[%c0_252, %c0_253] : memref<16x64xf32, #tpu.memory_space<vmem>>, vector<8x64xf32>
    %c8 = arith.constant 8 : index
    %c0_254 = arith.constant 0 : index
    %753 = vector.load %arg1[%c8, %c0_254] : memref<16x64xf32, #tpu.memory_space<vmem>>, vector<8x64xf32>
    %c0_255 = arith.constant 0 : index
    %c0_256 = arith.constant 0 : index
    %754 = vector.load %arg11[%c0_255, %c0_256] : memref<8x16xbf16, #tpu.memory_space<vmem>>, vector<8x16xbf16>
    %755 = arith.truncf %751 : vector<16x64xf32> to vector<16x64xbf16>
    %cst_257 = arith.constant dense<0.000000e+00> : vector<8x64xf32>
    %756 = tpu.matmul %754, %755, %cst_257 {dimension_numbers = #tpu.dot_dimension_numbers<[1], [0], [0], [1], [0, 0, 1, 1], [], []>} : vector<8x16xbf16>, vector<16x64xbf16>, vector<8x64xf32> -> vector<8x64xf32>
    %757 = arith.addf %752, %753 : vector<8x64xf32>
    %cst_258 = arith.constant 5.000000e-01 : f32
    %758 = vector.broadcast %cst_258 : f32 to vector<8x64xf32>
    %759 = arith.mulf %758, %757 : vector<8x64xf32>
    %760 = arith.addf %759, %756 : vector<8x64xf32>
    %c0_259 = arith.constant 0 : index
    %761 = memref.load %arg12[%c0_259] : memref<1xf32, #tpu.memory_space<smem>>
    %762 = vector.broadcast %761 : f32 to vector<8x64xf32>
    %763 = arith.addf %760, %762 : vector<8x64xf32>
    %c0_260 = arith.constant 0 : index
    %c0_261 = arith.constant 0 : index
    %764 = vector.load %arg13[%c0_260, %c0_261] : memref<8x64xf32, #tpu.memory_space<vmem>>, vector<8x64xf32>
    tpu.vector_store %arg13[%c0_260, %c0_261], %763 {strides = array<i32>} : memref<8x64xf32, #tpu.memory_space<vmem>>, vector<8x64xf32>,
    return
  }
}

</mosaic_0001>

<llo_original>
// kernel: restrans_forward.1
$region0: #{restrans_forward.1}
  #allocation0 [shape = 'u32[]', space=smem, size = 0x4, offset = 0x4, fixed_abs, tag = 'smem constant byte address 0x4 - core index']
  #allocation1 [shape = 'u32[144,128]{1,0:T(1,128)}', space=vmem, size = 0x12000, scoped, tag = 'internal scratch']
  #allocation2 [shape = 'f32[1]{0:T(128)S(6)}', space=smem, size = 0x200, scoped, tag = 'scoped memory for restrans_forward.1']
  %s0 = inlined_call_operand.vmem [shape: f32[16,64], index: 0, kind: input, shape index: {}]
  %s1 = inlined_call_operand.vmem [shape: f32[16,64], index: 1, kind: input, shape index: {}]
  %s2 = inlined_call_operand.vmem [shape: bf16[64,64], index: 2, kind: input, shape index: {}]
  %s3 = inlined_call_operand.vmem [shape: f32[1,64], index: 3, kind: input, shape index: {}]
  %s4 = inlined_call_operand.vmem [shape: bf16[4,64,512], index: 4, kind: input, shape index: {}]
  %s5 = inlined_call_operand.vmem [shape: f32[4,1,512], index: 5, kind: input, shape index: {}]
  %s6 = inlined_call_operand.vmem [shape: bf16[4,64,64], index: 6, kind: input, shape index: {}]
  %s7 = inlined_call_operand.vmem [shape: bf16[4,64,256], index: 7, kind: input, shape index: {}]
  %s8 = inlined_call_operand.vmem [shape: bf16[4,256,64], index: 8, kind: input, shape index: {}]
  %s9 = inlined_call_operand.vmem [shape: f32[4,4,64], index: 9, kind: input, shape index: {}]
  %s10 = inlined_call_operand.vmem [shape: bf16[64,64], index: 10, kind: input, shape index: {}]
  %s11 = inlined_call_operand.vmem [shape: bf16[8,16], index: 11, kind: input, shape index: {}]
  %s12 = inlined_call_operand.<no memory space> [shape: f32[1], index: 12, kind: input, shape index: {}]
  %s13 = inlined_call_operand.vmem [shape: f32[8,64], index: 13, kind: output, shape index: {}]
  %s14 = sld [smem:[#allocation0]]
  $region62: #{restrans_forward.1} parent=0
    _
  %s16 = ssub.s32 1, %s14
  %s17 = scalar_select 0, %s16, %s14
  %18 = sst [smem:[#allocation2]] %s12
  // Predicated region
  $region2: #{restrans_forward.1} parent=0 // pred_check
    _
  $region3: #{restrans_forward.1} parent=0 // pred_check_branch
    %20 = sbr.rel (0) target = $region5
  $region4: #{restrans_forward.1} parent=0 // pred_region
    _
  $region5: #{restrans_forward.1} parent=0 // pred_fallthru
    _
  // Predicated region
  $region6: #{restrans_forward.1} parent=0 // pred_check
    _
  $region7: #{restrans_forward.1} parent=0 // pred_check_branch
    %22 = sbr.rel (0) target = $region9
  $region8: #{restrans_forward.1} parent=0 // pred_region
    _
  $region9: #{restrans_forward.1} parent=0 // pred_fallthru
    _
  // Predicated region
  $region10: #{restrans_forward.1} parent=0 // pred_check
    _
  $region11: #{restrans_forward.1} parent=0 // pred_check_branch
    %24 = sbr.rel (0) target = $region13
  $region12: #{restrans_forward.1} parent=0 // pred_region
    _
  $region13: #{restrans_forward.1} parent=0 // pred_fallthru
    _
  // Predicated region
  $region14: #{restrans_forward.1} parent=0 // pred_check
    _
  $region15: #{restrans_forward.1} parent=0 // pred_check_branch
    %26 = sbr.rel (0) target = $region17
  $region16: #{restrans_forward.1} parent=0 // pred_region
    _
  $region17: #{restrans_forward.1} parent=0 // pred_fallthru
    _
  // Predicated region
  $region18: #{restrans_forward.1} parent=0 // pred_check
    _
  $region19: #{restrans_forward.1} parent=0 // pred_check_branch
    %28 = sbr.rel (0) target = $region21
  $region20: #{restrans_forward.1} parent=0 // pred_region
    _
  $region21: #{restrans_forward.1} parent=0 // pred_fallthru
    _
  // Predicated region
  $region22: #{restrans_forward.1} parent=0 // pred_check
    _
  $region23: #{restrans_forward.1} parent=0 // pred_check_branch
    %30 = sbr.rel (0) target = $region25
  $region24: #{restrans_forward.1} parent=0 // pred_region
    _
  $region25: #{restrans_forward.1} parent=0 // pred_fallthru
    _
  // Predicated region
  $region26: #{restrans_forward.1} parent=0 // pred_check
    _
  $region27: #{restrans_forward.1} parent=0 // pred_check_branch
    %32 = sbr.rel (0) target = $region29
  $region28: #{restrans_forward.1} parent=0 // pred_region
    _
  $region29: #{restrans_forward.1} parent=0 // pred_fallthru
    _
  // Predicated region
  $region30: #{restrans_forward.1} parent=0 // pred_check
    _
  $region31: #{restrans_forward.1} parent=0 // pred_check_branch
    %34 = sbr.rel (0) target = $region33
  $region32: #{restrans_forward.1} parent=0 // pred_region
    _
  $region33: #{restrans_forward.1} parent=0 // pred_fallthru
    _
  // Predicated region
  $region34: #{restrans_forward.1} parent=0 // pred_check
    _
  $region35: #{restrans_forward.1} parent=0 // pred_check_branch
    %36 = sbr.rel (0) target = $region37
  $region36: #{restrans_forward.1} parent=0 // pred_region
    _
  $region37: #{restrans_forward.1} parent=0 // pred_fallthru
    _
  // Predicated region
  $region38: #{restrans_forward.1} parent=0 // pred_check
    _
  $region39: #{restrans_forward.1} parent=0 // pred_check_branch
    %38 = sbr.rel (0) target = $region41
  $region40: #{restrans_forward.1} parent=0 // pred_region
    _
  $region41: #{restrans_forward.1} parent=0 // pred_fallthru
    _
  // Predicated region
  $region42: #{restrans_forward.1} parent=0 // pred_check
    _
  $region43: #{restrans_forward.1} parent=0 // pred_check_branch
    %40 = sbr.rel (0) target = $region45
  $region44: #{restrans_forward.1} parent=0 // pred_region
    _
  $region45: #{restrans_forward.1} parent=0 // pred_fallthru
    _
  // Predicated region
  $region46: #{restrans_forward.1} parent=0 // pred_check
    _
  $region47: #{restrans_forward.1} parent=0 // pred_check_branch
    %42 = sbr.rel (0) target = $region49
  $region48: #{restrans_forward.1} parent=0 // pred_region
    _
  $region49: #{restrans_forward.1} parent=0 // pred_fallthru
    _
  // Predicated region
  $region50: #{restrans_forward.1} parent=0 // pred_check
    _
  $region51: #{restrans_forward.1} parent=0 // pred_check_branch
    %44 = sbr.rel (0) target = $region53
  $region52: #{restrans_forward.1} parent=0 // pred_region
    _
  $region53: #{restrans_forward.1} parent=0 // pred_fallthru
    _
  %v46 = vld [vmem:[%s10] sm:$0xf]
  %v47 = vld [vmem:[%s10 + $0x4] sm:$0xf]
  %v48 = vld [vmem:[%s10 + $0x8] sm:$0xf]
  %v49 = vld [vmem:[%s10 + $0xc] sm:$0xf]
  %v50 = vld [vmem:[%s10 + $0x10] sm:$0xf]
  %v51 = vld [vmem:[%s10 + $0x14] sm:$0xf]
  %v52 = vld [vmem:[%s10 + $0x18] sm:$0xf]
  %v53 = vld [vmem:[%s10 + $0x1c] sm:$0xf]
  %v54 = vld [vmem:[%s0] sm:$0xff]
  %v55 = vld [vmem:[%s0 + $0x8] sm:$0xff]
  %v56 = vld [vmem:[%s2] sm:$0xf]
  %v57 = vld [vmem:[%s2 + $0x4] sm:$0xf]
  %v58 = vld [vmem:[%s2 + $0x8] sm:$0xf]
  %v59 = vld [vmem:[%s2 + $0xc] sm:$0xf]
  %v60 = vld [vmem:[%s2 + $0x10] sm:$0xf]
  %v61 = vld [vmem:[%s2 + $0x14] sm:$0xf]
  %v62 = vld [vmem:[%s2 + $0x18] sm:$0xf]
  %v63 = vld [vmem:[%s2 + $0x1c] sm:$0xf]
  %v64 = vpack.c.bf16 %v55, %v54
  %v65 = vld [vmem:[%s3] sm:$0x1]
  %v67 = vlaneseq
  %v68 = vshrl.u32 %v67, 7
  %v69 = vsub.s32 0, %v68
  %v70 = vrot.slane %v65, %v69
  %v80 = vunpack.c.l.b16 %v56
  %v81 = vunpack.c.l.b16 %v57
  %v82 = vunpack.c.l.b16 %v58
  %v83 = vunpack.c.l.b16 %v59
  %v84 = vunpack.c.l.b16 %v60
  %v85 = vunpack.c.l.b16 %v61
  %v86 = vunpack.c.l.b16 %v62
  %v87 = vunpack.c.l.b16 %v63
  %v88 = vpack.c.b16 %v81, %v80
  %v89 = vpack.c.b16 %v83, %v82
  %v90 = vpack.c.b16 %v85, %v84
  %v91 = vpack.c.b16 %v87, %v86
  %vm96 = vcmask 523264
  %v98 = vsel %vm96, %v64, 0
  %100 = vmatprep.subr.bf16.mxu0 0
  %101 = vmatpush1.bf16.msra.mxu0 0
  %102 = vmatprep.subr.bf16.mxu0 0
  %103 = vmatpush1.bf16.msra.mxu0 0
  %104 = vmatprep.subr.bf16.mxu0 0
  %105 = vmatpush1.bf16.msra.mxu0 0
  %106 = vmatprep.subr.bf16.mxu0 0
  %107 = vmatpush1.bf16.msra.mxu0 0
  %108 = vmatprep.subr.bf16.mxu0 0
  %109 = vmatpush1.bf16.msra.mxu0 %v91
  %110 = vmatprep.subr.bf16.mxu0 0
  %111 = vmatpush1.bf16.msra.mxu0 %v90
  %112 = vmatprep.subr.bf16.mxu0 0
  %113 = vmatpush1.bf16.msra.mxu0 %v89
  %114 = vmatprep.subr.bf16.mxu0 0
  %115 = vmatpush1.bf16.msra.mxu0 %v88
  %116 = vmatprep.subr.bf16.mxu0 0
  %117 = vmatpush2.bf16.msra.mxu0 0
  %118 = vmatprep.subr.bf16.mxu0 0
  %119 = vmatpush2.bf16.msra.mxu0 0
  %120 = vmatprep.subr.bf16.mxu0 0
  %121 = vmatpush2.bf16.msra.mxu0 0
  %122 = vmatprep.subr.bf16.mxu0 0
  %123 = vmatpush2.bf16.msra.mxu0 0
  %124 = vmatprep.subr.bf16.mxu0 0
  %125 = vmatpush2.bf16.msra.mxu0 0
  %126 = vmatprep.subr.bf16.mxu0 0
  %127 = vmatpush2.bf16.msra.mxu0 0
  %128 = vmatprep.subr.bf16.mxu0 0
  %129 = vmatpush2.bf16.msra.mxu0 0
  %130 = vmatprep.subr.bf16.mxu0 0
  %131 = vmatpush2.bf16.msra.mxu0 0
  %132 = vmatprep.mubr.bf16.mxu0 0
  %133 = vmatmul.mubr.bf16.gmra.mxu0 %v98
  %v134 = vpop.f32.mrf.mxu0
  %v135 = vadd.f32 %v70, %v134
  %v136 = vpop.f32.mrf.mxu0
  %v137 = vpop.f32.mrf.mxu0
  %v138 = vadd.f32 %v70, %v137
  %v139 = vpop.f32.mrf.mxu0
  %140 = vdwg.mxu0
  %v141 = vld [vmem:[%s9] sm:$0xf]
  %v142 = vld [vmem:[%s5] sm:$0xf]
  %v143 = vsel %vm96, %v135, 0.0
  %144 = vadd.xlane.f32.xlu0 %v143
  %v145 = vpop.xlane.xlu0 %144
  %v146 = vsel %vm96, %v138, 0.0
  %147 = vadd.xlane.f32.xlu0 %v146
  %v148 = vpop.xlane.xlu0 %147
  %v149 = vrcp.pop 64.0
  %v150 = vmul.f32 %v145, %v149
  %v151 = vmul.f32 %v148, %v149
  %v152 = vsub.f32 %v135, %v150
  %v153 = vsub.f32 %v138, %v151
  %v154 = vmul.f32 %v152, %v152
  %v155 = vmul.f32 %v153, %v153
  %v156 = vsel %vm96, %v154, 0.0
  %157 = vadd.xlane.f32.xlu0 %v156
  %v158 = vpop.xlane.xlu0 %157
  %v159 = vsel %vm96, %v155, 0.0
  %160 = vadd.xlane.f32.xlu0 %v159
  %v161 = vpop.xlane.xlu0 %160
  %v162 = vmul.f32 %v158, %v149
  %v163 = vmul.f32 %v161, %v149
  %v164 = vadd.f32 %v162, 1e-05
  %v165 = vadd.f32 %v163, 1e-05
  %v166 = vrsqrt.pop %v164
  %v167 = vrsqrt.pop %v165
  %v168 = vmul.f32 %v152, %v166
  %v169 = vmul.f32 %v153, %v167
  %v170 = vlaneseq
  %v171 = vshrl.u32 %v170, 7
  %v172 = vsub.s32 0, %v171
  %v173 = vrot.slane %v141, %v172
  %v174 = vmul.f32 %v168, %v173
  %v175 = vmul.f32 %v169, %v173
  %v176 = vlaneseq
  %v177 = vshrl.u32 %v176, 7
  %v178 = vsub.s32 1, %v177
  %v179 = vrot.slane %v141, %v178
  %v180 = vadd.f32 %v174, %v179
  %v181 = vadd.f32 %v175, %v179
  %v182 = vld [vmem:[%s4] sm:$0xff]
  %v183 = vld [vmem:[%s4 + $0x8] sm:$0xff]
  %v184 = vld [vmem:[%s4 + $0x10] sm:$0xff]
  %v185 = vld [vmem:[%s4 + $0x18] sm:$0xff]
  %v186 = vld [vmem:[%s4 + $0x20] sm:$0xff]
  %v187 = vld [vmem:[%s4 + $0x28] sm:$0xff]
  %v188 = vld [vmem:[%s4 + $0x30] sm:$0xff]
  %v189 = vld [vmem:[%s4 + $0x38] sm:$0xff]
  %v190 = vld [vmem:[%s4 + $0x40] sm:$0xff]
  %v191 = vld [vmem:[%s4 + $0x48] sm:$0xff]
  %v192 = vld [vmem:[%s4 + $0x50] sm:$0xff]
  %v193 = vld [vmem:[%s4 + $0x58] sm:$0xff]
  %v194 = vld [vmem:[%s4 + $0x60] sm:$0xff]
  %v195 = vld [vmem:[%s4 + $0x68] sm:$0xff]
  %v196 = vld [vmem:[%s4 + $0x70] sm:$0xff]
  %v197 = vld [vmem:[%s4 + $0x78] sm:$0xff]
  %v198 = vpack.c.bf16 %v181, %v180
  %v200 = vlaneseq
  %v201 = vshrl.u32 %v200, 7
  %v202 = vsub.s32 0, %v201
  %v203 = vrot.slane %v142, %v202
  %v204 = vlaneseq
  %v205 = vshrl.u32 %v204, 7
  %v206 = vsub.s32 1, %v205
  %v207 = vrot.slane %v142, %v206
  %v208 = vlaneseq
  %v209 = vshrl.u32 %v208, 7
  %v210 = vsub.s32 2, %v209
  %v211 = vrot.slane %v142, %v210
  %v212 = vlaneseq
  %v213 = vshrl.u32 %v212, 7
  %v214 = vsub.s32 3, %v213
  %v215 = vrot.slane %v142, %v214
  %v236 = vunpack.c.l.b16 %v182
  %v237 = vunpack.c.h.b16 %v182
  %v238 = vunpack.c.l.b16 %v183
  %v239 = vunpack.c.h.b16 %v183
  %v240 = vunpack.c.l.b16 %v184
  %v241 = vunpack.c.h.b16 %v184
  %v242 = vunpack.c.l.b16 %v185
  %v243 = vunpack.c.h.b16 %v185
  %v244 = vunpack.c.l.b16 %v186
  %v245 = vunpack.c.h.b16 %v186
  %v246 = vunpack.c.l.b16 %v187
  %v247 = vunpack.c.h.b16 %v187
  %v248 = vunpack.c.l.b16 %v188
  %v249 = vunpack.c.h.b16 %v188
  %v250 = vunpack.c.l.b16 %v189
  %v251 = vunpack.c.h.b16 %v189
  %v252 = vunpack.c.l.b16 %v190
  %v253 = vunpack.c.h.b16 %v190
  %v254 = vunpack.c.l.b16 %v191
  %v255 = vunpack.c.h.b16 %v191
  %v256 = vunpack.c.l.b16 %v192
  %v257 = vunpack.c.h.b16 %v192
  %v258 = vunpack.c.l.b16 %v193
  %v259 = vunpack.c.h.b16 %v193
  %v260 = vunpack.c.l.b16 %v194
  %v261 = vunpack.c.h.b16 %v194
  %v262 = vunpack.c.l.b16 %v195
  %v263 = vunpack.c.h.b16 %v195
  %v264 = vunpack.c.l.b16 %v196
  %v265 = vunpack.c.h.b16 %v196
  %v266 = vunpack.c.l.b16 %v197
  %v267 = vunpack.c.h.b16 %v197
  %v268 = vpack.c.b16 %v240, %v236
  %v269 = vpack.c.b16 %v241, %v237
  %v270 = vpack.c.b16 %v242, %v238
  %v271 = vpack.c.b16 %v243, %v239
  %v272 = vpack.c.b16 %v248, %v244
  %v273 = vpack.c.b16 %v249, %v245
  %v274 = vpack.c.b16 %v250, %v246
  %v275 = vpack.c.b16 %v251, %v247
  %v276 = vpack.c.b16 %v256, %v252
  %v277 = vpack.c.b16 %v257, %v253
  %v278 = vpack.c.b16 %v258, %v254
  %v279 = vpack.c.b16 %v259, %v255
  %v280 = vpack.c.b16 %v264, %v260
  %v281 = vpack.c.b16 %v265, %v261
  %v282 = vpack.c.b16 %v266, %v262
  %v283 = vpack.c.b16 %v267, %v263
  %v301 = vsel %vm96, %v198, 0
  %303 = vmatprep.subr.bf16.mxu0 0
  %304 = vmatpush1.bf16.msra.mxu0 0
  %305 = vmatprep.subr.bf16.mxu0 0
  %306 = vmatpush1.bf16.msra.mxu0 0
  %307 = vmatprep.subr.bf16.mxu0 0
  %308 = vmatpush1.bf16.msra.mxu0 0
  %309 = vmatprep.subr.bf16.mxu0 0
  %310 = vmatpush1.bf16.msra.mxu0 0
  %311 = vmatprep.subr.bf16.mxu0 %v281
  %312 = vmatpush1.bf16.msra.mxu0 %v280
  %313 = vmatprep.subr.bf16.mxu0 %v277
  %314 = vmatpush1.bf16.msra.mxu0 %v276
  %315 = vmatprep.subr.bf16.mxu0 %v273
  %316 = vmatpush1.bf16.msra.mxu0 %v272
  %317 = vmatprep.subr.bf16.mxu0 %v269
  %318 = vmatpush1.bf16.msra.mxu0 %v268
  %319 = vmatprep.subr.bf16.mxu0 0
  %320 = vmatpush2.bf16.msra.mxu0 0
  %321 = vmatprep.subr.bf16.mxu0 0
  %322 = vmatpush2.bf16.msra.mxu0 0
  %323 = vmatprep.subr.bf16.mxu0 0
  %324 = vmatpush2.bf16.msra.mxu0 0
  %325 = vmatprep.subr.bf16.mxu0 0
  %326 = vmatpush2.bf16.msra.mxu0 0
  %327 = vmatprep.subr.bf16.mxu0 0
  %328 = vmatpush2.bf16.msra.mxu0 0
  %329 = vmatprep.subr.bf16.mxu0 0
  %330 = vmatpush2.bf16.msra.mxu0 0
  %331 = vmatprep.subr.bf16.mxu0 0
  %332 = vmatpush2.bf16.msra.mxu0 0
  %333 = vmatprep.subr.bf16.mxu0 0
  %334 = vmatpush2.bf16.msra.mxu0 0
  %335 = vmatprep.mubr.bf16.mxu0 0
  %336 = vmatmul.mubr.bf16.gmra.mxu0 %v301
  %v337 = vpop.f32.mrf.mxu0
  %v338 = vadd.f32 %v203, %v337
  %v339 = vpop.f32.mrf.mxu0
  %v340 = vadd.f32 %v207, %v339
  %v341 = vpop.f32.mrf.mxu0
  %v342 = vadd.f32 %v203, %v341
  %v343 = vpop.f32.mrf.mxu0
  %v344 = vadd.f32 %v207, %v343
  %345 = vdwg.mxu0
  %346 = vmatprep.subr.bf16.mxu0 0
  %347 = vmatpush1.bf16.msra.mxu0 0
  %348 = vmatprep.subr.bf16.mxu0 0
  %349 = vmatpush1.bf16.msra.mxu0 0
  %350 = vmatprep.subr.bf16.mxu0 0
  %351 = vmatpush1.bf16.msra.mxu0 0
  %352 = vmatprep.subr.bf16.mxu0 0
  %353 = vmatpush1.bf16.msra.mxu0 0
  %354 = vmatprep.subr.bf16.mxu0 %v283
  %355 = vmatpush1.bf16.msra.mxu0 %v282
  %356 = vmatprep.subr.bf16.mxu0 %v279
  %357 = vmatpush1.bf16.msra.mxu0 %v278
  %358 = vmatprep.subr.bf16.mxu0 %v275
  %359 = vmatpush1.bf16.msra.mxu0 %v274
  %360 = vmatprep.subr.bf16.mxu0 %v271
  %361 = vmatpush1.bf16.msra.mxu0 %v270
  %362 = vmatprep.subr.bf16.mxu0 0
  %363 = vmatpush2.bf16.msra.mxu0 0
  %364 = vmatprep.subr.bf16.mxu0 0
  %365 = vmatpush2.bf16.msra.mxu0 0
  %366 = vmatprep.subr.bf16.mxu0 0
  %367 = vmatpush2.bf16.msra.mxu0 0
  %368 = vmatprep.subr.bf16.mxu0 0
  %369 = vmatpush2.bf16.msra.mxu0 0
  %370 = vmatprep.subr.bf16.mxu0 0
  %371 = vmatpush2.bf16.msra.mxu0 0
  %372 = vmatprep.subr.bf16.mxu0 0
  %373 = vmatpush2.bf16.msra.mxu0 0
  %374 = vmatprep.subr.bf16.mxu0 0
  %375 = vmatpush2.bf16.msra.mxu0 0
  %376 = vmatprep.subr.bf16.mxu0 0
  %377 = vmatpush2.bf16.msra.mxu0 0
  %378 = vmatprep.mubr.bf16.mxu0 0
  %379 = vmatmul.mubr.bf16.gmra.mxu0 %v301
  %v380 = vpop.f32.mrf.mxu0
  %v381 = vadd.f32 %v211, %v380
  %v382 = vpop.f32.mrf.mxu0
  %v383 = vadd.f32 %v215, %v382
  %v384 = vpop.f32.mrf.mxu0
  %v385 = vadd.f32 %v211, %v384
  %v386 = vpop.f32.mrf.mxu0
  %v387 = vadd.f32 %v215, %v386
  %388 = vdwg.mxu0
  %390 = vrot.lane.b32.xlu0 %v381, 64
  %v391 = vpop.permute.xlu0 %390
  %v393 = vmul.f32 %v381, %v391
  %395 = vrot.lane.b32.xlu0 %v385, 64
  %v396 = vpop.permute.xlu0 %395
  %v398 = vmul.f32 %v381, %v396
  %v399 = vmul.f32 %v385, %v391
  %v400 = vmul.f32 %v385, %v396
  %v401 = vpack.c.bf16 %v398, %v393
  %v402 = vpack.c.bf16 %v400, %v399
  %v411 = vunpack.c.l.b16 %v46
  %v412 = vunpack.c.l.b16 %v47
  %v413 = vunpack.c.l.b16 %v48
  %v414 = vunpack.c.l.b16 %v49
  %v415 = vunpack.c.l.b16 %v50
  %v416 = vunpack.c.l.b16 %v51
  %v417 = vunpack.c.l.b16 %v52
  %v418 = vunpack.c.l.b16 %v53
  %v419 = vpack.c.b16 %v412, %v411
  %v420 = vpack.c.b16 %v414, %v413
  %v421 = vpack.c.b16 %v416, %v415
  %v422 = vpack.c.b16 %v418, %v417
  %v428 = vsel %vm96, %v401, 0
  %v431 = vsel %vm96, %v402, 0
  %433 = vmatprep.subr.bf16.mxu0 0
  %434 = vmatpush1.bf16.msra.mxu0 0
  %435 = vmatprep.subr.bf16.mxu0 0
  %436 = vmatpush1.bf16.msra.mxu0 0
  %437 = vmatprep.subr.bf16.mxu0 0
  %438 = vmatpush1.bf16.msra.mxu0 0
  %439 = vmatprep.subr.bf16.mxu0 0
  %440 = vmatpush1.bf16.msra.mxu0 0
  %441 = vmatprep.subr.bf16.mxu0 0
  %442 = vmatpush1.bf16.msra.mxu0 %v422
  %443 = vmatprep.subr.bf16.mxu0 0
  %444 = vmatpush1.bf16.msra.mxu0 %v421
  %445 = vmatprep.subr.bf16.mxu0 0
  %446 = vmatpush1.bf16.msra.mxu0 %v420
  %447 = vmatprep.subr.bf16.mxu0 0
  %448 = vmatpush1.bf16.msra.mxu0 %v419
  %449 = vmatprep.subr.bf16.mxu0 0
  %450 = vmatpush2.bf16.msra.mxu0 0
  %451 = vmatprep.subr.bf16.mxu0 0
  %452 = vmatpush2.bf16.msra.mxu0 0
  %453 = vmatprep.subr.bf16.mxu0 0
  %454 = vmatpush2.bf16.msra.mxu0 0
  %455 = vmatprep.subr.bf16.mxu0 0
  %456 = vmatpush2.bf16.msra.mxu0 0
  %457 = vmatprep.subr.bf16.mxu0 0
  %458 = vmatpush2.bf16.msra.mxu0 0
  %459 = vmatprep.subr.bf16.mxu0 0
  %460 = vmatpush2.bf16.msra.mxu0 0
  %461 = vmatprep.subr.bf16.mxu0 0
  %462 = vmatpush2.bf16.msra.mxu0 0
  %463 = vmatprep.subr.bf16.mxu0 0
  %464 = vmatpush2.bf16.msra.mxu0 0
  %465 = vmatprep.mubr.bf16.mxu0 0
  %466 = vmatmul.mubr.bf16.gmra.mxu0 %v428
  %v467 = vpop.f32.mrf.mxu0
  %v468 = vadd.f32 0.0, %v467
  %v469 = vpop.f32.mrf.mxu0
  %v470 = vpop.f32.mrf.mxu0
  %v471 = vadd.f32 0.0, %v470
  %v472 = vpop.f32.mrf.mxu0
  %473 = vmatprep.mubr.bf16.mxu0 0
  %474 = vmatmul.mubr.bf16.gmra.mxu0 %v431
  %v475 = vpop.f32.mrf.mxu0
  %v476 = vadd.f32 0.0, %v475
  %v477 = vpop.f32.mrf.mxu0
  %v478 = vpop.f32.mrf.mxu0
  %v479 = vadd.f32 0.0, %v478
  %v480 = vpop.f32.mrf.mxu0
  %481 = vdwg.mxu0
  %v482 = vmax.f32 %v468, %v471
  %v483 = vsub.f32 %v468, %v482
  %v484 = vmul.f32 %v483, 1.442695
  %v485 = vpow.pop %v484
  %v486 = vsub.f32 %v471, %v482
  %v487 = vmul.f32 %v486, 1.442695
  %v488 = vpow.pop %v487
  %v489 = vmul.f32 %v485, %v383
  %v490 = vadd.f32 %v485, %v488
  %v491 = vmul.f32 %v488, %v387
  %v492 = vadd.f32 %v489, %v491
  %v493 = vrcp.pop %v490
  %v494 = vmul.f32 %v492, %v493
  %v495 = vmax.f32 %v476, %v479
  %v496 = vsub.f32 %v476, %v495
  %v497 = vmul.f32 %v496, 1.442695
  %v498 = vpow.pop %v497
  %v499 = vsub.f32 %v479, %v495
  %v500 = vmul.f32 %v499, 1.442695
  %v501 = vpow.pop %v500
  %v502 = vmul.f32 %v498, %v383
  %v503 = vadd.f32 %v498, %v501
  %v504 = vmul.f32 %v501, %v387
  %v505 = vadd.f32 %v502, %v504
  %v506 = vrcp.pop %v503
  %v507 = vmul.f32 %v505, %v506
  %v508 = vld [vmem:[%s6] sm:$0xf]
  %v509 = vld [vmem:[%s6 + $0x4] sm:$0xf]
  %v510 = vld [vmem:[%s6 + $0x8] sm:$0xf]
  %v511 = vld [vmem:[%s6 + $0xc] sm:$0xf]
  %v512 = vld [vmem:[%s6 + $0x10] sm:$0xf]
  %v513 = vld [vmem:[%s6 + $0x14] sm:$0xf]
  %v514 = vld [vmem:[%s6 + $0x18] sm:$0xf]
  %v515 = vld [vmem:[%s6 + $0x1c] sm:$0xf]
  %v516 = vpack.c.bf16 %v507, %v494
  %v525 = vunpack.c.l.b16 %v508
  %v526 = vunpack.c.l.b16 %v509
  %v527 = vunpack.c.l.b16 %v510
  %v528 = vunpack.c.l.b16 %v511
  %v529 = vunpack.c.l.b16 %v512
  %v530 = vunpack.c.l.b16 %v513
  %v531 = vunpack.c.l.b16 %v514
  %v532 = vunpack.c.l.b16 %v515
  %v533 = vpack.c.b16 %v526, %v525
  %v534 = vpack.c.b16 %v528, %v527
  %v535 = vpack.c.b16 %v530, %v529
  %v536 = vpack.c.b16 %v532, %v531
  %v542 = vsel %vm96, %v516, 0
  %544 = vmatprep.subr.bf16.mxu0 0
  %545 = vmatpush1.bf16.msra.mxu0 0
  %546 = vmatprep.subr.bf16.mxu0 0
  %547 = vmatpush1.bf16.msra.mxu0 0
  %548 = vmatprep.subr.bf16.mxu0 0
  %549 = vmatpush1.bf16.msra.mxu0 0
  %550 = vmatprep.subr.bf16.mxu0 0
  %551 = vmatpush1.bf16.msra.mxu0 0
  %552 = vmatprep.subr.bf16.mxu0 0
  %553 = vmatpush1.bf16.msra.mxu0 %v536
  %554 = vmatprep.subr.bf16.mxu0 0
  %555 = vmatpush1.bf16.msra.mxu0 %v535
  %556 = vmatprep.subr.bf16.mxu0 0
  %557 = vmatpush1.bf16.msra.mxu0 %v534
  %558 = vmatprep.subr.bf16.mxu0 0
  %559 = vmatpush1.bf16.msra.mxu0 %v533
  %560 = vmatprep.subr.bf16.mxu0 0
  %561 = vmatpush2.bf16.msra.mxu0 0
  %562 = vmatprep.subr.bf16.mxu0 0
  %563 = vmatpush2.bf16.msra.mxu0 0
  %564 = vmatprep.subr.bf16.mxu0 0
  %565 = vmatpush2.bf16.msra.mxu0 0
  %566 = vmatprep.subr.bf16.mxu0 0
  %567 = vmatpush2.bf16.msra.mxu0 0
  %568 = vmatprep.subr.bf16.mxu0 0
  %569 = vmatpush2.bf16.msra.mxu0 0
  %570 = vmatprep.subr.bf16.mxu0 0
  %571 = vmatpush2.bf16.msra.mxu0 0
  %572 = vmatprep.subr.bf16.mxu0 0
  %573 = vmatpush2.bf16.msra.mxu0 0
  %574 = vmatprep.subr.bf16.mxu0 0
  %575 = vmatpush2.bf16.msra.mxu0 0
  %576 = vmatprep.mubr.bf16.mxu0 0
  %577 = vmatmul.mubr.bf16.gmra.mxu0 %v542
  %v578 = vpop.f32.mrf.mxu0
  %v579 = vadd.f32 0.0, %v578
  %v580 = vpop.f32.mrf.mxu0
  %v581 = vpop.f32.mrf.mxu0
  %v582 = vadd.f32 0.0, %v581
  %v583 = vpop.f32.mrf.mxu0
  %584 = vdwg.mxu0
  %v585 = vadd.f32 %v135, %v579
  %v586 = vadd.f32 %v138, %v582
  %v587 = vlaneseq
  %v588 = vshrl.u32 %v587, 7
  %v589 = vsub.s32 2, %v588
  %v590 = vrot.slane %v141, %v589
  %v591 = vadd.f32 %v585, %v590
  %v592 = vadd.f32 %v586, %v590
  %v593 = vmul.f32 %v338, 0.5
  %v594 = vmul.f32 %v340, 0.5
  %v595 = vmul.f32 %v342, 0.5
  %v596 = vmul.f32 %v344, 0.5
  %v597 = vmul.f32 %v338, 0.70710677
  %v598 = vmul.f32 %v340, 0.70710677
  %v599 = vmul.f32 %v342, 0.70710677
  %v600 = vmul.f32 %v344, 0.70710677
  %v601 = vand.u32 2147483647, %v597
  %v602 = vand.u32 2147483647, %v598
  %v603 = vand.u32 2147483647, %v599
  %v604 = vand.u32 2147483647, %v600
  %v605 = vmul.f32 %v601, 0.3275911
  %v606 = vmul.f32 %v602, 0.3275911
  %v607 = vmul.f32 %v603, 0.3275911
  %v608 = vmul.f32 %v604, 0.3275911
  %v609 = vadd.f32 %v605, 1.0
  %v610 = vadd.f32 %v606, 1.0
  %v611 = vadd.f32 %v607, 1.0
  %v612 = vadd.f32 %v608, 1.0
  %v613 = vrcp.pop %v609
  %v614 = vmul.f32 1.0, %v613
  %v615 = vrcp.pop %v610
  %v616 = vmul.f32 1.0, %v615
  %v617 = vrcp.pop %v611
  %v618 = vmul.f32 1.0, %v617
  %v619 = vrcp.pop %v612
  %v620 = vmul.f32 1.0, %v619
  %v621 = vmul.f32 %v614, 1.0614054
  %v622 = vmul.f32 %v616, 1.0614054
  %v623 = vmul.f32 %v618, 1.0614054
  %v624 = vmul.f32 %v620, 1.0614054
  %v625 = vadd.f32 %v621, -1.4531521
  %v626 = vadd.f32 %v622, -1.4531521
  %v627 = vadd.f32 %v623, -1.4531521
  %v628 = vadd.f32 %v624, -1.4531521
  %v629 = vmul.f32 %v614, %v625
  %v630 = vmul.f32 %v616, %v626
  %v631 = vmul.f32 %v618, %v627
  %v632 = vmul.f32 %v620, %v628
  %v633 = vadd.f32 %v629, 1.4214138
  %v634 = vadd.f32 %v630, 1.4214138
  %v635 = vadd.f32 %v631, 1.4214138
  %v636 = vadd.f32 %v632, 1.4214138
  %v637 = vmul.f32 %v614, %v633
  %v638 = vmul.f32 %v616, %v634
  %v639 = vmul.f32 %v618, %v635
  %v640 = vmul.f32 %v620, %v636
  %v641 = vadd.f32 %v637, -0.28449672
  %v642 = vadd.f32 %v638, -0.28449672
  %v643 = vadd.f32 %v639, -0.28449672
  %v644 = vadd.f32 %v640, -0.28449672
  %v645 = vmul.f32 %v614, %v641
  %v646 = vmul.f32 %v616, %v642
  %v647 = vmul.f32 %v618, %v643
  %v648 = vmul.f32 %v620, %v644
  %v649 = vadd.f32 %v645, 0.2548296
  %v650 = vadd.f32 %v646, 0.2548296
  %v651 = vadd.f32 %v647, 0.2548296
  %v652 = vadd.f32 %v648, 0.2548296
  %v653 = vmul.f32 %v614, %v649
  %v654 = vmul.f32 %v616, %v650
  %v655 = vmul.f32 %v618, %v651
  %v656 = vmul.f32 %v620, %v652
  %v657 = vsub.f32 0.0, %v601
  %v658 = vsub.f32 0.0, %v602
  %v659 = vsub.f32 0.0, %v603
  %v660 = vsub.f32 0.0, %v604
  %v661 = vmul.f32 %v657, %v601
  %v662 = vmul.f32 %v658, %v602
  %v663 = vmul.f32 %v659, %v603
  %v664 = vmul.f32 %v660, %v604
  %v665 = vmul.f32 %v661, 1.442695
  %v666 = vpow.pop %v665
  %v667 = vmul.f32 %v662, 1.442695
  %v668 = vpow.pop %v667
  %v669 = vmul.f32 %v663, 1.442695
  %v670 = vpow.pop %v669
  %v671 = vmul.f32 %v664, 1.442695
  %v672 = vpow.pop %v671
  %v673 = vmul.f32 %v653, %v666
  %v674 = vmul.f32 %v654, %v668
  %v675 = vmul.f32 %v655, %v670
  %v676 = vmul.f32 %v656, %v672
  %v677 = vsub.f32 1.0, %v673
  %v678 = vsub.f32 1.0, %v674
  %v679 = vsub.f32 1.0, %v675
  %v680 = vsub.f32 1.0, %v676
  %vm681 = vcmp.ge.f32.partialorder %v597, 0.0
  %vm682 = vcmp.ge.f32.partialorder %v598, 0.0
  %vm683 = vcmp.ge.f32.partialorder %v599, 0.0
  %vm684 = vcmp.ge.f32.partialorder %v600, 0.0
  %v685 = vsub.f32 0.0, %v677
  %v686 = vsub.f32 0.0, %v678
  %v687 = vsub.f32 0.0, %v679
  %v688 = vsub.f32 0.0, %v680
  %v689 = vsel %vm681, %v677, %v685
  %v690 = vsel %vm682, %v678, %v686
  %v691 = vsel %vm683, %v679, %v687
  %v692 = vsel %vm684, %v680, %v688
  %v693 = vadd.f32 %v689, 1.0
  %v694 = vadd.f32 %v690, 1.0
  %v695 = vadd.f32 %v691, 1.0
  %v696 = vadd.f32 %v692, 1.0
  %v697 = vmul.f32 %v593, %v693
  %v698 = vmul.f32 %v594, %v694
  %v699 = vmul.f32 %v595, %v695
  %v700 = vmul.f32 %v596, %v696
  %v701 = vld [vmem:[%s8] sm:$0xf]
  %v702 = vld [vmem:[%s8 + $0x4] sm:$0xf]
  %v703 = vld [vmem:[%s8 + $0x8] sm:$0xf]
  %v704 = vld [vmem:[%s8 + $0xc] sm:$0xf]
  %v705 = vld [vmem:[%s8 + $0x10] sm:$0xf]
  %v706 = vld [vmem:[%s8 + $0x14] sm:$0xf]
  %v707 = vld [vmem:[%s8 + $0x18] sm:$0xf]
  %v708 = vld [vmem:[%s8 + $0x1c] sm:$0xf]
  %v709 = vld [vmem:[%s8 + $0x20] sm:$0xf]
  %v710 = vld [vmem:[%s8 + $0x24] sm:$0xf]
  %v711 = vld [vmem:[%s8 + $0x28] sm:$0xf]
  %v712 = vld [vmem:[%s8 + $0x2c] sm:$0xf]
  %v713 = vld [vmem:[%s8 + $0x30] sm:$0xf]
  %v714 = vld [vmem:[%s8 + $0x34] sm:$0xf]
  %v715 = vld [vmem:[%s8 + $0x38] sm:$0xf]
  %v716 = vld [vmem:[%s8 + $0x3c] sm:$0xf]
  %v717 = vld [vmem:[%s8 + $0x40] sm:$0xf]
  %v718 = vld [vmem:[%s8 + $0x44] sm:$0xf]
  %v719 = vld [vmem:[%s8 + $0x48] sm:$0xf]
  %v720 = vld [vmem:[%s8 + $0x4c] sm:$0xf]
  %v721 = vld [vmem:[%s8 + $0x50] sm:$0xf]
  %v722 = vld [vmem:[%s8 + $0x54] sm:$0xf]
  %v723 = vld [vmem:[%s8 + $0x58] sm:$0xf]
  %v724 = vld [vmem:[%s8 + $0x5c] sm:$0xf]
  %v725 = vld [vmem:[%s8 + $0x60] sm:$0xf]
  %v726 = vld [vmem:[%s8 + $0x64] sm:$0xf]
  %v727 = vld [vmem:[%s8 + $0x68] sm:$0xf]
  %v728 = vld [vmem:[%s8 + $0x6c] sm:$0xf]
  %v729 = vld [vmem:[%s8 + $0x70] sm:$0xf]
  %v730 = vld [vmem:[%s8 + $0x74] sm:$0xf]
  %v731 = vld [vmem:[%s8 + $0x78] sm:$0xf]
  %v732 = vld [vmem:[%s8 + $0x7c] sm:$0xf]
  %v733 = vpack.c.bf16 %v699, %v697
  %v734 = vpack.c.bf16 %v700, %v698
  %v735 = vlaneseq
  %v736 = vshrl.u32 %v735, 7
  %v737 = vsub.s32 3, %v736
  %v738 = vrot.slane %v141, %v737
  %v771 = vunpack.c.l.b16 %v701
  %v772 = vunpack.c.l.b16 %v702
  %v773 = vunpack.c.l.b16 %v703
  %v774 = vunpack.c.l.b16 %v704
  %v775 = vunpack.c.l.b16 %v705
  %v776 = vunpack.c.l.b16 %v706
  %v777 = vunpack.c.l.b16 %v707
  %v778 = vunpack.c.l.b16 %v708
  %v779 = vunpack.c.l.b16 %v709
  %v780 = vunpack.c.l.b16 %v710
  %v781 = vunpack.c.l.b16 %v711
  %v782 = vunpack.c.l.b16 %v712
  %v783 = vunpack.c.l.b16 %v713
  %v784 = vunpack.c.l.b16 %v714
  %v785 = vunpack.c.l.b16 %v715
  %v786 = vunpack.c.l.b16 %v716
  %v787 = vunpack.c.l.b16 %v717
  %v788 = vunpack.c.l.b16 %v718
  %v789 = vunpack.c.l.b16 %v719
  %v790 = vunpack.c.l.b16 %v720
  %v791 = vunpack.c.l.b16 %v721
  %v792 = vunpack.c.l.b16 %v722
  %v793 = vunpack.c.l.b16 %v723
  %v794 = vunpack.c.l.b16 %v724
  %v795 = vunpack.c.l.b16 %v725
  %v796 = vunpack.c.l.b16 %v726
  %v797 = vunpack.c.l.b16 %v727
  %v798 = vunpack.c.l.b16 %v728
  %v799 = vunpack.c.l.b16 %v729
  %v800 = vunpack.c.l.b16 %v730
  %v801 = vunpack.c.l.b16 %v731
  %v802 = vunpack.c.l.b16 %v732
  %v803 = vpack.c.b16 %v772, %v771
  %v804 = vpack.c.b16 %v774, %v773
  %v805 = vpack.c.b16 %v776, %v775
  %v806 = vpack.c.b16 %v778, %v777
  %v807 = vpack.c.b16 %v780, %v779
  %v808 = vpack.c.b16 %v782, %v781
  %v809 = vpack.c.b16 %v784, %v783
  %v810 = vpack.c.b16 %v786, %v785
  %v811 = vpack.c.b16 %v788, %v787
  %v812 = vpack.c.b16 %v790, %v789
  %v813 = vpack.c.b16 %v792, %v791
  %v814 = vpack.c.b16 %v794, %v793
  %v815 = vpack.c.b16 %v796, %v795
  %v816 = vpack.c.b16 %v798, %v797
  %v817 = vpack.c.b16 %v800, %v799
  %v818 = vpack.c.b16 %v802, %v801
  %835 = vmatprep.subr.bf16.mxu0 0
  %836 = vmatpush1.bf16.msra.mxu0 %v810
  %837 = vmatprep.subr.bf16.mxu0 0
  %838 = vmatpush1.bf16.msra.mxu0 %v809
  %839 = vmatprep.subr.bf16.mxu0 0
  %840 = vmatpush1.bf16.msra.mxu0 %v808
  %841 = vmatprep.subr.bf16.mxu0 0
  %842 = vmatpush1.bf16.msra.mxu0 %v807
  %843 = vmatprep.subr.bf16.mxu0 0
  %844 = vmatpush1.bf16.msra.mxu0 %v806
  %845 = vmatprep.subr.bf16.mxu0 0
  %846 = vmatpush1.bf16.msra.mxu0 %v805
  %847 = vmatprep.subr.bf16.mxu0 0
  %848 = vmatpush1.bf16.msra.mxu0 %v804
  %849 = vmatprep.subr.bf16.mxu0 0
  %850 = vmatpush1.bf16.msra.mxu0 %v803
  %851 = vmatprep.subr.bf16.mxu0 0
  %852 = vmatpush2.bf16.msra.mxu0 %v818
  %853 = vmatprep.subr.bf16.mxu0 0
  %854 = vmatpush2.bf16.msra.mxu0 %v817
  %855 = vmatprep.subr.bf16.mxu0 0
  %856 = vmatpush2.bf16.msra.mxu0 %v816
  %857 = vmatprep.subr.bf16.mxu0 0
  %858 = vmatpush2.bf16.msra.mxu0 %v815
  %859 = vmatprep.subr.bf16.mxu0 0
  %860 = vmatpush2.bf16.msra.mxu0 %v814
  %861 = vmatprep.subr.bf16.mxu0 0
  %862 = vmatpush2.bf16.msra.mxu0 %v813
  %863 = vmatprep.subr.bf16.mxu0 0
  %864 = vmatpush2.bf16.msra.mxu0 %v812
  %865 = vmatprep.subr.bf16.mxu0 0
  %866 = vmatpush2.bf16.msra.mxu0 %v811
  %867 = vmatprep.mubr.bf16.mxu0 %v734
  %868 = vmatmul.mubr.bf16.gmra.mxu0 %v733
  %v869 = vpop.f32.mrf.mxu0
  %v870 = vadd.f32 %v738, %v869
  %v871 = vpop.f32.mrf.mxu0
  %v872 = vpop.f32.mrf.mxu0
  %v873 = vadd.f32 %v738, %v872
  %v874 = vpop.f32.mrf.mxu0
  %875 = vdwg.mxu0
  %v876 = vadd.f32 %v591, %v870
  %v877 = vadd.f32 %v592, %v873
  %v878 = vld [vmem:[%s7] sm:$0xff]
  %v879 = vld [vmem:[%s7 + $0x8] sm:$0xff]
  %v880 = vld [vmem:[%s7 + $0x10] sm:$0xff]
  %v881 = vld [vmem:[%s7 + $0x18] sm:$0xff]
  %v882 = vld [vmem:[%s7 + $0x20] sm:$0xff]
  %v883 = vld [vmem:[%s7 + $0x28] sm:$0xff]
  %v884 = vld [vmem:[%s7 + $0x30] sm:$0xff]
  %v885 = vld [vmem:[%s7 + $0x38] sm:$0xff]
  %v886 = vpack.c.bf16 %v877, %v876
  %v895 = vunpack.c.l.b16 %v878
  %v896 = vunpack.c.h.b16 %v878
  %v897 = vunpack.c.l.b16 %v879
  %v898 = vunpack.c.h.b16 %v879
  %v899 = vunpack.c.l.b16 %v880
  %v900 = vunpack.c.h.b16 %v880
  %v901 = vunpack.c.l.b16 %v881
  %v902 = vunpack.c.h.b16 %v881
  %v903 = vunpack.c.l.b16 %v882
  %v904 = vunpack.c.h.b16 %v882
  %v905 = vunpack.c.l.b16 %v883
  %v906 = vunpack.c.h.b16 %v883
  %v907 = vunpack.c.l.b16 %v884
  %v908 = vunpack.c.h.b16 %v884
  %v909 = vunpack.c.l.b16 %v885
  %v910 = vunpack.c.h.b16 %v885
  %v911 = vpack.c.b16 %v897, %v895
  %v912 = vpack.c.b16 %v898, %v896
  %v913 = vpack.c.b16 %v901, %v899
  %v914 = vpack.c.b16 %v902, %v900
  %v915 = vpack.c.b16 %v905, %v903
  %v916 = vpack.c.b16 %v906, %v904
  %v917 = vpack.c.b16 %v909, %v907
  %v918 = vpack.c.b16 %v910, %v908
  %v928 = vsel %vm96, %v886, 0
  %930 = vmatprep.subr.bf16.mxu0 0
  %931 = vmatpush1.bf16.msra.mxu0 0
  %932 = vmatprep.subr.bf16.mxu0 0
  %933 = vmatpush1.bf16.msra.mxu0 0
  %934 = vmatprep.subr.bf16.mxu0 0
  %935 = vmatpush1.bf16.msra.mxu0 0
  %936 = vmatprep.subr.bf16.mxu0 0
  %937 = vmatpush1.bf16.msra.mxu0 0
  %938 = vmatprep.subr.bf16.mxu0 %v918
  %939 = vmatpush1.bf16.msra.mxu0 %v917
  %940 = vmatprep.subr.bf16.mxu0 %v916
  %941 = vmatpush1.bf16.msra.mxu0 %v915
  %942 = vmatprep.subr.bf16.mxu0 %v914
  %943 = vmatpush1.bf16.msra.mxu0 %v913
  %944 = vmatprep.subr.bf16.mxu0 %v912
  %945 = vmatpush1.bf16.msra.mxu0 %v911
  %946 = vmatprep.subr.bf16.mxu0 0
  %947 = vmatpush2.bf16.msra.mxu0 0
  %948 = vmatprep.subr.bf16.mxu0 0
  %949 = vmatpush2.bf16.msra.mxu0 0
  %950 = vmatprep.subr.bf16.mxu0 0
  %951 = vmatpush2.bf16.msra.mxu0 0
  %952 = vmatprep.subr.bf16.mxu0 0
  %953 = vmatpush2.bf16.msra.mxu0 0
  %954 = vmatprep.subr.bf16.mxu0 0
  %955 = vmatpush2.bf16.msra.mxu0 0
  %956 = vmatprep.subr.bf16.mxu0 0
  %957 = vmatpush2.bf16.msra.mxu0 0
  %958 = vmatprep.subr.bf16.mxu0 0
  %959 = vmatpush2.bf16.msra.mxu0 0
  %960 = vmatprep.subr.bf16.mxu0 0
  %961 = vmatpush2.bf16.msra.mxu0 0
  %962 = vmatprep.mubr.bf16.mxu0 0
  %963 = vmatmul.mubr.bf16.gmra.mxu0 %v928
  %v964 = vpop.f32.mrf.mxu0
  %v965 = vadd.f32 %v203, %v964
  %v966 = vpop.f32.mrf.mxu0
  %v967 = vadd.f32 %v207, %v966
  %v968 = vpop.f32.mrf.mxu0
  %v969 = vadd.f32 %v203, %v968
  %v970 = vpop.f32.mrf.mxu0
  %v971 = vadd.f32 %v207, %v970
  %972 = vdwg.mxu0
  %v973 = vmul.f32 %v965, 0.5
  %v974 = vmul.f32 %v967, 0.5
  %v975 = vmul.f32 %v969, 0.5
  %v976 = vmul.f32 %v971, 0.5
  %v977 = vmul.f32 %v965, 0.70710677
  %v978 = vmul.f32 %v967, 0.70710677
  %v979 = vmul.f32 %v969, 0.70710677
  %v980 = vmul.f32 %v971, 0.70710677
  %v981 = vand.u32 2147483647, %v977
  %v982 = vand.u32 2147483647, %v978
  %v983 = vand.u32 2147483647, %v979
  %v984 = vand.u32 2147483647, %v980
  %v985 = vmul.f32 %v981, 0.3275911
  %v986 = vmul.f32 %v982, 0.3275911
  %v987 = vmul.f32 %v983, 0.3275911
  %v988 = vmul.f32 %v984, 0.3275911
  %v989 = vadd.f32 %v985, 1.0
  %v990 = vadd.f32 %v986, 1.0
  %v991 = vadd.f32 %v987, 1.0
  %v992 = vadd.f32 %v988, 1.0
  %v993 = vrcp.pop %v989
  %v994 = vmul.f32 1.0, %v993
  %v995 = vrcp.pop %v990
  %v996 = vmul.f32 1.0, %v995
  %v997 = vrcp.pop %v991
  %v998 = vmul.f32 1.0, %v997
  %v999 = vrcp.pop %v992
  %v1000 = vmul.f32 1.0, %v999
  %v1001 = vmul.f32 %v994, 1.0614054
  %v1002 = vmul.f32 %v996, 1.0614054
  %v1003 = vmul.f32 %v998, 1.0614054
  %v1004 = vmul.f32 %v1000, 1.0614054
  %v1005 = vadd.f32 %v1001, -1.4531521
  %v1006 = vadd.f32 %v1002, -1.4531521
  %v1007 = vadd.f32 %v1003, -1.4531521
  %v1008 = vadd.f32 %v1004, -1.4531521
  %v1009 = vmul.f32 %v994, %v1005
  %v1010 = vmul.f32 %v996, %v1006
  %v1011 = vmul.f32 %v998, %v1007
  %v1012 = vmul.f32 %v1000, %v1008
  %v1013 = vadd.f32 %v1009, 1.4214138
  %v1014 = vadd.f32 %v1010, 1.4214138
  %v1015 = vadd.f32 %v1011, 1.4214138
  %v1016 = vadd.f32 %v1012, 1.4214138
  %v1017 = vmul.f32 %v994, %v1013
  %v1018 = vmul.f32 %v996, %v1014
  %v1019 = vmul.f32 %v998, %v1015
  %v1020 = vmul.f32 %v1000, %v1016
  %v1021 = vadd.f32 %v1017, -0.28449672
  %v1022 = vadd.f32 %v1018, -0.28449672
  %v1023 = vadd.f32 %v1019, -0.28449672
  %v1024 = vadd.f32 %v1020, -0.28449672
  %v1025 = vmul.f32 %v994, %v1021
  %v1026 = vmul.f32 %v996, %v1022
  %v1027 = vmul.f32 %v998, %v1023
  %v1028 = vmul.f32 %v1000, %v1024
  %v1029 = vadd.f32 %v1025, 0.2548296
  %v1030 = vadd.f32 %v1026, 0.2548296
  %v1031 = vadd.f32 %v1027, 0.2548296
  %v1032 = vadd.f32 %v1028, 0.2548296
  %v1033 = vmul.f32 %v994, %v1029
  %v1034 = vmul.f32 %v996, %v1030
  %v1035 = vmul.f32 %v998, %v1031
  %v1036 = vmul.f32 %v1000, %v1032
  %v1037 = vsub.f32 0.0, %v981
  %v1038 = vsub.f32 0.0, %v982
  %v1039 = vsub.f32 0.0, %v983
  %v1040 = vsub.f32 0.0, %v984
  %v1041 = vmul.f32 %v1037, %v981
  %v1042 = vmul.f32 %v1038, %v982
  %v1043 = vmul.f32 %v1039, %v983
  %v1044 = vmul.f32 %v1040, %v984
  %v1045 = vmul.f32 %v1041, 1.442695
  %v1046 = vpow.pop %v1045
  %v1047 = vmul.f32 %v1042, 1.442695
  %v1048 = vpow.pop %v1047
  %v1049 = vmul.f32 %v1043, 1.442695
  %v1050 = vpow.pop %v1049
  %v1051 = vmul.f32 %v1044, 1.442695
  %v1052 = vpow.pop %v1051
  %v1053 = vmul.f32 %v1033, %v1046
  %v1054 = vmul.f32 %v1034, %v1048
  %v1055 = vmul.f32 %v1035, %v1050
  %v1056 = vmul.f32 %v1036, %v1052
  %v1057 = vsub.f32 1.0, %v1053
  %v1058 = vsub.f32 1.0, %v1054
  %v1059 = vsub.f32 1.0, %v1055
  %v1060 = vsub.f32 1.0, %v1056
  %vm1061 = vcmp.ge.f32.partialorder %v977, 0.0
  %vm1062 = vcmp.ge.f32.partialorder %v978, 0.0
  %vm1063 = vcmp.ge.f32.partialorder %v979, 0.0
  %vm1064 = vcmp.ge.f32.partialorder %v980, 0.0
  %v1065 = vsub.f32 0.0, %v1057
  %v1066 = vsub.f32 0.0, %v1058
  %v1067 = vsub.f32 0.0, %v1059
  %v1068 = vsub.f32 0.0, %v1060
  %v1069 = vsel %vm1061, %v1057, %v1065
  %v1070 = vsel %vm1062, %v1058, %v1066
  %v1071 = vsel %vm1063, %v1059, %v1067
  %v1072 = vsel %vm1064, %v1060, %v1068
  %v1073 = vadd.f32 %v1069, 1.0
  %v1074 = vadd.f32 %v1070, 1.0
  %v1075 = vadd.f32 %v1071, 1.0
  %v1076 = vadd.f32 %v1072, 1.0
  %v1077 = vmul.f32 %v973, %v1073
  %v1078 = vmul.f32 %v974, %v1074
  %v1079 = vmul.f32 %v975, %v1075
  %v1080 = vmul.f32 %v976, %v1076
  %v1081 = vpack.c.bf16 %v1079, %v1077
  %v1082 = vpack.c.bf16 %v1080, %v1078
  %1083 = vmatprep.subr.bf16.mxu0 0
  %1084 = vmatpush1.bf16.msra.mxu0 %v810
  %1085 = vmatprep.subr.bf16.mxu0 0
  %1086 = vmatpush1.bf16.msra.mxu0 %v809
  %1087 = vmatprep.subr.bf16.mxu0 0
  %1088 = vmatpush1.bf16.msra.mxu0 %v808
  %1089 = vmatprep.subr.bf16.mxu0 0
  %1090 = vmatpush1.bf16.msra.mxu0 %v807
  %1091 = vmatprep.subr.bf16.mxu0 0
  %1092 = vmatpush1.bf16.msra.mxu0 %v806
  %1093 = vmatprep.subr.bf16.mxu0 0
  %1094 = vmatpush1.bf16.msra.mxu0 %v805
  %1095 = vmatprep.subr.bf16.mxu0 0
  %1096 = vmatpush1.bf16.msra.mxu0 %v804
  %1097 = vmatprep.subr.bf16.mxu0 0
  %1098 = vmatpush1.bf16.msra.mxu0 %v803
  %1099 = vmatprep.subr.bf16.mxu0 0
  %1100 = vmatpush2.bf16.msra.mxu0 %v818
  %1101 = vmatprep.subr.bf16.mxu0 0
  %1102 = vmatpush2.bf16.msra.mxu0 %v817
  %1103 = vmatprep.subr.bf16.mxu0 0
  %1104 = vmatpush2.bf16.msra.mxu0 %v816
  %1105 = vmatprep.subr.bf16.mxu0 0
  %1106 = vmatpush2.bf16.msra.mxu0 %v815
  %1107 = vmatprep.subr.bf16.mxu0 0
  %1108 = vmatpush2.bf16.msra.mxu0 %v814
  %1109 = vmatprep.subr.bf16.mxu0 0
  %1110 = vmatpush2.bf16.msra.mxu0 %v813
  %1111 = vmatprep.subr.bf16.mxu0 0
  %1112 = vmatpush2.bf16.msra.mxu0 %v812
  %1113 = vmatprep.subr.bf16.mxu0 0
  %1114 = vmatpush2.bf16.msra.mxu0 %v811
  %1115 = vmatprep.mubr.bf16.mxu0 %v1082
  %1116 = vmatmul.mubr.bf16.gmra.mxu0 %v1081
  %v1117 = vpop.f32.mrf.mxu0
  %v1118 = vadd.f32 %v738, %v1117
  %v1119 = vpop.f32.mrf.mxu0
  %v1120 = vpop.f32.mrf.mxu0
  %v1121 = vadd.f32 %v738, %v1120
  %v1122 = vpop.f32.mrf.mxu0
  %1123 = vdwg.mxu0
  %v1124 = vadd.f32 %v876, %v1118
  %v1125 = vadd.f32 %v877, %v1121
  %s1126 = scalar_lea.vmem %s9, 4
  %v1127 = vld [vmem:[%s1126] sm:$0xf]
  %s1128 = scalar_lea.vmem %s5, 4
  %v1129 = vld [vmem:[%s1128] sm:$0xf]
  %v1130 = vsel %vm96, %v1124, 0.0
  %1131 = vadd.xlane.f32.xlu0 %v1130
  %v1132 = vpop.xlane.xlu0 %1131
  %v1133 = vsel %vm96, %v1125, 0.0
  %1134 = vadd.xlane.f32.xlu0 %v1133
  %v1135 = vpop.xlane.xlu0 %1134
  %v1136 = vmul.f32 %v1132, %v149
  %v1137 = vmul.f32 %v1135, %v149
  %v1138 = vsub.f32 %v1124, %v1136
  %v1139 = vsub.f32 %v1125, %v1137
  %v1140 = vmul.f32 %v1138, %v1138
  %v1141 = vmul.f32 %v1139, %v1139
  %v1142 = vsel %vm96, %v1140, 0.0
  %1143 = vadd.xlane.f32.xlu0 %v1142
  %v1144 = vpop.xlane.xlu0 %1143
  %v1145 = vsel %vm96, %v1141, 0.0
  %1146 = vadd.xlane.f32.xlu0 %v1145
  %v1147 = vpop.xlane.xlu0 %1146
  %v1148 = vmul.f32 %v1144, %v149
  %v1149 = vmul.f32 %v1147, %v149
  %v1150 = vadd.f32 %v1148, 1e-05
  %v1151 = vadd.f32 %v1149, 1e-05
  %v1152 = vrsqrt.pop %v1150
  %v1153 = vrsqrt.pop %v1151
  %v1154 = vmul.f32 %v1138, %v1152
  %v1155 = vmul.f32 %v1139, %v1153
  %v1156 = vlaneseq
  %v1157 = vshrl.u32 %v1156, 7
  %v1158 = vsub.s32 0, %v1157
  %v1159 = vrot.slane %v1127, %v1158
  %v1160 = vmul.f32 %v1154, %v1159
  %v1161 = vmul.f32 %v1155, %v1159
  %v1162 = vlaneseq
  %v1163 = vshrl.u32 %v1162, 7
  %v1164 = vsub.s32 1, %v1163
  %v1165 = vrot.slane %v1127, %v1164
  %v1166 = vadd.f32 %v1160, %v1165
  %v1167 = vadd.f32 %v1161, %v1165
  %s1168 = scalar_lea.vmem %s4, 128
  %v1169 = vld [vmem:[%s1168] sm:$0xff]
  %v1170 = vld [vmem:[%s1168 + $0x8] sm:$0xff]
  %v1171 = vld [vmem:[%s1168 + $0x10] sm:$0xff]
  %v1172 = vld [vmem:[%s1168 + $0x18] sm:$0xff]
  %v1173 = vld [vmem:[%s1168 + $0x20] sm:$0xff]
  %v1174 = vld [vmem:[%s1168 + $0x28] sm:$0xff]
  %v1175 = vld [vmem:[%s1168 + $0x30] sm:$0xff]
  %v1176 = vld [vmem:[%s1168 + $0x38] sm:$0xff]
  %v1177 = vld [vmem:[%s1168 + $0x40] sm:$0xff]
  %v1178 = vld [vmem:[%s1168 + $0x48] sm:$0xff]
  %v1179 = vld [vmem:[%s1168 + $0x50] sm:$0xff]
  %v1180 = vld [vmem:[%s1168 + $0x58] sm:$0xff]
  %v1181 = vld [vmem:[%s1168 + $0x60] sm:$0xff]
  %v1182 = vld [vmem:[%s1168 + $0x68] sm:$0xff]
  %v1183 = vld [vmem:[%s1168 + $0x70] sm:$0xff]
  %v1184 = vld [vmem:[%s1168 + $0x78] sm:$0xff]
  %v1185 = vpack.c.bf16 %v1167, %v1166
  %v1187 = vlaneseq
  %v1188 = vshrl.u32 %v1187, 7
  %v1189 = vsub.s32 0, %v1188
  %v1190 = vrot.slane %v1129, %v1189
  %v1191 = vlaneseq
  %v1192 = vshrl.u32 %v1191, 7
  %v1193 = vsub.s32 1, %v1192
  %v1194 = vrot.slane %v1129, %v1193
  %v1195 = vlaneseq
  %v1196 = vshrl.u32 %v1195, 7
  %v1197 = vsub.s32 2, %v1196
  %v1198 = vrot.slane %v1129, %v1197
  %v1199 = vlaneseq
  %v1200 = vshrl.u32 %v1199, 7
  %v1201 = vsub.s32 3, %v1200
  %v1202 = vrot.slane %v1129, %v1201
  %v1223 = vunpack.c.l.b16 %v1169
  %v1224 = vunpack.c.h.b16 %v1169
  %v1225 = vunpack.c.l.b16 %v1170
  %v1226 = vunpack.c.h.b16 %v1170
  %v1227 = vunpack.c.l.b16 %v1171
  %v1228 = vunpack.c.h.b16 %v1171
  %v1229 = vunpack.c.l.b16 %v1172
  %v1230 = vunpack.c.h.b16 %v1172
  %v1231 = vunpack.c.l.b16 %v1173
  %v1232 = vunpack.c.h.b16 %v1173
  %v1233 = vunpack.c.l.b16 %v1174
  %v1234 = vunpack.c.h.b16 %v1174
  %v1235 = vunpack.c.l.b16 %v1175
  %v1236 = vunpack.c.h.b16 %v1175
  %v1237 = vunpack.c.l.b16 %v1176
  %v1238 = vunpack.c.h.b16 %v1176
  %v1239 = vunpack.c.l.b16 %v1177
  %v1240 = vunpack.c.h.b16 %v1177
  %v1241 = vunpack.c.l.b16 %v1178
  %v1242 = vunpack.c.h.b16 %v1178
  %v1243 = vunpack.c.l.b16 %v1179
  %v1244 = vunpack.c.h.b16 %v1179
  %v1245 = vunpack.c.l.b16 %v1180
  %v1246 = vunpack.c.h.b16 %v1180
  %v1247 = vunpack.c.l.b16 %v1181
  %v1248 = vunpack.c.h.b16 %v1181
  %v1249 = vunpack.c.l.b16 %v1182
  %v1250 = vunpack.c.h.b16 %v1182
  %v1251 = vunpack.c.l.b16 %v1183
  %v1252 = vunpack.c.h.b16 %v1183
  %v1253 = vunpack.c.l.b16 %v1184
  %v1254 = vunpack.c.h.b16 %v1184
  %v1255 = vpack.c.b16 %v1227, %v1223
  %v1256 = vpack.c.b16 %v1228, %v1224
  %v1257 = vpack.c.b16 %v1229, %v1225
  %v1258 = vpack.c.b16 %v1230, %v1226
  %v1259 = vpack.c.b16 %v1235, %v1231
  %v1260 = vpack.c.b16 %v1236, %v1232
  %v1261 = vpack.c.b16 %v1237, %v1233
  %v1262 = vpack.c.b16 %v1238, %v1234
  %v1263 = vpack.c.b16 %v1243, %v1239
  %v1264 = vpack.c.b16 %v1244, %v1240
  %v1265 = vpack.c.b16 %v1245, %v1241
  %v1266 = vpack.c.b16 %v1246, %v1242
  %v1267 = vpack.c.b16 %v1251, %v1247
  %v1268 = vpack.c.b16 %v1252, %v1248
  %v1269 = vpack.c.b16 %v1253, %v1249
  %v1270 = vpack.c.b16 %v1254, %v1250
  %v1288 = vsel %vm96, %v1185, 0
  %1290 = vmatprep.subr.bf16.mxu0 0
  %1291 = vmatpush1.bf16.msra.mxu0 0
  %1292 = vmatprep.subr.bf16.mxu0 0
  %1293 = vmatpush1.bf16.msra.mxu0 0
  %1294 = vmatprep.subr.bf16.mxu0 0
  %1295 = vmatpush1.bf16.msra.mxu0 0
  %1296 = vmatprep.subr.bf16.mxu0 0
  %1297 = vmatpush1.bf16.msra.mxu0 0
  %1298 = vmatprep.subr.bf16.mxu0 %v1268
  %1299 = vmatpush1.bf16.msra.mxu0 %v1267
  %1300 = vmatprep.subr.bf16.mxu0 %v1264
  %1301 = vmatpush1.bf16.msra.mxu0 %v1263
  %1302 = vmatprep.subr.bf16.mxu0 %v1260
  %1303 = vmatpush1.bf16.msra.mxu0 %v1259
  %1304 = vmatprep.subr.bf16.mxu0 %v1256
  %1305 = vmatpush1.bf16.msra.mxu0 %v1255
  %1306 = vmatprep.subr.bf16.mxu0 0
  %1307 = vmatpush2.bf16.msra.mxu0 0
  %1308 = vmatprep.subr.bf16.mxu0 0
  %1309 = vmatpush2.bf16.msra.mxu0 0
  %1310 = vmatprep.subr.bf16.mxu0 0
  %1311 = vmatpush2.bf16.msra.mxu0 0
  %1312 = vmatprep.subr.bf16.mxu0 0
  %1313 = vmatpush2.bf16.msra.mxu0 0
  %1314 = vmatprep.subr.bf16.mxu0 0
  %1315 = vmatpush2.bf16.msra.mxu0 0
  %1316 = vmatprep.subr.bf16.mxu0 0
  %1317 = vmatpush2.bf16.msra.mxu0 0
  %1318 = vmatprep.subr.bf16.mxu0 0
  %1319 = vmatpush2.bf16.msra.mxu0 0
  %1320 = vmatprep.subr.bf16.mxu0 0
  %1321 = vmatpush2.bf16.msra.mxu0 0
  %1322 = vmatprep.mubr.bf16.mxu0 0
  %1323 = vmatmul.mubr.bf16.gmra.mxu0 %v1288
  %v1324 = vpop.f32.mrf.mxu0
  %v1325 = vadd.f32 %v1190, %v1324
  %v1326 = vpop.f32.mrf.mxu0
  %v1327 = vadd.f32 %v1194, %v1326
  %v1328 = vpop.f32.mrf.mxu0
  %v1329 = vadd.f32 %v1190, %v1328
  %v1330 = vpop.f32.mrf.mxu0
  %v1331 = vadd.f32 %v1194, %v1330
  %1332 = vdwg.mxu0
  %1333 = vmatprep.subr.bf16.mxu0 0
  %1334 = vmatpush1.bf16.msra.mxu0 0
  %1335 = vmatprep.subr.bf16.mxu0 0
  %1336 = vmatpush1.bf16.msra.mxu0 0
  %1337 = vmatprep.subr.bf16.mxu0 0
  %1338 = vmatpush1.bf16.msra.mxu0 0
  %1339 = vmatprep.subr.bf16.mxu0 0
  %1340 = vmatpush1.bf16.msra.mxu0 0
  %1341 = vmatprep.subr.bf16.mxu0 %v1270
  %1342 = vmatpush1.bf16.msra.mxu0 %v1269
  %1343 = vmatprep.subr.bf16.mxu0 %v1266
  %1344 = vmatpush1.bf16.msra.mxu0 %v1265
  %1345 = vmatprep.subr.bf16.mxu0 %v1262
  %1346 = vmatpush1.bf16.msra.mxu0 %v1261
  %1347 = vmatprep.subr.bf16.mxu0 %v1258
  %1348 = vmatpush1.bf16.msra.mxu0 %v1257
  %1349 = vmatprep.subr.bf16.mxu0 0
  %1350 = vmatpush2.bf16.msra.mxu0 0
  %1351 = vmatprep.subr.bf16.mxu0 0
  %1352 = vmatpush2.bf16.msra.mxu0 0
  %1353 = vmatprep.subr.bf16.mxu0 0
  %1354 = vmatpush2.bf16.msra.mxu0 0
  %1355 = vmatprep.subr.bf16.mxu0 0
  %1356 = vmatpush2.bf16.msra.mxu0 0
  %1357 = vmatprep.subr.bf16.mxu0 0
  %1358 = vmatpush2.bf16.msra.mxu0 0
  %1359 = vmatprep.subr.bf16.mxu0 0
  %1360 = vmatpush2.bf16.msra.mxu0 0
  %1361 = vmatprep.subr.bf16.mxu0 0
  %1362 = vmatpush2.bf16.msra.mxu0 0
  %1363 = vmatprep.subr.bf16.mxu0 0
  %1364 = vmatpush2.bf16.msra.mxu0 0
  %1365 = vmatprep.mubr.bf16.mxu0 0
  %1366 = vmatmul.mubr.bf16.gmra.mxu0 %v1288
  %v1367 = vpop.f32.mrf.mxu0
  %v1368 = vadd.f32 %v1198, %v1367
  %v1369 = vpop.f32.mrf.mxu0
  %v1370 = vadd.f32 %v1202, %v1369
  %v1371 = vpop.f32.mrf.mxu0
  %v1372 = vadd.f32 %v1198, %v1371
  %v1373 = vpop.f32.mrf.mxu0
  %v1374 = vadd.f32 %v1202, %v1373
  %1375 = vdwg.mxu0
  %1377 = vrot.lane.b32.xlu0 %v1368, 64
  %v1378 = vpop.permute.xlu0 %1377
  %v1380 = vmul.f32 %v1368, %v1378
  %1382 = vrot.lane.b32.xlu0 %v1372, 64
  %v1383 = vpop.permute.xlu0 %1382
  %v1385 = vmul.f32 %v1368, %v1383
  %v1386 = vmul.f32 %v1372, %v1378
  %v1387 = vmul.f32 %v1372, %v1383
  %v1388 = vpack.c.bf16 %v1385, %v1380
  %v1389 = vpack.c.bf16 %v1387, %v1386
  %v1391 = vsel %vm96, %v1388, 0
  %v1394 = vsel %vm96, %v1389, 0
  %1396 = vmatprep.subr.bf16.mxu0 0
  %1397 = vmatpush1.bf16.msra.mxu0 0
  %1398 = vmatprep.subr.bf16.mxu0 0
  %1399 = vmatpush1.bf16.msra.mxu0 0
  %1400 = vmatprep.subr.bf16.mxu0 0
  %1401 = vmatpush1.bf16.msra.mxu0 0
  %1402 = vmatprep.subr.bf16.mxu0 0
  %1403 = vmatpush1.bf16.msra.mxu0 0
  %1404 = vmatprep.subr.bf16.mxu0 0
  %1405 = vmatpush1.bf16.msra.mxu0 %v422
  %1406 = vmatprep.subr.bf16.mxu0 0
  %1407 = vmatpush1.bf16.msra.mxu0 %v421
  %1408 = vmatprep.subr.bf16.mxu0 0
  %1409 = vmatpush1.bf16.msra.mxu0 %v420
  %1410 = vmatprep.subr.bf16.mxu0 0
  %1411 = vmatpush1.bf16.msra.mxu0 %v419
  %1412 = vmatprep.subr.bf16.mxu0 0
  %1413 = vmatpush2.bf16.msra.mxu0 0
  %1414 = vmatprep.subr.bf16.mxu0 0
  %1415 = vmatpush2.bf16.msra.mxu0 0
  %1416 = vmatprep.subr.bf16.mxu0 0
  %1417 = vmatpush2.bf16.msra.mxu0 0
  %1418 = vmatprep.subr.bf16.mxu0 0
  %1419 = vmatpush2.bf16.msra.mxu0 0
  %1420 = vmatprep.subr.bf16.mxu0 0
  %1421 = vmatpush2.bf16.msra.mxu0 0
  %1422 = vmatprep.subr.bf16.mxu0 0
  %1423 = vmatpush2.bf16.msra.mxu0 0
  %1424 = vmatprep.subr.bf16.mxu0 0
  %1425 = vmatpush2.bf16.msra.mxu0 0
  %1426 = vmatprep.subr.bf16.mxu0 0
  %1427 = vmatpush2.bf16.msra.mxu0 0
  %1428 = vmatprep.mubr.bf16.mxu0 0
  %1429 = vmatmul.mubr.bf16.gmra.mxu0 %v1391
  %v1430 = vpop.f32.mrf.mxu0
  %v1431 = vadd.f32 0.0, %v1430
  %v1432 = vpop.f32.mrf.mxu0
  %v1433 = vpop.f32.mrf.mxu0
  %v1434 = vadd.f32 0.0, %v1433
  %v1435 = vpop.f32.mrf.mxu0
  %1436 = vmatprep.mubr.bf16.mxu0 0
  %1437 = vmatmul.mubr.bf16.gmra.mxu0 %v1394
  %v1438 = vpop.f32.mrf.mxu0
  %v1439 = vadd.f32 0.0, %v1438
  %v1440 = vpop.f32.mrf.mxu0
  %v1441 = vpop.f32.mrf.mxu0
  %v1442 = vadd.f32 0.0, %v1441
  %v1443 = vpop.f32.mrf.mxu0
  %1444 = vdwg.mxu0
  %v1445 = vmax.f32 %v1431, %v1434
  %v1446 = vsub.f32 %v1431, %v1445
  %v1447 = vmul.f32 %v1446, 1.442695
  %v1448 = vpow.pop %v1447
  %v1449 = vsub.f32 %v1434, %v1445
  %v1450 = vmul.f32 %v1449, 1.442695
  %v1451 = vpow.pop %v1450
  %v1452 = vmul.f32 %v1448, %v1370
  %v1453 = vadd.f32 %v1448, %v1451
  %v1454 = vmul.f32 %v1451, %v1374
  %v1455 = vadd.f32 %v1452, %v1454
  %v1456 = vrcp.pop %v1453
  %v1457 = vmul.f32 %v1455, %v1456
  %v1458 = vmax.f32 %v1439, %v1442
  %v1459 = vsub.f32 %v1439, %v1458
  %v1460 = vmul.f32 %v1459, 1.442695
  %v1461 = vpow.pop %v1460
  %v1462 = vsub.f32 %v1442, %v1458
  %v1463 = vmul.f32 %v1462, 1.442695
  %v1464 = vpow.pop %v1463
  %v1465 = vmul.f32 %v1461, %v1370
  %v1466 = vadd.f32 %v1461, %v1464
  %v1467 = vmul.f32 %v1464, %v1374
  %v1468 = vadd.f32 %v1465, %v1467
  %v1469 = vrcp.pop %v1466
  %v1470 = vmul.f32 %v1468, %v1469
  %s1471 = scalar_lea.vmem %s6, 32
  %v1472 = vld [vmem:[%s1471] sm:$0xf]
  %v1473 = vld [vmem:[%s1471 + $0x4] sm:$0xf]
  %v1474 = vld [vmem:[%s1471 + $0x8] sm:$0xf]
  %v1475 = vld [vmem:[%s1471 + $0xc] sm:$0xf]
  %v1476 = vld [vmem:[%s1471 + $0x10] sm:$0xf]
  %v1477 = vld [vmem:[%s1471 + $0x14] sm:$0xf]
  %v1478 = vld [vmem:[%s1471 + $0x18] sm:$0xf]
  %v1479 = vld [vmem:[%s1471 + $0x1c] sm:$0xf]
  %v1480 = vpack.c.bf16 %v1470, %v1457
  %v1489 = vunpack.c.l.b16 %v1472
  %v1490 = vunpack.c.l.b16 %v1473
  %v1491 = vunpack.c.l.b16 %v1474
  %v1492 = vunpack.c.l.b16 %v1475
  %v1493 = vunpack.c.l.b16 %v1476
  %v1494 = vunpack.c.l.b16 %v1477
  %v1495 = vunpack.c.l.b16 %v1478
  %v1496 = vunpack.c.l.b16 %v1479
  %v1497 = vpack.c.b16 %v1490, %v1489
  %v1498 = vpack.c.b16 %v1492, %v1491
  %v1499 = vpack.c.b16 %v1494, %v1493
  %v1500 = vpack.c.b16 %v1496, %v1495
  %v1506 = vsel %vm96, %v1480, 0
  %1508 = vmatprep.subr.bf16.mxu0 0
  %1509 = vmatpush1.bf16.msra.mxu0 0
  %1510 = vmatprep.subr.bf16.mxu0 0
  %1511 = vmatpush1.bf16.msra.mxu0 0
  %1512 = vmatprep.subr.bf16.mxu0 0
  %1513 = vmatpush1.bf16.msra.mxu0 0
  %1514 = vmatprep.subr.bf16.mxu0 0
  %1515 = vmatpush1.bf16.msra.mxu0 0
  %1516 = vmatprep.subr.bf16.mxu0 0
  %1517 = vmatpush1.bf16.msra.mxu0 %v1500
  %1518 = vmatprep.subr.bf16.mxu0 0
  %1519 = vmatpush1.bf16.msra.mxu0 %v1499
  %1520 = vmatprep.subr.bf16.mxu0 0
  %1521 = vmatpush1.bf16.msra.mxu0 %v1498
  %1522 = vmatprep.subr.bf16.mxu0 0
  %1523 = vmatpush1.bf16.msra.mxu0 %v1497
  %1524 = vmatprep.subr.bf16.mxu0 0
  %1525 = vmatpush2.bf16.msra.mxu0 0
  %1526 = vmatprep.subr.bf16.mxu0 0
  %1527 = vmatpush2.bf16.msra.mxu0 0
  %1528 = vmatprep.subr.bf16.mxu0 0
  %1529 = vmatpush2.bf16.msra.mxu0 0
  %1530 = vmatprep.subr.bf16.mxu0 0
  %1531 = vmatpush2.bf16.msra.mxu0 0
  %1532 = vmatprep.subr.bf16.mxu0 0
  %1533 = vmatpush2.bf16.msra.mxu0 0
  %1534 = vmatprep.subr.bf16.mxu0 0
  %1535 = vmatpush2.bf16.msra.mxu0 0
  %1536 = vmatprep.subr.bf16.mxu0 0
  %1537 = vmatpush2.bf16.msra.mxu0 0
  %1538 = vmatprep.subr.bf16.mxu0 0
  %1539 = vmatpush2.bf16.msra.mxu0 0
  %1540 = vmatprep.mubr.bf16.mxu0 0
  %1541 = vmatmul.mubr.bf16.gmra.mxu0 %v1506
  %v1542 = vpop.f32.mrf.mxu0
  %v1543 = vadd.f32 0.0, %v1542
  %v1544 = vpop.f32.mrf.mxu0
  %v1545 = vpop.f32.mrf.mxu0
  %v1546 = vadd.f32 0.0, %v1545
  %v1547 = vpop.f32.mrf.mxu0
  %1548 = vdwg.mxu0
  %v1549 = vadd.f32 %v1124, %v1543
  %v1550 = vadd.f32 %v1125, %v1546
  %v1551 = vlaneseq
  %v1552 = vshrl.u32 %v1551, 7
  %v1553 = vsub.s32 2, %v1552
  %v1554 = vrot.slane %v1127, %v1553
  %v1555 = vadd.f32 %v1549, %v1554
  %v1556 = vadd.f32 %v1550, %v1554
  %v1557 = vmul.f32 %v1325, 0.5
  %v1558 = vmul.f32 %v1327, 0.5
  %v1559 = vmul.f32 %v1329, 0.5
  %v1560 = vmul.f32 %v1331, 0.5
  %v1561 = vmul.f32 %v1325, 0.70710677
  %v1562 = vmul.f32 %v1327, 0.70710677
  %v1563 = vmul.f32 %v1329, 0.70710677
  %v1564 = vmul.f32 %v1331, 0.70710677
  %v1565 = vand.u32 2147483647, %v1561
  %v1566 = vand.u32 2147483647, %v1562
  %v1567 = vand.u32 2147483647, %v1563
  %v1568 = vand.u32 2147483647, %v1564
  %v1569 = vmul.f32 %v1565, 0.3275911
  %v1570 = vmul.f32 %v1566, 0.3275911
  %v1571 = vmul.f32 %v1567, 0.3275911
  %v1572 = vmul.f32 %v1568, 0.3275911
  %v1573 = vadd.f32 %v1569, 1.0
  %v1574 = vadd.f32 %v1570, 1.0
  %v1575 = vadd.f32 %v1571, 1.0
  %v1576 = vadd.f32 %v1572, 1.0
  %v1577 = vrcp.pop %v1573
  %v1578 = vmul.f32 1.0, %v1577
  %v1579 = vrcp.pop %v1574
  %v1580 = vmul.f32 1.0, %v1579
  %v1581 = vrcp.pop %v1575
  %v1582 = vmul.f32 1.0, %v1581
  %v1583 = vrcp.pop %v1576
  %v1584 = vmul.f32 1.0, %v1583
  %v1585 = vmul.f32 %v1578, 1.0614054
  %v1586 = vmul.f32 %v1580, 1.0614054
  %v1587 = vmul.f32 %v1582, 1.0614054
  %v1588 = vmul.f32 %v1584, 1.0614054
  %v1589 = vadd.f32 %v1585, -1.4531521
  %v1590 = vadd.f32 %v1586, -1.4531521
  %v1591 = vadd.f32 %v1587, -1.4531521
  %v1592 = vadd.f32 %v1588, -1.4531521
  %v1593 = vmul.f32 %v1578, %v1589
  %v1594 = vmul.f32 %v1580, %v1590
  %v1595 = vmul.f32 %v1582, %v1591
  %v1596 = vmul.f32 %v1584, %v1592
  %v1597 = vadd.f32 %v1593, 1.4214138
  %v1598 = vadd.f32 %v1594, 1.4214138
  %v1599 = vadd.f32 %v1595, 1.4214138
  %v1600 = vadd.f32 %v1596, 1.4214138
  %v1601 = vmul.f32 %v1578, %v1597
  %v1602 = vmul.f32 %v1580, %v1598
  %v1603 = vmul.f32 %v1582, %v1599
  %v1604 = vmul.f32 %v1584, %v1600
  %v1605 = vadd.f32 %v1601, -0.28449672
  %v1606 = vadd.f32 %v1602, -0.28449672
  %v1607 = vadd.f32 %v1603, -0.28449672
  %v1608 = vadd.f32 %v1604, -0.28449672
  %v1609 = vmul.f32 %v1578, %v1605
  %v1610 = vmul.f32 %v1580, %v1606
  %v1611 = vmul.f32 %v1582, %v1607
  %v1612 = vmul.f32 %v1584, %v1608
  %v1613 = vadd.f32 %v1609, 0.2548296
  %v1614 = vadd.f32 %v1610, 0.2548296
  %v1615 = vadd.f32 %v1611, 0.2548296
  %v1616 = vadd.f32 %v1612, 0.2548296
  %v1617 = vmul.f32 %v1578, %v1613
  %v1618 = vmul.f32 %v1580, %v1614
  %v1619 = vmul.f32 %v1582, %v1615
  %v1620 = vmul.f32 %v1584, %v1616
  %v1621 = vsub.f32 0.0, %v1565
  %v1622 = vsub.f32 0.0, %v1566
  %v1623 = vsub.f32 0.0, %v1567
  %v1624 = vsub.f32 0.0, %v1568
  %v1625 = vmul.f32 %v1621, %v1565
  %v1626 = vmul.f32 %v1622, %v1566
  %v1627 = vmul.f32 %v1623, %v1567
  %v1628 = vmul.f32 %v1624, %v1568
  %v1629 = vmul.f32 %v1625, 1.442695
  %v1630 = vpow.pop %v1629
  %v1631 = vmul.f32 %v1626, 1.442695
  %v1632 = vpow.pop %v1631
  %v1633 = vmul.f32 %v1627, 1.442695
  %v1634 = vpow.pop %v1633
  %v1635 = vmul.f32 %v1628, 1.442695
  %v1636 = vpow.pop %v1635
  %v1637 = vmul.f32 %v1617, %v1630
  %v1638 = vmul.f32 %v1618, %v1632
  %v1639 = vmul.f32 %v1619, %v1634
  %v1640 = vmul.f32 %v1620, %v1636
  %v1641 = vsub.f32 1.0, %v1637
  %v1642 = vsub.f32 1.0, %v1638
  %v1643 = vsub.f32 1.0, %v1639
  %v1644 = vsub.f32 1.0, %v1640
  %vm1645 = vcmp.ge.f32.partialorder %v1561, 0.0
  %vm1646 = vcmp.ge.f32.partialorder %v1562, 0.0
  %vm1647 = vcmp.ge.f32.partialorder %v1563, 0.0
  %vm1648 = vcmp.ge.f32.partialorder %v1564, 0.0
  %v1649 = vsub.f32 0.0, %v1641
  %v1650 = vsub.f32 0.0, %v1642
  %v1651 = vsub.f32 0.0, %v1643
  %v1652 = vsub.f32 0.0, %v1644
  %v1653 = vsel %vm1645, %v1641, %v1649
  %v1654 = vsel %vm1646, %v1642, %v1650
  %v1655 = vsel %vm1647, %v1643, %v1651
  %v1656 = vsel %vm1648, %v1644, %v1652
  %v1657 = vadd.f32 %v1653, 1.0
  %v1658 = vadd.f32 %v1654, 1.0
  %v1659 = vadd.f32 %v1655, 1.0
  %v1660 = vadd.f32 %v1656, 1.0
  %v1661 = vmul.f32 %v1557, %v1657
  %v1662 = vmul.f32 %v1558, %v1658
  %v1663 = vmul.f32 %v1559, %v1659
  %v1664 = vmul.f32 %v1560, %v1660
  %s1665 = scalar_lea.vmem %s8, 128
  %v1666 = vld [vmem:[%s1665] sm:$0xf]
  %v1667 = vld [vmem:[%s1665 + $0x4] sm:$0xf]
  %v1668 = vld [vmem:[%s1665 + $0x8] sm:$0xf]
  %v1669 = vld [vmem:[%s1665 + $0xc] sm:$0xf]
  %v1670 = vld [vmem:[%s1665 + $0x10] sm:$0xf]
  %v1671 = vld [vmem:[%s1665 + $0x14] sm:$0xf]
  %v1672 = vld [vmem:[%s1665 + $0x18] sm:$0xf]
  %v1673 = vld [vmem:[%s1665 + $0x1c] sm:$0xf]
  %v1674 = vld [vmem:[%s1665 + $0x20] sm:$0xf]
  %v1675 = vld [vmem:[%s1665 + $0x24] sm:$0xf]
  %v1676 = vld [vmem:[%s1665 + $0x28] sm:$0xf]
  %v1677 = vld [vmem:[%s1665 + $0x2c] sm:$0xf]
  %v1678 = vld [vmem:[%s1665 + $0x30] sm:$0xf]
  %v1679 = vld [vmem:[%s1665 + $0x34] sm:$0xf]
  %v1680 = vld [vmem:[%s1665 + $0x38] sm:$0xf]
  %v1681 = vld [vmem:[%s1665 + $0x3c] sm:$0xf]
  %v1682 = vld [vmem:[%s1665 + $0x40] sm:$0xf]
  %v1683 = vld [vmem:[%s1665 + $0x44] sm:$0xf]
  %v1684 = vld [vmem:[%s1665 + $0x48] sm:$0xf]
  %v1685 = vld [vmem:[%s1665 + $0x4c] sm:$0xf]
  %v1686 = vld [vmem:[%s1665 + $0x50] sm:$0xf]
  %v1687 = vld [vmem:[%s1665 + $0x54] sm:$0xf]
  %v1688 = vld [vmem:[%s1665 + $0x58] sm:$0xf]
  %v1689 = vld [vmem:[%s1665 + $0x5c] sm:$0xf]
  %v1690 = vld [vmem:[%s1665 + $0x60] sm:$0xf]
  %v1691 = vld [vmem:[%s1665 + $0x64] sm:$0xf]
  %v1692 = vld [vmem:[%s1665 + $0x68] sm:$0xf]
  %v1693 = vld [vmem:[%s1665 + $0x6c] sm:$0xf]
  %v1694 = vld [vmem:[%s1665 + $0x70] sm:$0xf]
  %v1695 = vld [vmem:[%s1665 + $0x74] sm:$0xf]
  %v1696 = vld [vmem:[%s1665 + $0x78] sm:$0xf]
  %v1697 = vld [vmem:[%s1665 + $0x7c] sm:$0xf]
  %v1698 = vpack.c.bf16 %v1663, %v1661
  %v1699 = vpack.c.bf16 %v1664, %v1662
  %v1700 = vlaneseq
  %v1701 = vshrl.u32 %v1700, 7
  %v1702 = vsub.s32 3, %v1701
  %v1703 = vrot.slane %v1127, %v1702
  %v1736 = vunpack.c.l.b16 %v1666
  %v1737 = vunpack.c.l.b16 %v1667
  %v1738 = vunpack.c.l.b16 %v1668
  %v1739 = vunpack.c.l.b16 %v1669
  %v1740 = vunpack.c.l.b16 %v1670
  %v1741 = vunpack.c.l.b16 %v1671
  %v1742 = vunpack.c.l.b16 %v1672
  %v1743 = vunpack.c.l.b16 %v1673
  %v1744 = vunpack.c.l.b16 %v1674
  %v1745 = vunpack.c.l.b16 %v1675
  %v1746 = vunpack.c.l.b16 %v1676
  %v1747 = vunpack.c.l.b16 %v1677
  %v1748 = vunpack.c.l.b16 %v1678
  %v1749 = vunpack.c.l.b16 %v1679
  %v1750 = vunpack.c.l.b16 %v1680
  %v1751 = vunpack.c.l.b16 %v1681
  %v1752 = vunpack.c.l.b16 %v1682
  %v1753 = vunpack.c.l.b16 %v1683
  %v1754 = vunpack.c.l.b16 %v1684
  %v1755 = vunpack.c.l.b16 %v1685
  %v1756 = vunpack.c.l.b16 %v1686
  %v1757 = vunpack.c.l.b16 %v1687
  %v1758 = vunpack.c.l.b16 %v1688
  %v1759 = vunpack.c.l.b16 %v1689
  %v1760 = vunpack.c.l.b16 %v1690
  %v1761 = vunpack.c.l.b16 %v1691
  %v1762 = vunpack.c.l.b16 %v1692
  %v1763 = vunpack.c.l.b16 %v1693
  %v1764 = vunpack.c.l.b16 %v1694
  %v1765 = vunpack.c.l.b16 %v1695
  %v1766 = vunpack.c.l.b16 %v1696
  %v1767 = vunpack.c.l.b16 %v1697
  %v1768 = vpack.c.b16 %v1737, %v1736
  %v1769 = vpack.c.b16 %v1739, %v1738
  %v1770 = vpack.c.b16 %v1741, %v1740
  %v1771 = vpack.c.b16 %v1743, %v1742
  %v1772 = vpack.c.b16 %v1745, %v1744
  %v1773 = vpack.c.b16 %v1747, %v1746
  %v1774 = vpack.c.b16 %v1749, %v1748
  %v1775 = vpack.c.b16 %v1751, %v1750
  %v1776 = vpack.c.b16 %v1753, %v1752
  %v1777 = vpack.c.b16 %v1755, %v1754
  %v1778 = vpack.c.b16 %v1757, %v1756
  %v1779 = vpack.c.b16 %v1759, %v1758
  %v1780 = vpack.c.b16 %v1761, %v1760
  %v1781 = vpack.c.b16 %v1763, %v1762
  %v1782 = vpack.c.b16 %v1765, %v1764
  %v1783 = vpack.c.b16 %v1767, %v1766
  %1800 = vmatprep.subr.bf16.mxu0 0
  %1801 = vmatpush1.bf16.msra.mxu0 %v1775
  %1802 = vmatprep.subr.bf16.mxu0 0
  %1803 = vmatpush1.bf16.msra.mxu0 %v1774
  %1804 = vmatprep.subr.bf16.mxu0 0
  %1805 = vmatpush1.bf16.msra.mxu0 %v1773
  %1806 = vmatprep.subr.bf16.mxu0 0
  %1807 = vmatpush1.bf16.msra.mxu0 %v1772
  %1808 = vmatprep.subr.bf16.mxu0 0
  %1809 = vmatpush1.bf16.msra.mxu0 %v1771
  %1810 = vmatprep.subr.bf16.mxu0 0
  %1811 = vmatpush1.bf16.msra.mxu0 %v1770
  %1812 = vmatprep.subr.bf16.mxu0 0
  %1813 = vmatpush1.bf16.msra.mxu0 %v1769
  %1814 = vmatprep.subr.bf16.mxu0 0
  %1815 = vmatpush1.bf16.msra.mxu0 %v1768
  %1816 = vmatprep.subr.bf16.mxu0 0
  %1817 = vmatpush2.bf16.msra.mxu0 %v1783
  %1818 = vmatprep.subr.bf16.mxu0 0
  %1819 = vmatpush2.bf16.msra.mxu0 %v1782
  %1820 = vmatprep.subr.bf16.mxu0 0
  %1821 = vmatpush2.bf16.msra.mxu0 %v1781
  %1822 = vmatprep.subr.bf16.mxu0 0
  %1823 = vmatpush2.bf16.msra.mxu0 %v1780
  %1824 = vmatprep.subr.bf16.mxu0 0
  %1825 = vmatpush2.bf16.msra.mxu0 %v1779
  %1826 = vmatprep.subr.bf16.mxu0 0
  %1827 = vmatpush2.bf16.msra.mxu0 %v1778
  %1828 = vmatprep.subr.bf16.mxu0 0
  %1829 = vmatpush2.bf16.msra.mxu0 %v1777
  %1830 = vmatprep.subr.bf16.mxu0 0
  %1831 = vmatpush2.bf16.msra.mxu0 %v1776
  %1832 = vmatprep.mubr.bf16.mxu0 %v1699
  %1833 = vmatmul.mubr.bf16.gmra.mxu0 %v1698
  %v1834 = vpop.f32.mrf.mxu0
  %v1835 = vadd.f32 %v1703, %v1834
  %v1836 = vpop.f32.mrf.mxu0
  %v1837 = vpop.f32.mrf.mxu0
  %v1838 = vadd.f32 %v1703, %v1837
  %v1839 = vpop.f32.mrf.mxu0
  %1840 = vdwg.mxu0
  %v1841 = vadd.f32 %v1555, %v1835
  %v1842 = vadd.f32 %v1556, %v1838
  %s1843 = scalar_lea.vmem %s7, 64
  %v1844 = vld [vmem:[%s1843] sm:$0xff]
  %v1845 = vld [vmem:[%s1843 + $0x8] sm:$0xff]
  %v1846 = vld [vmem:[%s1843 + $0x10] sm:$0xff]
  %v1847 = vld [vmem:[%s1843 + $0x18] sm:$0xff]
  %v1848 = vld [vmem:[%s1843 + $0x20] sm:$0xff]
  %v1849 = vld [vmem:[%s1843 + $0x28] sm:$0xff]
  %v1850 = vld [vmem:[%s1843 + $0x30] sm:$0xff]
  %v1851 = vld [vmem:[%s1843 + $0x38] sm:$0xff]
  %v1852 = vpack.c.bf16 %v1842, %v1841
  %v1861 = vunpack.c.l.b16 %v1844
  %v1862 = vunpack.c.h.b16 %v1844
  %v1863 = vunpack.c.l.b16 %v1845
  %v1864 = vunpack.c.h.b16 %v1845
  %v1865 = vunpack.c.l.b16 %v1846
  %v1866 = vunpack.c.h.b16 %v1846
  %v1867 = vunpack.c.l.b16 %v1847
  %v1868 = vunpack.c.h.b16 %v1847
  %v1869 = vunpack.c.l.b16 %v1848
  %v1870 = vunpack.c.h.b16 %v1848
  %v1871 = vunpack.c.l.b16 %v1849
  %v1872 = vunpack.c.h.b16 %v1849
  %v1873 = vunpack.c.l.b16 %v1850
  %v1874 = vunpack.c.h.b16 %v1850
  %v1875 = vunpack.c.l.b16 %v1851
  %v1876 = vunpack.c.h.b16 %v1851
  %v1877 = vpack.c.b16 %v1863, %v1861
  %v1878 = vpack.c.b16 %v1864, %v1862
  %v1879 = vpack.c.b16 %v1867, %v1865
  %v1880 = vpack.c.b16 %v1868, %v1866
  %v1881 = vpack.c.b16 %v1871, %v1869
  %v1882 = vpack.c.b16 %v1872, %v1870
  %v1883 = vpack.c.b16 %v1875, %v1873
  %v1884 = vpack.c.b16 %v1876, %v1874
  %v1894 = vsel %vm96, %v1852, 0
  %1896 = vmatprep.subr.bf16.mxu0 0
  %1897 = vmatpush1.bf16.msra.mxu0 0
  %1898 = vmatprep.subr.bf16.mxu0 0
  %1899 = vmatpush1.bf16.msra.mxu0 0
  %1900 = vmatprep.subr.bf16.mxu0 0
  %1901 = vmatpush1.bf16.msra.mxu0 0
  %1902 = vmatprep.subr.bf16.mxu0 0
  %1903 = vmatpush1.bf16.msra.mxu0 0
  %1904 = vmatprep.subr.bf16.mxu0 %v1884
  %1905 = vmatpush1.bf16.msra.mxu0 %v1883
  %1906 = vmatprep.subr.bf16.mxu0 %v1882
  %1907 = vmatpush1.bf16.msra.mxu0 %v1881
  %1908 = vmatprep.subr.bf16.mxu0 %v1880
  %1909 = vmatpush1.bf16.msra.mxu0 %v1879
  %1910 = vmatprep.subr.bf16.mxu0 %v1878
  %1911 = vmatpush1.bf16.msra.mxu0 %v1877
  %1912 = vmatprep.subr.bf16.mxu0 0
  %1913 = vmatpush2.bf16.msra.mxu0 0
  %1914 = vmatprep.subr.bf16.mxu0 0
  %1915 = vmatpush2.bf16.msra.mxu0 0
  %1916 = vmatprep.subr.bf16.mxu0 0
  %1917 = vmatpush2.bf16.msra.mxu0 0
  %1918 = vmatprep.subr.bf16.mxu0 0
  %1919 = vmatpush2.bf16.msra.mxu0 0
  %1920 = vmatprep.subr.bf16.mxu0 0
  %1921 = vmatpush2.bf16.msra.mxu0 0
  %1922 = vmatprep.subr.bf16.mxu0 0
  %1923 = vmatpush2.bf16.msra.mxu0 0
  %1924 = vmatprep.subr.bf16.mxu0 0
  %1925 = vmatpush2.bf16.msra.mxu0 0
  %1926 = vmatprep.subr.bf16.mxu0 0
  %1927 = vmatpush2.bf16.msra.mxu0 0
  %1928 = vmatprep.mubr.bf16.mxu0 0
  %1929 = vmatmul.mubr.bf16.gmra.mxu0 %v1894
  %v1930 = vpop.f32.mrf.mxu0
  %v1931 = vadd.f32 %v1190, %v1930
  %v1932 = vpop.f32.mrf.mxu0
  %v1933 = vadd.f32 %v1194, %v1932
  %v1934 = vpop.f32.mrf.mxu0
  %v1935 = vadd.f32 %v1190, %v1934
  %v1936 = vpop.f32.mrf.mxu0
  %v1937 = vadd.f32 %v1194, %v1936
  %1938 = vdwg.mxu0
  %v1939 = vmul.f32 %v1931, 0.5
  %v1940 = vmul.f32 %v1933, 0.5
  %v1941 = vmul.f32 %v1935, 0.5
  %v1942 = vmul.f32 %v1937, 0.5
  %v1943 = vmul.f32 %v1931, 0.70710677
  %v1944 = vmul.f32 %v1933, 0.70710677
  %v1945 = vmul.f32 %v1935, 0.70710677
  %v1946 = vmul.f32 %v1937, 0.70710677
  %v1947 = vand.u32 2147483647, %v1943
  %v1948 = vand.u32 2147483647, %v1944
  %v1949 = vand.u32 2147483647, %v1945
  %v1950 = vand.u32 2147483647, %v1946
  %v1951 = vmul.f32 %v1947, 0.3275911
  %v1952 = vmul.f32 %v1948, 0.3275911
  %v1953 = vmul.f32 %v1949, 0.3275911
  %v1954 = vmul.f32 %v1950, 0.3275911
  %v1955 = vadd.f32 %v1951, 1.0
  %v1956 = vadd.f32 %v1952, 1.0
  %v1957 = vadd.f32 %v1953, 1.0
  %v1958 = vadd.f32 %v1954, 1.0
  %v1959 = vrcp.pop %v1955
  %v1960 = vmul.f32 1.0, %v1959
  %v1961 = vrcp.pop %v1956
  %v1962 = vmul.f32 1.0, %v1961
  %v1963 = vrcp.pop %v1957
  %v1964 = vmul.f32 1.0, %v1963
  %v1965 = vrcp.pop %v1958
  %v1966 = vmul.f32 1.0, %v1965
  %v1967 = vmul.f32 %v1960, 1.0614054
  %v1968 = vmul.f32 %v1962, 1.0614054
  %v1969 = vmul.f32 %v1964, 1.0614054
  %v1970 = vmul.f32 %v1966, 1.0614054
  %v1971 = vadd.f32 %v1967, -1.4531521
  %v1972 = vadd.f32 %v1968, -1.4531521
  %v1973 = vadd.f32 %v1969, -1.4531521
  %v1974 = vadd.f32 %v1970, -1.4531521
  %v1975 = vmul.f32 %v1960, %v1971
  %v1976 = vmul.f32 %v1962, %v1972
  %v1977 = vmul.f32 %v1964, %v1973
  %v1978 = vmul.f32 %v1966, %v1974
  %v1979 = vadd.f32 %v1975, 1.4214138
  %v1980 = vadd.f32 %v1976, 1.4214138
  %v1981 = vadd.f32 %v1977, 1.4214138
  %v1982 = vadd.f32 %v1978, 1.4214138
  %v1983 = vmul.f32 %v1960, %v1979
  %v1984 = vmul.f32 %v1962, %v1980
  %v1985 = vmul.f32 %v1964, %v1981
  %v1986 = vmul.f32 %v1966, %v1982
  %v1987 = vadd.f32 %v1983, -0.28449672
  %v1988 = vadd.f32 %v1984, -0.28449672
  %v1989 = vadd.f32 %v1985, -0.28449672
  %v1990 = vadd.f32 %v1986, -0.28449672
  %v1991 = vmul.f32 %v1960, %v1987
  %v1992 = vmul.f32 %v1962, %v1988
  %v1993 = vmul.f32 %v1964, %v1989
  %v1994 = vmul.f32 %v1966, %v1990
  %v1995 = vadd.f32 %v1991, 0.2548296
  %v1996 = vadd.f32 %v1992, 0.2548296
  %v1997 = vadd.f32 %v1993, 0.2548296
  %v1998 = vadd.f32 %v1994, 0.2548296
  %v1999 = vmul.f32 %v1960, %v1995
  %v2000 = vmul.f32 %v1962, %v1996
  %v2001 = vmul.f32 %v1964, %v1997
  %v2002 = vmul.f32 %v1966, %v1998
  %v2003 = vsub.f32 0.0, %v1947
  %v2004 = vsub.f32 0.0, %v1948
  %v2005 = vsub.f32 0.0, %v1949
  %v2006 = vsub.f32 0.0, %v1950
  %v2007 = vmul.f32 %v2003, %v1947
  %v2008 = vmul.f32 %v2004, %v1948
  %v2009 = vmul.f32 %v2005, %v1949
  %v2010 = vmul.f32 %v2006, %v1950
  %v2011 = vmul.f32 %v2007, 1.442695
  %v2012 = vpow.pop %v2011
  %v2013 = vmul.f32 %v2008, 1.442695
  %v2014 = vpow.pop %v2013
  %v2015 = vmul.f32 %v2009, 1.442695
  %v2016 = vpow.pop %v2015
  %v2017 = vmul.f32 %v2010, 1.442695
  %v2018 = vpow.pop %v2017
  %v2019 = vmul.f32 %v1999, %v2012
  %v2020 = vmul.f32 %v2000, %v2014
  %v2021 = vmul.f32 %v2001, %v2016
  %v2022 = vmul.f32 %v2002, %v2018
  %v2023 = vsub.f32 1.0, %v2019
  %v2024 = vsub.f32 1.0, %v2020
  %v2025 = vsub.f32 1.0, %v2021
  %v2026 = vsub.f32 1.0, %v2022
  %vm2027 = vcmp.ge.f32.partialorder %v1943, 0.0
  %vm2028 = vcmp.ge.f32.partialorder %v1944, 0.0
  %vm2029 = vcmp.ge.f32.partialorder %v1945, 0.0
  %vm2030 = vcmp.ge.f32.partialorder %v1946, 0.0
  %v2031 = vsub.f32 0.0, %v2023
  %v2032 = vsub.f32 0.0, %v2024
  %v2033 = vsub.f32 0.0, %v2025
  %v2034 = vsub.f32 0.0, %v2026
  %v2035 = vsel %vm2027, %v2023, %v2031
  %v2036 = vsel %vm2028, %v2024, %v2032
  %v2037 = vsel %vm2029, %v2025, %v2033
  %v2038 = vsel %vm2030, %v2026, %v2034
  %v2039 = vadd.f32 %v2035, 1.0
  %v2040 = vadd.f32 %v2036, 1.0
  %v2041 = vadd.f32 %v2037, 1.0
  %v2042 = vadd.f32 %v2038, 1.0
  %v2043 = vmul.f32 %v1939, %v2039
  %v2044 = vmul.f32 %v1940, %v2040
  %v2045 = vmul.f32 %v1941, %v2041
  %v2046 = vmul.f32 %v1942, %v2042
  %v2047 = vpack.c.bf16 %v2045, %v2043
  %v2048 = vpack.c.bf16 %v2046, %v2044
  %2049 = vmatprep.subr.bf16.mxu0 0
  %2050 = vmatpush1.bf16.msra.mxu0 %v1775
  %2051 = vmatprep.subr.bf16.mxu0 0
  %2052 = vmatpush1.bf16.msra.mxu0 %v1774
  %2053 = vmatprep.subr.bf16.mxu0 0
  %2054 = vmatpush1.bf16.msra.mxu0 %v1773
  %2055 = vmatprep.subr.bf16.mxu0 0
  %2056 = vmatpush1.bf16.msra.mxu0 %v1772
  %2057 = vmatprep.subr.bf16.mxu0 0
  %2058 = vmatpush1.bf16.msra.mxu0 %v1771
  %2059 = vmatprep.subr.bf16.mxu0 0
  %2060 = vmatpush1.bf16.msra.mxu0 %v1770
  %2061 = vmatprep.subr.bf16.mxu0 0
  %2062 = vmatpush1.bf16.msra.mxu0 %v1769
  %2063 = vmatprep.subr.bf16.mxu0 0
  %2064 = vmatpush1.bf16.msra.mxu0 %v1768
  %2065 = vmatprep.subr.bf16.mxu0 0
  %2066 = vmatpush2.bf16.msra.mxu0 %v1783
  %2067 = vmatprep.subr.bf16.mxu0 0
  %2068 = vmatpush2.bf16.msra.mxu0 %v1782
  %2069 = vmatprep.subr.bf16.mxu0 0
  %2070 = vmatpush2.bf16.msra.mxu0 %v1781
  %2071 = vmatprep.subr.bf16.mxu0 0
  %2072 = vmatpush2.bf16.msra.mxu0 %v1780
  %2073 = vmatprep.subr.bf16.mxu0 0
  %2074 = vmatpush2.bf16.msra.mxu0 %v1779
  %2075 = vmatprep.subr.bf16.mxu0 0
  %2076 = vmatpush2.bf16.msra.mxu0 %v1778
  %2077 = vmatprep.subr.bf16.mxu0 0
  %2078 = vmatpush2.bf16.msra.mxu0 %v1777
  %2079 = vmatprep.subr.bf16.mxu0 0
  %2080 = vmatpush2.bf16.msra.mxu0 %v1776
  %2081 = vmatprep.mubr.bf16.mxu0 %v2048
  %2082 = vmatmul.mubr.bf16.gmra.mxu0 %v2047
  %v2083 = vpop.f32.mrf.mxu0
  %v2084 = vadd.f32 %v1703, %v2083
  %v2085 = vpop.f32.mrf.mxu0
  %v2086 = vpop.f32.mrf.mxu0
  %v2087 = vadd.f32 %v1703, %v2086
  %v2088 = vpop.f32.mrf.mxu0
  %2089 = vdwg.mxu0
  %v2090 = vadd.f32 %v1841, %v2084
  %v2091 = vadd.f32 %v1842, %v2087
  %s2092 = scalar_lea.vmem %s9, 8
  %v2093 = vld [vmem:[%s2092] sm:$0xf]
  %s2094 = scalar_lea.vmem %s5, 8
  %v2095 = vld [vmem:[%s2094] sm:$0xf]
  %v2096 = vsel %vm96, %v2090, 0.0
  %2097 = vadd.xlane.f32.xlu0 %v2096
  %v2098 = vpop.xlane.xlu0 %2097
  %v2099 = vsel %vm96, %v2091, 0.0
  %2100 = vadd.xlane.f32.xlu0 %v2099
  %v2101 = vpop.xlane.xlu0 %2100
  %v2102 = vmul.f32 %v2098, %v149
  %v2103 = vmul.f32 %v2101, %v149
  %v2104 = vsub.f32 %v2090, %v2102
  %v2105 = vsub.f32 %v2091, %v2103
  %v2106 = vmul.f32 %v2104, %v2104
  %v2107 = vmul.f32 %v2105, %v2105
  %v2108 = vsel %vm96, %v2106, 0.0
  %2109 = vadd.xlane.f32.xlu0 %v2108
  %v2110 = vpop.xlane.xlu0 %2109
  %v2111 = vsel %vm96, %v2107, 0.0
  %2112 = vadd.xlane.f32.xlu0 %v2111
  %v2113 = vpop.xlane.xlu0 %2112
  %v2114 = vmul.f32 %v2110, %v149
  %v2115 = vmul.f32 %v2113, %v149
  %v2116 = vadd.f32 %v2114, 1e-05
  %v2117 = vadd.f32 %v2115, 1e-05
  %v2118 = vrsqrt.pop %v2116
  %v2119 = vrsqrt.pop %v2117
  %v2120 = vmul.f32 %v2104, %v2118
  %v2121 = vmul.f32 %v2105, %v2119
  %v2122 = vlaneseq
  %v2123 = vshrl.u32 %v2122, 7
  %v2124 = vsub.s32 0, %v2123
  %v2125 = vrot.slane %v2093, %v2124
  %v2126 = vmul.f32 %v2120, %v2125
  %v2127 = vmul.f32 %v2121, %v2125
  %v2128 = vlaneseq
  %v2129 = vshrl.u32 %v2128, 7
  %v2130 = vsub.s32 1, %v2129
  %v2131 = vrot.slane %v2093, %v2130
  %v2132 = vadd.f32 %v2126, %v2131
  %v2133 = vadd.f32 %v2127, %v2131
  %s2134 = scalar_lea.vmem %s4, 256
  %v2135 = vld [vmem:[%s2134] sm:$0xff]
  %v2136 = vld [vmem:[%s2134 + $0x8] sm:$0xff]
  %v2137 = vld [vmem:[%s2134 + $0x10] sm:$0xff]
  %v2138 = vld [vmem:[%s2134 + $0x18] sm:$0xff]
  %v2139 = vld [vmem:[%s2134 + $0x20] sm:$0xff]
  %v2140 = vld [vmem:[%s2134 + $0x28] sm:$0xff]
  %v2141 = vld [vmem:[%s2134 + $0x30] sm:$0xff]
  %v2142 = vld [vmem:[%s2134 + $0x38] sm:$0xff]
  %v2143 = vld [vmem:[%s2134 + $0x40] sm:$0xff]
  %v2144 = vld [vmem:[%s2134 + $0x48] sm:$0xff]
  %v2145 = vld [vmem:[%s2134 + $0x50] sm:$0xff]
  %v2146 = vld [vmem:[%s2134 + $0x58] sm:$0xff]
  %v2147 = vld [vmem:[%s2134 + $0x60] sm:$0xff]
  %v2148 = vld [vmem:[%s2134 + $0x68] sm:$0xff]
  %v2149 = vld [vmem:[%s2134 + $0x70] sm:$0xff]
  %v2150 = vld [vmem:[%s2134 + $0x78] sm:$0xff]
  %v2151 = vpack.c.bf16 %v2133, %v2132
  %v2153 = vlaneseq
  %v2154 = vshrl.u32 %v2153, 7
  %v2155 = vsub.s32 0, %v2154
  %v2156 = vrot.slane %v2095, %v2155
  %v2157 = vlaneseq
  %v2158 = vshrl.u32 %v2157, 7
  %v2159 = vsub.s32 1, %v2158
  %v2160 = vrot.slane %v2095, %v2159
  %v2161 = vlaneseq
  %v2162 = vshrl.u32 %v2161, 7
  %v2163 = vsub.s32 2, %v2162
  %v2164 = vrot.slane %v2095, %v2163
  %v2165 = vlaneseq
  %v2166 = vshrl.u32 %v2165, 7
  %v2167 = vsub.s32 3, %v2166
  %v2168 = vrot.slane %v2095, %v2167
  %v2189 = vunpack.c.l.b16 %v2135
  %v2190 = vunpack.c.h.b16 %v2135
  %v2191 = vunpack.c.l.b16 %v2136
  %v2192 = vunpack.c.h.b16 %v2136
  %v2193 = vunpack.c.l.b16 %v2137
  %v2194 = vunpack.c.h.b16 %v2137
  %v2195 = vunpack.c.l.b16 %v2138
  %v2196 = vunpack.c.h.b16 %v2138
  %v2197 = vunpack.c.l.b16 %v2139
  %v2198 = vunpack.c.h.b16 %v2139
  %v2199 = vunpack.c.l.b16 %v2140
  %v2200 = vunpack.c.h.b16 %v2140
  %v2201 = vunpack.c.l.b16 %v2141
  %v2202 = vunpack.c.h.b16 %v2141
  %v2203 = vunpack.c.l.b16 %v2142
  %v2204 = vunpack.c.h.b16 %v2142
  %v2205 = vunpack.c.l.b16 %v2143
  %v2206 = vunpack.c.h.b16 %v2143
  %v2207 = vunpack.c.l.b16 %v2144
  %v2208 = vunpack.c.h.b16 %v2144
  %v2209 = vunpack.c.l.b16 %v2145
  %v2210 = vunpack.c.h.b16 %v2145
  %v2211 = vunpack.c.l.b16 %v2146
  %v2212 = vunpack.c.h.b16 %v2146
  %v2213 = vunpack.c.l.b16 %v2147
  %v2214 = vunpack.c.h.b16 %v2147
  %v2215 = vunpack.c.l.b16 %v2148
  %v2216 = vunpack.c.h.b16 %v2148
  %v2217 = vunpack.c.l.b16 %v2149
  %v2218 = vunpack.c.h.b16 %v2149
  %v2219 = vunpack.c.l.b16 %v2150
  %v2220 = vunpack.c.h.b16 %v2150
  %v2221 = vpack.c.b16 %v2193, %v2189
  %v2222 = vpack.c.b16 %v2194, %v2190
  %v2223 = vpack.c.b16 %v2195, %v2191
  %v2224 = vpack.c.b16 %v2196, %v2192
  %v2225 = vpack.c.b16 %v2201, %v2197
  %v2226 = vpack.c.b16 %v2202, %v2198
  %v2227 = vpack.c.b16 %v2203, %v2199
  %v2228 = vpack.c.b16 %v2204, %v2200
  %v2229 = vpack.c.b16 %v2209, %v2205
  %v2230 = vpack.c.b16 %v2210, %v2206
  %v2231 = vpack.c.b16 %v2211, %v2207
  %v2232 = vpack.c.b16 %v2212, %v2208
  %v2233 = vpack.c.b16 %v2217, %v2213
  %v2234 = vpack.c.b16 %v2218, %v2214
  %v2235 = vpack.c.b16 %v2219, %v2215
  %v2236 = vpack.c.b16 %v2220, %v2216
  %v2254 = vsel %vm96, %v2151, 0
  %2256 = vmatprep.subr.bf16.mxu0 0
  %2257 = vmatpush1.bf16.msra.mxu0 0
  %2258 = vmatprep.subr.bf16.mxu0 0
  %2259 = vmatpush1.bf16.msra.mxu0 0
  %2260 = vmatprep.subr.bf16.mxu0 0
  %2261 = vmatpush1.bf16.msra.mxu0 0
  %2262 = vmatprep.subr.bf16.mxu0 0
  %2263 = vmatpush1.bf16.msra.mxu0 0
  %2264 = vmatprep.subr.bf16.mxu0 %v2234
  %2265 = vmatpush1.bf16.msra.mxu0 %v2233
  %2266 = vmatprep.subr.bf16.mxu0 %v2230
  %2267 = vmatpush1.bf16.msra.mxu0 %v2229
  %2268 = vmatprep.subr.bf16.mxu0 %v2226
  %2269 = vmatpush1.bf16.msra.mxu0 %v2225
  %2270 = vmatprep.subr.bf16.mxu0 %v2222
  %2271 = vmatpush1.bf16.msra.mxu0 %v2221
  %2272 = vmatprep.subr.bf16.mxu0 0
  %2273 = vmatpush2.bf16.msra.mxu0 0
  %2274 = vmatprep.subr.bf16.mxu0 0
  %2275 = vmatpush2.bf16.msra.mxu0 0
  %2276 = vmatprep.subr.bf16.mxu0 0
  %2277 = vmatpush2.bf16.msra.mxu0 0
  %2278 = vmatprep.subr.bf16.mxu0 0
  %2279 = vmatpush2.bf16.msra.mxu0 0
  %2280 = vmatprep.subr.bf16.mxu0 0
  %2281 = vmatpush2.bf16.msra.mxu0 0
  %2282 = vmatprep.subr.bf16.mxu0 0
  %2283 = vmatpush2.bf16.msra.mxu0 0
  %2284 = vmatprep.subr.bf16.mxu0 0
  %2285 = vmatpush2.bf16.msra.mxu0 0
  %2286 = vmatprep.subr.bf16.mxu0 0
  %2287 = vmatpush2.bf16.msra.mxu0 0
  %2288 = vmatprep.mubr.bf16.mxu0 0
  %2289 = vmatmul.mubr.bf16.gmra.mxu0 %v2254
  %v2290 = vpop.f32.mrf.mxu0
  %v2291 = vadd.f32 %v2156, %v2290
  %v2292 = vpop.f32.mrf.mxu0
  %v2293 = vadd.f32 %v2160, %v2292
  %v2294 = vpop.f32.mrf.mxu0
  %v2295 = vadd.f32 %v2156, %v2294
  %v2296 = vpop.f32.mrf.mxu0
  %v2297 = vadd.f32 %v2160, %v2296
  %2298 = vdwg.mxu0
  %2299 = vmatprep.subr.bf16.mxu0 0
  %2300 = vmatpush1.bf16.msra.mxu0 0
  %2301 = vmatprep.subr.bf16.mxu0 0
  %2302 = vmatpush1.bf16.msra.mxu0 0
  %2303 = vmatprep.subr.bf16.mxu0 0
  %2304 = vmatpush1.bf16.msra.mxu0 0
  %2305 = vmatprep.subr.bf16.mxu0 0
  %2306 = vmatpush1.bf16.msra.mxu0 0
  %2307 = vmatprep.subr.bf16.mxu0 %v2236
  %2308 = vmatpush1.bf16.msra.mxu0 %v2235
  %2309 = vmatprep.subr.bf16.mxu0 %v2232
  %2310 = vmatpush1.bf16.msra.mxu0 %v2231
  %2311 = vmatprep.subr.bf16.mxu0 %v2228
  %2312 = vmatpush1.bf16.msra.mxu0 %v2227
  %2313 = vmatprep.subr.bf16.mxu0 %v2224
  %2314 = vmatpush1.bf16.msra.mxu0 %v2223
  %2315 = vmatprep.subr.bf16.mxu0 0
  %2316 = vmatpush2.bf16.msra.mxu0 0
  %2317 = vmatprep.subr.bf16.mxu0 0
  %2318 = vmatpush2.bf16.msra.mxu0 0
  %2319 = vmatprep.subr.bf16.mxu0 0
  %2320 = vmatpush2.bf16.msra.mxu0 0
  %2321 = vmatprep.subr.bf16.mxu0 0
  %2322 = vmatpush2.bf16.msra.mxu0 0
  %2323 = vmatprep.subr.bf16.mxu0 0
  %2324 = vmatpush2.bf16.msra.mxu0 0
  %2325 = vmatprep.subr.bf16.mxu0 0
  %2326 = vmatpush2.bf16.msra.mxu0 0
  %2327 = vmatprep.subr.bf16.mxu0 0
  %2328 = vmatpush2.bf16.msra.mxu0 0
  %2329 = vmatprep.subr.bf16.mxu0 0
  %2330 = vmatpush2.bf16.msra.mxu0 0
  %2331 = vmatprep.mubr.bf16.mxu0 0
  %2332 = vmatmul.mubr.bf16.gmra.mxu0 %v2254
  %v2333 = vpop.f32.mrf.mxu0
  %v2334 = vadd.f32 %v2164, %v2333
  %v2335 = vpop.f32.mrf.mxu0
  %v2336 = vadd.f32 %v2168, %v2335
  %v2337 = vpop.f32.mrf.mxu0
  %v2338 = vadd.f32 %v2164, %v2337
  %v2339 = vpop.f32.mrf.mxu0
  %v2340 = vadd.f32 %v2168, %v2339
  %2341 = vdwg.mxu0
  %2343 = vrot.lane.b32.xlu0 %v2334, 64
  %v2344 = vpop.permute.xlu0 %2343
  %v2346 = vmul.f32 %v2334, %v2344
  %2348 = vrot.lane.b32.xlu0 %v2338, 64
  %v2349 = vpop.permute.xlu0 %2348
  %v2351 = vmul.f32 %v2334, %v2349
  %v2352 = vmul.f32 %v2338, %v2344
  %v2353 = vmul.f32 %v2338, %v2349
  %v2354 = vpack.c.bf16 %v2351, %v2346
  %v2355 = vpack.c.bf16 %v2353, %v2352
  %v2357 = vsel %vm96, %v2354, 0
  %v2360 = vsel %vm96, %v2355, 0
  %2362 = vmatprep.subr.bf16.mxu0 0
  %2363 = vmatpush1.bf16.msra.mxu0 0
  %2364 = vmatprep.subr.bf16.mxu0 0
  %2365 = vmatpush1.bf16.msra.mxu0 0
  %2366 = vmatprep.subr.bf16.mxu0 0
  %2367 = vmatpush1.bf16.msra.mxu0 0
  %2368 = vmatprep.subr.bf16.mxu0 0
  %2369 = vmatpush1.bf16.msra.mxu0 0
  %2370 = vmatprep.subr.bf16.mxu0 0
  %2371 = vmatpush1.bf16.msra.mxu0 %v422
  %2372 = vmatprep.subr.bf16.mxu0 0
  %2373 = vmatpush1.bf16.msra.mxu0 %v421
  %2374 = vmatprep.subr.bf16.mxu0 0
  %2375 = vmatpush1.bf16.msra.mxu0 %v420
  %2376 = vmatprep.subr.bf16.mxu0 0
  %2377 = vmatpush1.bf16.msra.mxu0 %v419
  %2378 = vmatprep.subr.bf16.mxu0 0
  %2379 = vmatpush2.bf16.msra.mxu0 0
  %2380 = vmatprep.subr.bf16.mxu0 0
  %2381 = vmatpush2.bf16.msra.mxu0 0
  %2382 = vmatprep.subr.bf16.mxu0 0
  %2383 = vmatpush2.bf16.msra.mxu0 0
  %2384 = vmatprep.subr.bf16.mxu0 0
  %2385 = vmatpush2.bf16.msra.mxu0 0
  %2386 = vmatprep.subr.bf16.mxu0 0
  %2387 = vmatpush2.bf16.msra.mxu0 0
  %2388 = vmatprep.subr.bf16.mxu0 0
  %2389 = vmatpush2.bf16.msra.mxu0 0
  %2390 = vmatprep.subr.bf16.mxu0 0
  %2391 = vmatpush2.bf16.msra.mxu0 0
  %2392 = vmatprep.subr.bf16.mxu0 0
  %2393 = vmatpush2.bf16.msra.mxu0 0
  %2394 = vmatprep.mubr.bf16.mxu0 0
  %2395 = vmatmul.mubr.bf16.gmra.mxu0 %v2357
  %v2396 = vpop.f32.mrf.mxu0
  %v2397 = vadd.f32 0.0, %v2396
  %v2398 = vpop.f32.mrf.mxu0
  %v2399 = vpop.f32.mrf.mxu0
  %v2400 = vadd.f32 0.0, %v2399
  %v2401 = vpop.f32.mrf.mxu0
  %2402 = vmatprep.mubr.bf16.mxu0 0
  %2403 = vmatmul.mubr.bf16.gmra.mxu0 %v2360
  %v2404 = vpop.f32.mrf.mxu0
  %v2405 = vadd.f32 0.0, %v2404
  %v2406 = vpop.f32.mrf.mxu0
  %v2407 = vpop.f32.mrf.mxu0
  %v2408 = vadd.f32 0.0, %v2407
  %v2409 = vpop.f32.mrf.mxu0
  %2410 = vdwg.mxu0
  %v2411 = vmax.f32 %v2397, %v2400
  %v2412 = vsub.f32 %v2397, %v2411
  %v2413 = vmul.f32 %v2412, 1.442695
  %v2414 = vpow.pop %v2413
  %v2415 = vsub.f32 %v2400, %v2411
  %v2416 = vmul.f32 %v2415, 1.442695
  %v2417 = vpow.pop %v2416
  %v2418 = vmul.f32 %v2414, %v2336
  %v2419 = vadd.f32 %v2414, %v2417
  %v2420 = vmul.f32 %v2417, %v2340
  %v2421 = vadd.f32 %v2418, %v2420
  %v2422 = vrcp.pop %v2419
  %v2423 = vmul.f32 %v2421, %v2422
  %v2424 = vmax.f32 %v2405, %v2408
  %v2425 = vsub.f32 %v2405, %v2424
  %v2426 = vmul.f32 %v2425, 1.442695
  %v2427 = vpow.pop %v2426
  %v2428 = vsub.f32 %v2408, %v2424
  %v2429 = vmul.f32 %v2428, 1.442695
  %v2430 = vpow.pop %v2429
  %v2431 = vmul.f32 %v2427, %v2336
  %v2432 = vadd.f32 %v2427, %v2430
  %v2433 = vmul.f32 %v2430, %v2340
  %v2434 = vadd.f32 %v2431, %v2433
  %v2435 = vrcp.pop %v2432
  %v2436 = vmul.f32 %v2434, %v2435
  %s2437 = scalar_lea.vmem %s6, 64
  %v2438 = vld [vmem:[%s2437] sm:$0xf]
  %v2439 = vld [vmem:[%s2437 + $0x4] sm:$0xf]
  %v2440 = vld [vmem:[%s2437 + $0x8] sm:$0xf]
  %v2441 = vld [vmem:[%s2437 + $0xc] sm:$0xf]
  %v2442 = vld [vmem:[%s2437 + $0x10] sm:$0xf]
  %v2443 = vld [vmem:[%s2437 + $0x14] sm:$0xf]
  %v2444 = vld [vmem:[%s2437 + $0x18] sm:$0xf]
  %v2445 = vld [vmem:[%s2437 + $0x1c] sm:$0xf]
  %v2446 = vpack.c.bf16 %v2436, %v2423
  %v2455 = vunpack.c.l.b16 %v2438
  %v2456 = vunpack.c.l.b16 %v2439
  %v2457 = vunpack.c.l.b16 %v2440
  %v2458 = vunpack.c.l.b16 %v2441
  %v2459 = vunpack.c.l.b16 %v2442
  %v2460 = vunpack.c.l.b16 %v2443
  %v2461 = vunpack.c.l.b16 %v2444
  %v2462 = vunpack.c.l.b16 %v2445
  %v2463 = vpack.c.b16 %v2456, %v2455
  %v2464 = vpack.c.b16 %v2458, %v2457
  %v2465 = vpack.c.b16 %v2460, %v2459
  %v2466 = vpack.c.b16 %v2462, %v2461
  %v2472 = vsel %vm96, %v2446, 0
  %2474 = vmatprep.subr.bf16.mxu0 0
  %2475 = vmatpush1.bf16.msra.mxu0 0
  %2476 = vmatprep.subr.bf16.mxu0 0
  %2477 = vmatpush1.bf16.msra.mxu0 0
  %2478 = vmatprep.subr.bf16.mxu0 0
  %2479 = vmatpush1.bf16.msra.mxu0 0
  %2480 = vmatprep.subr.bf16.mxu0 0
  %2481 = vmatpush1.bf16.msra.mxu0 0
  %2482 = vmatprep.subr.bf16.mxu0 0
  %2483 = vmatpush1.bf16.msra.mxu0 %v2466
  %2484 = vmatprep.subr.bf16.mxu0 0
  %2485 = vmatpush1.bf16.msra.mxu0 %v2465
  %2486 = vmatprep.subr.bf16.mxu0 0
  %2487 = vmatpush1.bf16.msra.mxu0 %v2464
  %2488 = vmatprep.subr.bf16.mxu0 0
  %2489 = vmatpush1.bf16.msra.mxu0 %v2463
  %2490 = vmatprep.subr.bf16.mxu0 0
  %2491 = vmatpush2.bf16.msra.mxu0 0
  %2492 = vmatprep.subr.bf16.mxu0 0
  %2493 = vmatpush2.bf16.msra.mxu0 0
  %2494 = vmatprep.subr.bf16.mxu0 0
  %2495 = vmatpush2.bf16.msra.mxu0 0
  %2496 = vmatprep.subr.bf16.mxu0 0
  %2497 = vmatpush2.bf16.msra.mxu0 0
  %2498 = vmatprep.subr.bf16.mxu0 0
  %2499 = vmatpush2.bf16.msra.mxu0 0
  %2500 = vmatprep.subr.bf16.mxu0 0
  %2501 = vmatpush2.bf16.msra.mxu0 0
  %2502 = vmatprep.subr.bf16.mxu0 0
  %2503 = vmatpush2.bf16.msra.mxu0 0
  %2504 = vmatprep.subr.bf16.mxu0 0
  %2505 = vmatpush2.bf16.msra.mxu0 0
  %2506 = vmatprep.mubr.bf16.mxu0 0
  %2507 = vmatmul.mubr.bf16.gmra.mxu0 %v2472
  %v2508 = vpop.f32.mrf.mxu0
  %v2509 = vadd.f32 0.0, %v2508
  %v2510 = vpop.f32.mrf.mxu0
  %v2511 = vpop.f32.mrf.mxu0
  %v2512 = vadd.f32 0.0, %v2511
  %v2513 = vpop.f32.mrf.mxu0
  %2514 = vdwg.mxu0
  %v2515 = vadd.f32 %v2090, %v2509
  %v2516 = vadd.f32 %v2091, %v2512
  %v2517 = vlaneseq
  %v2518 = vshrl.u32 %v2517, 7
  %v2519 = vsub.s32 2, %v2518
  %v2520 = vrot.slane %v2093, %v2519
  %v2521 = vadd.f32 %v2515, %v2520
  %v2522 = vadd.f32 %v2516, %v2520
  %v2523 = vmul.f32 %v2291, 0.5
  %v2524 = vmul.f32 %v2293, 0.5
  %v2525 = vmul.f32 %v2295, 0.5
  %v2526 = vmul.f32 %v2297, 0.5
  %v2527 = vmul.f32 %v2291, 0.70710677
  %v2528 = vmul.f32 %v2293, 0.70710677
  %v2529 = vmul.f32 %v2295, 0.70710677
  %v2530 = vmul.f32 %v2297, 0.70710677
  %v2531 = vand.u32 2147483647, %v2527
  %v2532 = vand.u32 2147483647, %v2528
  %v2533 = vand.u32 2147483647, %v2529
  %v2534 = vand.u32 2147483647, %v2530
  %v2535 = vmul.f32 %v2531, 0.3275911
  %v2536 = vmul.f32 %v2532, 0.3275911
  %v2537 = vmul.f32 %v2533, 0.3275911
  %v2538 = vmul.f32 %v2534, 0.3275911
  %v2539 = vadd.f32 %v2535, 1.0
  %v2540 = vadd.f32 %v2536, 1.0
  %v2541 = vadd.f32 %v2537, 1.0
  %v2542 = vadd.f32 %v2538, 1.0
  %v2543 = vrcp.pop %v2539
  %v2544 = vmul.f32 1.0, %v2543
  %v2545 = vrcp.pop %v2540
  %v2546 = vmul.f32 1.0, %v2545
  %v2547 = vrcp.pop %v2541
  %v2548 = vmul.f32 1.0, %v2547
  %v2549 = vrcp.pop %v2542
  %v2550 = vmul.f32 1.0, %v2549
  %v2551 = vmul.f32 %v2544, 1.0614054
  %v2552 = vmul.f32 %v2546, 1.0614054
  %v2553 = vmul.f32 %v2548, 1.0614054
  %v2554 = vmul.f32 %v2550, 1.0614054
  %v2555 = vadd.f32 %v2551, -1.4531521
  %v2556 = vadd.f32 %v2552, -1.4531521
  %v2557 = vadd.f32 %v2553, -1.4531521
  %v2558 = vadd.f32 %v2554, -1.4531521
  %v2559 = vmul.f32 %v2544, %v2555
  %v2560 = vmul.f32 %v2546, %v2556
  %v2561 = vmul.f32 %v2548, %v2557
  %v2562 = vmul.f32 %v2550, %v2558
  %v2563 = vadd.f32 %v2559, 1.4214138
  %v2564 = vadd.f32 %v2560, 1.4214138
  %v2565 = vadd.f32 %v2561, 1.4214138
  %v2566 = vadd.f32 %v2562, 1.4214138
  %v2567 = vmul.f32 %v2544, %v2563
  %v2568 = vmul.f32 %v2546, %v2564
  %v2569 = vmul.f32 %v2548, %v2565
  %v2570 = vmul.f32 %v2550, %v2566
  %v2571 = vadd.f32 %v2567, -0.28449672
  %v2572 = vadd.f32 %v2568, -0.28449672
  %v2573 = vadd.f32 %v2569, -0.28449672
  %v2574 = vadd.f32 %v2570, -0.28449672
  %v2575 = vmul.f32 %v2544, %v2571
  %v2576 = vmul.f32 %v2546, %v2572
  %v2577 = vmul.f32 %v2548, %v2573
  %v2578 = vmul.f32 %v2550, %v2574
  %v2579 = vadd.f32 %v2575, 0.2548296
  %v2580 = vadd.f32 %v2576, 0.2548296
  %v2581 = vadd.f32 %v2577, 0.2548296
  %v2582 = vadd.f32 %v2578, 0.2548296
  %v2583 = vmul.f32 %v2544, %v2579
  %v2584 = vmul.f32 %v2546, %v2580
  %v2585 = vmul.f32 %v2548, %v2581
  %v2586 = vmul.f32 %v2550, %v2582
  %v2587 = vsub.f32 0.0, %v2531
  %v2588 = vsub.f32 0.0, %v2532
  %v2589 = vsub.f32 0.0, %v2533
  %v2590 = vsub.f32 0.0, %v2534
  %v2591 = vmul.f32 %v2587, %v2531
  %v2592 = vmul.f32 %v2588, %v2532
  %v2593 = vmul.f32 %v2589, %v2533
  %v2594 = vmul.f32 %v2590, %v2534
  %v2595 = vmul.f32 %v2591, 1.442695
  %v2596 = vpow.pop %v2595
  %v2597 = vmul.f32 %v2592, 1.442695
  %v2598 = vpow.pop %v2597
  %v2599 = vmul.f32 %v2593, 1.442695
  %v2600 = vpow.pop %v2599
  %v2601 = vmul.f32 %v2594, 1.442695
  %v2602 = vpow.pop %v2601
  %v2603 = vmul.f32 %v2583, %v2596
  %v2604 = vmul.f32 %v2584, %v2598
  %v2605 = vmul.f32 %v2585, %v2600
  %v2606 = vmul.f32 %v2586, %v2602
  %v2607 = vsub.f32 1.0, %v2603
  %v2608 = vsub.f32 1.0, %v2604
  %v2609 = vsub.f32 1.0, %v2605
  %v2610 = vsub.f32 1.0, %v2606
  %vm2611 = vcmp.ge.f32.partialorder %v2527, 0.0
  %vm2612 = vcmp.ge.f32.partialorder %v2528, 0.0
  %vm2613 = vcmp.ge.f32.partialorder %v2529, 0.0
  %vm2614 = vcmp.ge.f32.partialorder %v2530, 0.0
  %v2615 = vsub.f32 0.0, %v2607
  %v2616 = vsub.f32 0.0, %v2608
  %v2617 = vsub.f32 0.0, %v2609
  %v2618 = vsub.f32 0.0, %v2610
  %v2619 = vsel %vm2611, %v2607, %v2615
  %v2620 = vsel %vm2612, %v2608, %v2616
  %v2621 = vsel %vm2613, %v2609, %v2617
  %v2622 = vsel %vm2614, %v2610, %v2618
  %v2623 = vadd.f32 %v2619, 1.0
  %v2624 = vadd.f32 %v2620, 1.0
  %v2625 = vadd.f32 %v2621, 1.0
  %v2626 = vadd.f32 %v2622, 1.0
  %v2627 = vmul.f32 %v2523, %v2623
  %v2628 = vmul.f32 %v2524, %v2624
  %v2629 = vmul.f32 %v2525, %v2625
  %v2630 = vmul.f32 %v2526, %v2626
  %s2631 = scalar_lea.vmem %s8, 256
  %v2632 = vld [vmem:[%s2631] sm:$0xf]
  %v2633 = vld [vmem:[%s2631 + $0x4] sm:$0xf]
  %v2634 = vld [vmem:[%s2631 + $0x8] sm:$0xf]
  %v2635 = vld [vmem:[%s2631 + $0xc] sm:$0xf]
  %v2636 = vld [vmem:[%s2631 + $0x10] sm:$0xf]
  %v2637 = vld [vmem:[%s2631 + $0x14] sm:$0xf]
  %v2638 = vld [vmem:[%s2631 + $0x18] sm:$0xf]
  %v2639 = vld [vmem:[%s2631 + $0x1c] sm:$0xf]
  %v2640 = vld [vmem:[%s2631 + $0x20] sm:$0xf]
  %v2641 = vld [vmem:[%s2631 + $0x24] sm:$0xf]
  %v2642 = vld [vmem:[%s2631 + $0x28] sm:$0xf]
  %v2643 = vld [vmem:[%s2631 + $0x2c] sm:$0xf]
  %v2644 = vld [vmem:[%s2631 + $0x30] sm:$0xf]
  %v2645 = vld [vmem:[%s2631 + $0x34] sm:$0xf]
  %v2646 = vld [vmem:[%s2631 + $0x38] sm:$0xf]
  %v2647 = vld [vmem:[%s2631 + $0x3c] sm:$0xf]
  %v2648 = vld [vmem:[%s2631 + $0x40] sm:$0xf]
  %v2649 = vld [vmem:[%s2631 + $0x44] sm:$0xf]
  %v2650 = vld [vmem:[%s2631 + $0x48] sm:$0xf]
  %v2651 = vld [vmem:[%s2631 + $0x4c] sm:$0xf]
  %v2652 = vld [vmem:[%s2631 + $0x50] sm:$0xf]
  %v2653 = vld [vmem:[%s2631 + $0x54] sm:$0xf]
  %v2654 = vld [vmem:[%s2631 + $0x58] sm:$0xf]
  %v2655 = vld [vmem:[%s2631 + $0x5c] sm:$0xf]
  %v2656 = vld [vmem:[%s2631 + $0x60] sm:$0xf]
  %v2657 = vld [vmem:[%s2631 + $0x64] sm:$0xf]
  %v2658 = vld [vmem:[%s2631 + $0x68] sm:$0xf]
  %v2659 = vld [vmem:[%s2631 + $0x6c] sm:$0xf]
  %v2660 = vld [vmem:[%s2631 + $0x70] sm:$0xf]
  %v2661 = vld [vmem:[%s2631 + $0x74] sm:$0xf]
  %v2662 = vld [vmem:[%s2631 + $0x78] sm:$0xf]
  %v2663 = vld [vmem:[%s2631 + $0x7c] sm:$0xf]
  %v2664 = vpack.c.bf16 %v2629, %v2627
  %v2665 = vpack.c.bf16 %v2630, %v2628
  %v2666 = vlaneseq
  %v2667 = vshrl.u32 %v2666, 7
  %v2668 = vsub.s32 3, %v2667
  %v2669 = vrot.slane %v2093, %v2668
  %v2702 = vunpack.c.l.b16 %v2632
  %v2703 = vunpack.c.l.b16 %v2633
  %v2704 = vunpack.c.l.b16 %v2634
  %v2705 = vunpack.c.l.b16 %v2635
  %v2706 = vunpack.c.l.b16 %v2636
  %v2707 = vunpack.c.l.b16 %v2637
  %v2708 = vunpack.c.l.b16 %v2638
  %v2709 = vunpack.c.l.b16 %v2639
  %v2710 = vunpack.c.l.b16 %v2640
  %v2711 = vunpack.c.l.b16 %v2641
  %v2712 = vunpack.c.l.b16 %v2642
  %v2713 = vunpack.c.l.b16 %v2643
  %v2714 = vunpack.c.l.b16 %v2644
  %v2715 = vunpack.c.l.b16 %v2645
  %v2716 = vunpack.c.l.b16 %v2646
  %v2717 = vunpack.c.l.b16 %v2647
  %v2718 = vunpack.c.l.b16 %v2648
  %v2719 = vunpack.c.l.b16 %v2649
  %v2720 = vunpack.c.l.b16 %v2650
  %v2721 = vunpack.c.l.b16 %v2651
  %v2722 = vunpack.c.l.b16 %v2652
  %v2723 = vunpack.c.l.b16 %v2653
  %v2724 = vunpack.c.l.b16 %v2654
  %v2725 = vunpack.c.l.b16 %v2655
  %v2726 = vunpack.c.l.b16 %v2656
  %v2727 = vunpack.c.l.b16 %v2657
  %v2728 = vunpack.c.l.b16 %v2658
  %v2729 = vunpack.c.l.b16 %v2659
  %v2730 = vunpack.c.l.b16 %v2660
  %v2731 = vunpack.c.l.b16 %v2661
  %v2732 = vunpack.c.l.b16 %v2662
  %v2733 = vunpack.c.l.b16 %v2663
  %v2734 = vpack.c.b16 %v2703, %v2702
  %v2735 = vpack.c.b16 %v2705, %v2704
  %v2736 = vpack.c.b16 %v2707, %v2706
  %v2737 = vpack.c.b16 %v2709, %v2708
  %v2738 = vpack.c.b16 %v2711, %v2710
  %v2739 = vpack.c.b16 %v2713, %v2712
  %v2740 = vpack.c.b16 %v2715, %v2714
  %v2741 = vpack.c.b16 %v2717, %v2716
  %v2742 = vpack.c.b16 %v2719, %v2718
  %v2743 = vpack.c.b16 %v2721, %v2720
  %v2744 = vpack.c.b16 %v2723, %v2722
  %v2745 = vpack.c.b16 %v2725, %v2724
  %v2746 = vpack.c.b16 %v2727, %v2726
  %v2747 = vpack.c.b16 %v2729, %v2728
  %v2748 = vpack.c.b16 %v2731, %v2730
  %v2749 = vpack.c.b16 %v2733, %v2732
  %2766 = vmatprep.subr.bf16.mxu0 0
  %2767 = vmatpush1.bf16.msra.mxu0 %v2741
  %2768 = vmatprep.subr.bf16.mxu0 0
  %2769 = vmatpush1.bf16.msra.mxu0 %v2740
  %2770 = vmatprep.subr.bf16.mxu0 0
  %2771 = vmatpush1.bf16.msra.mxu0 %v2739
  %2772 = vmatprep.subr.bf16.mxu0 0
  %2773 = vmatpush1.bf16.msra.mxu0 %v2738
  %2774 = vmatprep.subr.bf16.mxu0 0
  %2775 = vmatpush1.bf16.msra.mxu0 %v2737
  %2776 = vmatprep.subr.bf16.mxu0 0
  %2777 = vmatpush1.bf16.msra.mxu0 %v2736
  %2778 = vmatprep.subr.bf16.mxu0 0
  %2779 = vmatpush1.bf16.msra.mxu0 %v2735
  %2780 = vmatprep.subr.bf16.mxu0 0
  %2781 = vmatpush1.bf16.msra.mxu0 %v2734
  %2782 = vmatprep.subr.bf16.mxu0 0
  %2783 = vmatpush2.bf16.msra.mxu0 %v2749
  %2784 = vmatprep.subr.bf16.mxu0 0
  %2785 = vmatpush2.bf16.msra.mxu0 %v2748
  %2786 = vmatprep.subr.bf16.mxu0 0
  %2787 = vmatpush2.bf16.msra.mxu0 %v2747
  %2788 = vmatprep.subr.bf16.mxu0 0
  %2789 = vmatpush2.bf16.msra.mxu0 %v2746
  %2790 = vmatprep.subr.bf16.mxu0 0
  %2791 = vmatpush2.bf16.msra.mxu0 %v2745
  %2792 = vmatprep.subr.bf16.mxu0 0
  %2793 = vmatpush2.bf16.msra.mxu0 %v2744
  %2794 = vmatprep.subr.bf16.mxu0 0
  %2795 = vmatpush2.bf16.msra.mxu0 %v2743
  %2796 = vmatprep.subr.bf16.mxu0 0
  %2797 = vmatpush2.bf16.msra.mxu0 %v2742
  %2798 = vmatprep.mubr.bf16.mxu0 %v2665
  %2799 = vmatmul.mubr.bf16.gmra.mxu0 %v2664
  %v2800 = vpop.f32.mrf.mxu0
  %v2801 = vadd.f32 %v2669, %v2800
  %v2802 = vpop.f32.mrf.mxu0
  %v2803 = vpop.f32.mrf.mxu0
  %v2804 = vadd.f32 %v2669, %v2803
  %v2805 = vpop.f32.mrf.mxu0
  %2806 = vdwg.mxu0
  %v2807 = vadd.f32 %v2521, %v2801
  %v2808 = vadd.f32 %v2522, %v2804
  %s2809 = scalar_lea.vmem %s7, 128
  %v2810 = vld [vmem:[%s2809] sm:$0xff]
  %v2811 = vld [vmem:[%s2809 + $0x8] sm:$0xff]
  %v2812 = vld [vmem:[%s2809 + $0x10] sm:$0xff]
  %v2813 = vld [vmem:[%s2809 + $0x18] sm:$0xff]
  %v2814 = vld [vmem:[%s2809 + $0x20] sm:$0xff]
  %v2815 = vld [vmem:[%s2809 + $0x28] sm:$0xff]
  %v2816 = vld [vmem:[%s2809 + $0x30] sm:$0xff]
  %v2817 = vld [vmem:[%s2809 + $0x38] sm:$0xff]
  %v2818 = vpack.c.bf16 %v2808, %v2807
  %v2827 = vunpack.c.l.b16 %v2810
  %v2828 = vunpack.c.h.b16 %v2810
  %v2829 = vunpack.c.l.b16 %v2811
  %v2830 = vunpack.c.h.b16 %v2811
  %v2831 = vunpack.c.l.b16 %v2812
  %v2832 = vunpack.c.h.b16 %v2812
  %v2833 = vunpack.c.l.b16 %v2813
  %v2834 = vunpack.c.h.b16 %v2813
  %v2835 = vunpack.c.l.b16 %v2814
  %v2836 = vunpack.c.h.b16 %v2814
  %v2837 = vunpack.c.l.b16 %v2815
  %v2838 = vunpack.c.h.b16 %v2815
  %v2839 = vunpack.c.l.b16 %v2816
  %v2840 = vunpack.c.h.b16 %v2816
  %v2841 = vunpack.c.l.b16 %v2817
  %v2842 = vunpack.c.h.b16 %v2817
  %v2843 = vpack.c.b16 %v2829, %v2827
  %v2844 = vpack.c.b16 %v2830, %v2828
  %v2845 = vpack.c.b16 %v2833, %v2831
  %v2846 = vpack.c.b16 %v2834, %v2832
  %v2847 = vpack.c.b16 %v2837, %v2835
  %v2848 = vpack.c.b16 %v2838, %v2836
  %v2849 = vpack.c.b16 %v2841, %v2839
  %v2850 = vpack.c.b16 %v2842, %v2840
  %v2860 = vsel %vm96, %v2818, 0
  %2862 = vmatprep.subr.bf16.mxu0 0
  %2863 = vmatpush1.bf16.msra.mxu0 0
  %2864 = vmatprep.subr.bf16.mxu0 0
  %2865 = vmatpush1.bf16.msra.mxu0 0
  %2866 = vmatprep.subr.bf16.mxu0 0
  %2867 = vmatpush1.bf16.msra.mxu0 0
  %2868 = vmatprep.subr.bf16.mxu0 0
  %2869 = vmatpush1.bf16.msra.mxu0 0
  %2870 = vmatprep.subr.bf16.mxu0 %v2850
  %2871 = vmatpush1.bf16.msra.mxu0 %v2849
  %2872 = vmatprep.subr.bf16.mxu0 %v2848
  %2873 = vmatpush1.bf16.msra.mxu0 %v2847
  %2874 = vmatprep.subr.bf16.mxu0 %v2846
  %2875 = vmatpush1.bf16.msra.mxu0 %v2845
  %2876 = vmatprep.subr.bf16.mxu0 %v2844
  %2877 = vmatpush1.bf16.msra.mxu0 %v2843
  %2878 = vmatprep.subr.bf16.mxu0 0
  %2879 = vmatpush2.bf16.msra.mxu0 0
  %2880 = vmatprep.subr.bf16.mxu0 0
  %2881 = vmatpush2.bf16.msra.mxu0 0
  %2882 = vmatprep.subr.bf16.mxu0 0
  %2883 = vmatpush2.bf16.msra.mxu0 0
  %2884 = vmatprep.subr.bf16.mxu0 0
  %2885 = vmatpush2.bf16.msra.mxu0 0
  %2886 = vmatprep.subr.bf16.mxu0 0
  %2887 = vmatpush2.bf16.msra.mxu0 0
  %2888 = vmatprep.subr.bf16.mxu0 0
  %2889 = vmatpush2.bf16.msra.mxu0 0
  %2890 = vmatprep.subr.bf16.mxu0 0
  %2891 = vmatpush2.bf16.msra.mxu0 0
  %2892 = vmatprep.subr.bf16.mxu0 0
  %2893 = vmatpush2.bf16.msra.mxu0 0
  %2894 = vmatprep.mubr.bf16.mxu0 0
  %2895 = vmatmul.mubr.bf16.gmra.mxu0 %v2860
  %v2896 = vpop.f32.mrf.mxu0
  %v2897 = vadd.f32 %v2156, %v2896
  %v2898 = vpop.f32.mrf.mxu0
  %v2899 = vadd.f32 %v2160, %v2898
  %v2900 = vpop.f32.mrf.mxu0
  %v2901 = vadd.f32 %v2156, %v2900
  %v2902 = vpop.f32.mrf.mxu0
  %v2903 = vadd.f32 %v2160, %v2902
  %2904 = vdwg.mxu0
  %v2905 = vmul.f32 %v2897, 0.5
  %v2906 = vmul.f32 %v2899, 0.5
  %v2907 = vmul.f32 %v2901, 0.5
  %v2908 = vmul.f32 %v2903, 0.5
  %v2909 = vmul.f32 %v2897, 0.70710677
  %v2910 = vmul.f32 %v2899, 0.70710677
  %v2911 = vmul.f32 %v2901, 0.70710677
  %v2912 = vmul.f32 %v2903, 0.70710677
  %v2913 = vand.u32 2147483647, %v2909
  %v2914 = vand.u32 2147483647, %v2910
  %v2915 = vand.u32 2147483647, %v2911
  %v2916 = vand.u32 2147483647, %v2912
  %v2917 = vmul.f32 %v2913, 0.3275911
  %v2918 = vmul.f32 %v2914, 0.3275911
  %v2919 = vmul.f32 %v2915, 0.3275911
  %v2920 = vmul.f32 %v2916, 0.3275911
  %v2921 = vadd.f32 %v2917, 1.0
  %v2922 = vadd.f32 %v2918, 1.0
  %v2923 = vadd.f32 %v2919, 1.0
  %v2924 = vadd.f32 %v2920, 1.0
  %v2925 = vrcp.pop %v2921
  %v2926 = vmul.f32 1.0, %v2925
  %v2927 = vrcp.pop %v2922
  %v2928 = vmul.f32 1.0, %v2927
  %v2929 = vrcp.pop %v2923
  %v2930 = vmul.f32 1.0, %v2929
  %v2931 = vrcp.pop %v2924
  %v2932 = vmul.f32 1.0, %v2931
  %v2933 = vmul.f32 %v2926, 1.0614054
  %v2934 = vmul.f32 %v2928, 1.0614054
  %v2935 = vmul.f32 %v2930, 1.0614054
  %v2936 = vmul.f32 %v2932, 1.0614054
  %v2937 = vadd.f32 %v2933, -1.4531521
  %v2938 = vadd.f32 %v2934, -1.4531521
  %v2939 = vadd.f32 %v2935, -1.4531521
  %v2940 = vadd.f32 %v2936, -1.4531521
  %v2941 = vmul.f32 %v2926, %v2937
  %v2942 = vmul.f32 %v2928, %v2938
  %v2943 = vmul.f32 %v2930, %v2939
  %v2944 = vmul.f32 %v2932, %v2940
  %v2945 = vadd.f32 %v2941, 1.4214138
  %v2946 = vadd.f32 %v2942, 1.4214138
  %v2947 = vadd.f32 %v2943, 1.4214138
  %v2948 = vadd.f32 %v2944, 1.4214138
  %v2949 = vmul.f32 %v2926, %v2945
  %v2950 = vmul.f32 %v2928, %v2946
  %v2951 = vmul.f32 %v2930, %v2947
  %v2952 = vmul.f32 %v2932, %v2948
  %v2953 = vadd.f32 %v2949, -0.28449672
  %v2954 = vadd.f32 %v2950, -0.28449672
  %v2955 = vadd.f32 %v2951, -0.28449672
  %v2956 = vadd.f32 %v2952, -0.28449672
  %v2957 = vmul.f32 %v2926, %v2953
  %v2958 = vmul.f32 %v2928, %v2954
  %v2959 = vmul.f32 %v2930, %v2955
  %v2960 = vmul.f32 %v2932, %v2956
  %v2961 = vadd.f32 %v2957, 0.2548296
  %v2962 = vadd.f32 %v2958, 0.2548296
  %v2963 = vadd.f32 %v2959, 0.2548296
  %v2964 = vadd.f32 %v2960, 0.2548296
  %v2965 = vmul.f32 %v2926, %v2961
  %v2966 = vmul.f32 %v2928, %v2962
  %v2967 = vmul.f32 %v2930, %v2963
  %v2968 = vmul.f32 %v2932, %v2964
  %v2969 = vsub.f32 0.0, %v2913
  %v2970 = vsub.f32 0.0, %v2914
  %v2971 = vsub.f32 0.0, %v2915
  %v2972 = vsub.f32 0.0, %v2916
  %v2973 = vmul.f32 %v2969, %v2913
  %v2974 = vmul.f32 %v2970, %v2914
  %v2975 = vmul.f32 %v2971, %v2915
  %v2976 = vmul.f32 %v2972, %v2916
  %v2977 = vmul.f32 %v2973, 1.442695
  %v2978 = vpow.pop %v2977
  %v2979 = vmul.f32 %v2974, 1.442695
  %v2980 = vpow.pop %v2979
  %v2981 = vmul.f32 %v2975, 1.442695
  %v2982 = vpow.pop %v2981
  %v2983 = vmul.f32 %v2976, 1.442695
  %v2984 = vpow.pop %v2983
  %v2985 = vmul.f32 %v2965, %v2978
  %v2986 = vmul.f32 %v2966, %v2980
  %v2987 = vmul.f32 %v2967, %v2982
  %v2988 = vmul.f32 %v2968, %v2984
  %v2989 = vsub.f32 1.0, %v2985
  %v2990 = vsub.f32 1.0, %v2986
  %v2991 = vsub.f32 1.0, %v2987
  %v2992 = vsub.f32 1.0, %v2988
  %vm2993 = vcmp.ge.f32.partialorder %v2909, 0.0
  %vm2994 = vcmp.ge.f32.partialorder %v2910, 0.0
  %vm2995 = vcmp.ge.f32.partialorder %v2911, 0.0
  %vm2996 = vcmp.ge.f32.partialorder %v2912, 0.0
  %v2997 = vsub.f32 0.0, %v2989
  %v2998 = vsub.f32 0.0, %v2990
  %v2999 = vsub.f32 0.0, %v2991
  %v3000 = vsub.f32 0.0, %v2992
  %v3001 = vsel %vm2993, %v2989, %v2997
  %v3002 = vsel %vm2994, %v2990, %v2998
  %v3003 = vsel %vm2995, %v2991, %v2999
  %v3004 = vsel %vm2996, %v2992, %v3000
  %v3005 = vadd.f32 %v3001, 1.0
  %v3006 = vadd.f32 %v3002, 1.0
  %v3007 = vadd.f32 %v3003, 1.0
  %v3008 = vadd.f32 %v3004, 1.0
  %v3009 = vmul.f32 %v2905, %v3005
  %v3010 = vmul.f32 %v2906, %v3006
  %v3011 = vmul.f32 %v2907, %v3007
  %v3012 = vmul.f32 %v2908, %v3008
  %v3013 = vpack.c.bf16 %v3011, %v3009
  %v3014 = vpack.c.bf16 %v3012, %v3010
  %3015 = vmatprep.subr.bf16.mxu0 0
  %3016 = vmatpush1.bf16.msra.mxu0 %v2741
  %3017 = vmatprep.subr.bf16.mxu0 0
  %3018 = vmatpush1.bf16.msra.mxu0 %v2740
  %3019 = vmatprep.subr.bf16.mxu0 0
  %3020 = vmatpush1.bf16.msra.mxu0 %v2739
  %3021 = vmatprep.subr.bf16.mxu0 0
  %3022 = vmatpush1.bf16.msra.mxu0 %v2738
  %3023 = vmatprep.subr.bf16.mxu0 0
  %3024 = vmatpush1.bf16.msra.mxu0 %v2737
  %3025 = vmatprep.subr.bf16.mxu0 0
  %3026 = vmatpush1.bf16.msra.mxu0 %v2736
  %3027 = vmatprep.subr.bf16.mxu0 0
  %3028 = vmatpush1.bf16.msra.mxu0 %v2735
  %3029 = vmatprep.subr.bf16.mxu0 0
  %3030 = vmatpush1.bf16.msra.mxu0 %v2734
  %3031 = vmatprep.subr.bf16.mxu0 0
  %3032 = vmatpush2.bf16.msra.mxu0 %v2749
  %3033 = vmatprep.subr.bf16.mxu0 0
  %3034 = vmatpush2.bf16.msra.mxu0 %v2748
  %3035 = vmatprep.subr.bf16.mxu0 0
  %3036 = vmatpush2.bf16.msra.mxu0 %v2747
  %3037 = vmatprep.subr.bf16.mxu0 0
  %3038 = vmatpush2.bf16.msra.mxu0 %v2746
  %3039 = vmatprep.subr.bf16.mxu0 0
  %3040 = vmatpush2.bf16.msra.mxu0 %v2745
  %3041 = vmatprep.subr.bf16.mxu0 0
  %3042 = vmatpush2.bf16.msra.mxu0 %v2744
  %3043 = vmatprep.subr.bf16.mxu0 0
  %3044 = vmatpush2.bf16.msra.mxu0 %v2743
  %3045 = vmatprep.subr.bf16.mxu0 0
  %3046 = vmatpush2.bf16.msra.mxu0 %v2742
  %3047 = vmatprep.mubr.bf16.mxu0 %v3014
  %3048 = vmatmul.mubr.bf16.gmra.mxu0 %v3013
  %v3049 = vpop.f32.mrf.mxu0
  %v3050 = vadd.f32 %v2669, %v3049
  %v3051 = vpop.f32.mrf.mxu0
  %v3052 = vpop.f32.mrf.mxu0
  %v3053 = vadd.f32 %v2669, %v3052
  %v3054 = vpop.f32.mrf.mxu0
  %3055 = vdwg.mxu0
  %v3056 = vadd.f32 %v2807, %v3050
  %v3057 = vadd.f32 %v2808, %v3053
  %s3058 = scalar_lea.vmem %s9, 12
  %v3059 = vld [vmem:[%s3058] sm:$0xf]
  %s3060 = scalar_lea.vmem %s5, 12
  %v3061 = vld [vmem:[%s3060] sm:$0xf]
  %v3062 = vsel %vm96, %v3056, 0.0
  %3063 = vadd.xlane.f32.xlu0 %v3062
  %v3064 = vpop.xlane.xlu0 %3063
  %v3065 = vsel %vm96, %v3057, 0.0
  %3066 = vadd.xlane.f32.xlu0 %v3065
  %v3067 = vpop.xlane.xlu0 %3066
  %v3068 = vmul.f32 %v3064, %v149
  %v3069 = vmul.f32 %v3067, %v149
  %v3070 = vsub.f32 %v3056, %v3068
  %v3071 = vsub.f32 %v3057, %v3069
  %v3072 = vmul.f32 %v3070, %v3070
  %v3073 = vmul.f32 %v3071, %v3071
  %v3074 = vsel %vm96, %v3072, 0.0
  %3075 = vadd.xlane.f32.xlu0 %v3074
  %v3076 = vpop.xlane.xlu0 %3075
  %v3077 = vsel %vm96, %v3073, 0.0
  %3078 = vadd.xlane.f32.xlu0 %v3077
  %v3079 = vpop.xlane.xlu0 %3078
  %v3080 = vmul.f32 %v3076, %v149
  %v3081 = vmul.f32 %v3079, %v149
  %v3082 = vadd.f32 %v3080, 1e-05
  %v3083 = vadd.f32 %v3081, 1e-05
  %v3084 = vrsqrt.pop %v3082
  %v3085 = vrsqrt.pop %v3083
  %v3086 = vmul.f32 %v3070, %v3084
  %v3087 = vmul.f32 %v3071, %v3085
  %v3088 = vlaneseq
  %v3089 = vshrl.u32 %v3088, 7
  %v3090 = vsub.s32 0, %v3089
  %v3091 = vrot.slane %v3059, %v3090
  %v3092 = vmul.f32 %v3086, %v3091
  %v3093 = vmul.f32 %v3087, %v3091
  %v3094 = vlaneseq
  %v3095 = vshrl.u32 %v3094, 7
  %v3096 = vsub.s32 1, %v3095
  %v3097 = vrot.slane %v3059, %v3096
  %v3098 = vadd.f32 %v3092, %v3097
  %v3099 = vadd.f32 %v3093, %v3097
  %s3100 = scalar_lea.vmem %s4, 384
  %v3101 = vld [vmem:[%s3100] sm:$0xff]
  %v3102 = vld [vmem:[%s3100 + $0x8] sm:$0xff]
  %v3103 = vld [vmem:[%s3100 + $0x10] sm:$0xff]
  %v3104 = vld [vmem:[%s3100 + $0x18] sm:$0xff]
  %v3105 = vld [vmem:[%s3100 + $0x20] sm:$0xff]
  %v3106 = vld [vmem:[%s3100 + $0x28] sm:$0xff]
  %v3107 = vld [vmem:[%s3100 + $0x30] sm:$0xff]
  %v3108 = vld [vmem:[%s3100 + $0x38] sm:$0xff]
  %v3109 = vld [vmem:[%s3100 + $0x40] sm:$0xff]
  %v3110 = vld [vmem:[%s3100 + $0x48] sm:$0xff]
  %v3111 = vld [vmem:[%s3100 + $0x50] sm:$0xff]
  %v3112 = vld [vmem:[%s3100 + $0x58] sm:$0xff]
  %v3113 = vld [vmem:[%s3100 + $0x60] sm:$0xff]
  %v3114 = vld [vmem:[%s3100 + $0x68] sm:$0xff]
  %v3115 = vld [vmem:[%s3100 + $0x70] sm:$0xff]
  %v3116 = vld [vmem:[%s3100 + $0x78] sm:$0xff]
  %v3117 = vpack.c.bf16 %v3099, %v3098
  %v3119 = vlaneseq
  %v3120 = vshrl.u32 %v3119, 7
  %v3121 = vsub.s32 0, %v3120
  %v3122 = vrot.slane %v3061, %v3121
  %v3123 = vlaneseq
  %v3124 = vshrl.u32 %v3123, 7
  %v3125 = vsub.s32 1, %v3124
  %v3126 = vrot.slane %v3061, %v3125
  %v3127 = vlaneseq
  %v3128 = vshrl.u32 %v3127, 7
  %v3129 = vsub.s32 2, %v3128
  %v3130 = vrot.slane %v3061, %v3129
  %v3131 = vlaneseq
  %v3132 = vshrl.u32 %v3131, 7
  %v3133 = vsub.s32 3, %v3132
  %v3134 = vrot.slane %v3061, %v3133
  %v3155 = vunpack.c.l.b16 %v3101
  %v3156 = vunpack.c.h.b16 %v3101
  %v3157 = vunpack.c.l.b16 %v3102
  %v3158 = vunpack.c.h.b16 %v3102
  %v3159 = vunpack.c.l.b16 %v3103
  %v3160 = vunpack.c.h.b16 %v3103
  %v3161 = vunpack.c.l.b16 %v3104
  %v3162 = vunpack.c.h.b16 %v3104
  %v3163 = vunpack.c.l.b16 %v3105
  %v3164 = vunpack.c.h.b16 %v3105
  %v3165 = vunpack.c.l.b16 %v3106
  %v3166 = vunpack.c.h.b16 %v3106
  %v3167 = vunpack.c.l.b16 %v3107
  %v3168 = vunpack.c.h.b16 %v3107
  %v3169 = vunpack.c.l.b16 %v3108
  %v3170 = vunpack.c.h.b16 %v3108
  %v3171 = vunpack.c.l.b16 %v3109
  %v3172 = vunpack.c.h.b16 %v3109
  %v3173 = vunpack.c.l.b16 %v3110
  %v3174 = vunpack.c.h.b16 %v3110
  %v3175 = vunpack.c.l.b16 %v3111
  %v3176 = vunpack.c.h.b16 %v3111
  %v3177 = vunpack.c.l.b16 %v3112
  %v3178 = vunpack.c.h.b16 %v3112
  %v3179 = vunpack.c.l.b16 %v3113
  %v3180 = vunpack.c.h.b16 %v3113
  %v3181 = vunpack.c.l.b16 %v3114
  %v3182 = vunpack.c.h.b16 %v3114
  %v3183 = vunpack.c.l.b16 %v3115
  %v3184 = vunpack.c.h.b16 %v3115
  %v3185 = vunpack.c.l.b16 %v3116
  %v3186 = vunpack.c.h.b16 %v3116
  %v3187 = vpack.c.b16 %v3159, %v3155
  %v3188 = vpack.c.b16 %v3160, %v3156
  %v3189 = vpack.c.b16 %v3161, %v3157
  %v3190 = vpack.c.b16 %v3162, %v3158
  %v3191 = vpack.c.b16 %v3167, %v3163
  %v3192 = vpack.c.b16 %v3168, %v3164
  %v3193 = vpack.c.b16 %v3169, %v3165
  %v3194 = vpack.c.b16 %v3170, %v3166
  %v3195 = vpack.c.b16 %v3175, %v3171
  %v3196 = vpack.c.b16 %v3176, %v3172
  %v3197 = vpack.c.b16 %v3177, %v3173
  %v3198 = vpack.c.b16 %v3178, %v3174
  %v3199 = vpack.c.b16 %v3183, %v3179
  %v3200 = vpack.c.b16 %v3184, %v3180
  %v3201 = vpack.c.b16 %v3185, %v3181
  %v3202 = vpack.c.b16 %v3186, %v3182
  %v3220 = vsel %vm96, %v3117, 0
  %3222 = vmatprep.subr.bf16.mxu0 0
  %3223 = vmatpush1.bf16.msra.mxu0 0
  %3224 = vmatprep.subr.bf16.mxu0 0
  %3225 = vmatpush1.bf16.msra.mxu0 0
  %3226 = vmatprep.subr.bf16.mxu0 0
  %3227 = vmatpush1.bf16.msra.mxu0 0
  %3228 = vmatprep.subr.bf16.mxu0 0
  %3229 = vmatpush1.bf16.msra.mxu0 0
  %3230 = vmatprep.subr.bf16.mxu0 %v3200
  %3231 = vmatpush1.bf16.msra.mxu0 %v3199
  %3232 = vmatprep.subr.bf16.mxu0 %v3196
  %3233 = vmatpush1.bf16.msra.mxu0 %v3195
  %3234 = vmatprep.subr.bf16.mxu0 %v3192
  %3235 = vmatpush1.bf16.msra.mxu0 %v3191
  %3236 = vmatprep.subr.bf16.mxu0 %v3188
  %3237 = vmatpush1.bf16.msra.mxu0 %v3187
  %3238 = vmatprep.subr.bf16.mxu0 0
  %3239 = vmatpush2.bf16.msra.mxu0 0
  %3240 = vmatprep.subr.bf16.mxu0 0
  %3241 = vmatpush2.bf16.msra.mxu0 0
  %3242 = vmatprep.subr.bf16.mxu0 0
  %3243 = vmatpush2.bf16.msra.mxu0 0
  %3244 = vmatprep.subr.bf16.mxu0 0
  %3245 = vmatpush2.bf16.msra.mxu0 0
  %3246 = vmatprep.subr.bf16.mxu0 0
  %3247 = vmatpush2.bf16.msra.mxu0 0
  %3248 = vmatprep.subr.bf16.mxu0 0
  %3249 = vmatpush2.bf16.msra.mxu0 0
  %3250 = vmatprep.subr.bf16.mxu0 0
  %3251 = vmatpush2.bf16.msra.mxu0 0
  %3252 = vmatprep.subr.bf16.mxu0 0
  %3253 = vmatpush2.bf16.msra.mxu0 0
  %3254 = vmatprep.mubr.bf16.mxu0 0
  %3255 = vmatmul.mubr.bf16.gmra.mxu0 %v3220
  %v3256 = vpop.f32.mrf.mxu0
  %v3257 = vadd.f32 %v3122, %v3256
  %v3258 = vpop.f32.mrf.mxu0
  %v3259 = vadd.f32 %v3126, %v3258
  %v3260 = vpop.f32.mrf.mxu0
  %v3261 = vadd.f32 %v3122, %v3260
  %v3262 = vpop.f32.mrf.mxu0
  %v3263 = vadd.f32 %v3126, %v3262
  %3264 = vdwg.mxu0
  %3265 = vmatprep.subr.bf16.mxu0 0
  %3266 = vmatpush1.bf16.msra.mxu0 0
  %3267 = vmatprep.subr.bf16.mxu0 0
  %3268 = vmatpush1.bf16.msra.mxu0 0
  %3269 = vmatprep.subr.bf16.mxu0 0
  %3270 = vmatpush1.bf16.msra.mxu0 0
  %3271 = vmatprep.subr.bf16.mxu0 0
  %3272 = vmatpush1.bf16.msra.mxu0 0
  %3273 = vmatprep.subr.bf16.mxu0 %v3202
  %3274 = vmatpush1.bf16.msra.mxu0 %v3201
  %3275 = vmatprep.subr.bf16.mxu0 %v3198
  %3276 = vmatpush1.bf16.msra.mxu0 %v3197
  %3277 = vmatprep.subr.bf16.mxu0 %v3194
  %3278 = vmatpush1.bf16.msra.mxu0 %v3193
  %3279 = vmatprep.subr.bf16.mxu0 %v3190
  %3280 = vmatpush1.bf16.msra.mxu0 %v3189
  %3281 = vmatprep.subr.bf16.mxu0 0
  %3282 = vmatpush2.bf16.msra.mxu0 0
  %3283 = vmatprep.subr.bf16.mxu0 0
  %3284 = vmatpush2.bf16.msra.mxu0 0
  %3285 = vmatprep.subr.bf16.mxu0 0
  %3286 = vmatpush2.bf16.msra.mxu0 0
  %3287 = vmatprep.subr.bf16.mxu0 0
  %3288 = vmatpush2.bf16.msra.mxu0 0
  %3289 = vmatprep.subr.bf16.mxu0 0
  %3290 = vmatpush2.bf16.msra.mxu0 0
  %3291 = vmatprep.subr.bf16.mxu0 0
  %3292 = vmatpush2.bf16.msra.mxu0 0
  %3293 = vmatprep.subr.bf16.mxu0 0
  %3294 = vmatpush2.bf16.msra.mxu0 0
  %3295 = vmatprep.subr.bf16.mxu0 0
  %3296 = vmatpush2.bf16.msra.mxu0 0
  %3297 = vmatprep.mubr.bf16.mxu0 0
  %3298 = vmatmul.mubr.bf16.gmra.mxu0 %v3220
  %v3299 = vpop.f32.mrf.mxu0
  %v3300 = vadd.f32 %v3130, %v3299
  %v3301 = vpop.f32.mrf.mxu0
  %v3302 = vadd.f32 %v3134, %v3301
  %v3303 = vpop.f32.mrf.mxu0
  %v3304 = vadd.f32 %v3130, %v3303
  %v3305 = vpop.f32.mrf.mxu0
  %v3306 = vadd.f32 %v3134, %v3305
  %3307 = vdwg.mxu0
  %3309 = vrot.lane.b32.xlu0 %v3300, 64
  %v3310 = vpop.permute.xlu0 %3309
  %v3312 = vmul.f32 %v3300, %v3310
  %3314 = vrot.lane.b32.xlu0 %v3304, 64
  %v3315 = vpop.permute.xlu0 %3314
  %v3317 = vmul.f32 %v3300, %v3315
  %v3318 = vmul.f32 %v3304, %v3310
  %v3319 = vmul.f32 %v3304, %v3315
  %v3320 = vpack.c.bf16 %v3317, %v3312
  %v3321 = vpack.c.bf16 %v3319, %v3318
  %v3323 = vsel %vm96, %v3320, 0
  %v3326 = vsel %vm96, %v3321, 0
  %3328 = vmatprep.subr.bf16.mxu0 0
  %3329 = vmatpush1.bf16.msra.mxu0 0
  %3330 = vmatprep.subr.bf16.mxu0 0
  %3331 = vmatpush1.bf16.msra.mxu0 0
  %3332 = vmatprep.subr.bf16.mxu0 0
  %3333 = vmatpush1.bf16.msra.mxu0 0
  %3334 = vmatprep.subr.bf16.mxu0 0
  %3335 = vmatpush1.bf16.msra.mxu0 0
  %3336 = vmatprep.subr.bf16.mxu0 0
  %3337 = vmatpush1.bf16.msra.mxu0 %v422
  %3338 = vmatprep.subr.bf16.mxu0 0
  %3339 = vmatpush1.bf16.msra.mxu0 %v421
  %3340 = vmatprep.subr.bf16.mxu0 0
  %3341 = vmatpush1.bf16.msra.mxu0 %v420
  %3342 = vmatprep.subr.bf16.mxu0 0
  %3343 = vmatpush1.bf16.msra.mxu0 %v419
  %3344 = vmatprep.subr.bf16.mxu0 0
  %3345 = vmatpush2.bf16.msra.mxu0 0
  %3346 = vmatprep.subr.bf16.mxu0 0
  %3347 = vmatpush2.bf16.msra.mxu0 0
  %3348 = vmatprep.subr.bf16.mxu0 0
  %3349 = vmatpush2.bf16.msra.mxu0 0
  %3350 = vmatprep.subr.bf16.mxu0 0
  %3351 = vmatpush2.bf16.msra.mxu0 0
  %3352 = vmatprep.subr.bf16.mxu0 0
  %3353 = vmatpush2.bf16.msra.mxu0 0
  %3354 = vmatprep.subr.bf16.mxu0 0
  %3355 = vmatpush2.bf16.msra.mxu0 0
  %3356 = vmatprep.subr.bf16.mxu0 0
  %3357 = vmatpush2.bf16.msra.mxu0 0
  %3358 = vmatprep.subr.bf16.mxu0 0
  %3359 = vmatpush2.bf16.msra.mxu0 0
  %3360 = vmatprep.mubr.bf16.mxu0 0
  %3361 = vmatmul.mubr.bf16.gmra.mxu0 %v3323
  %v3362 = vpop.f32.mrf.mxu0
  %v3363 = vadd.f32 0.0, %v3362
  %v3364 = vpop.f32.mrf.mxu0
  %v3365 = vpop.f32.mrf.mxu0
  %v3366 = vadd.f32 0.0, %v3365
  %v3367 = vpop.f32.mrf.mxu0
  %3368 = vmatprep.mubr.bf16.mxu0 0
  %3369 = vmatmul.mubr.bf16.gmra.mxu0 %v3326
  %v3370 = vpop.f32.mrf.mxu0
  %v3371 = vadd.f32 0.0, %v3370
  %v3372 = vpop.f32.mrf.mxu0
  %v3373 = vpop.f32.mrf.mxu0
  %v3374 = vadd.f32 0.0, %v3373
  %v3375 = vpop.f32.mrf.mxu0
  %3376 = vdwg.mxu0
  %v3377 = vmax.f32 %v3363, %v3366
  %v3378 = vsub.f32 %v3363, %v3377
  %v3379 = vmul.f32 %v3378, 1.442695
  %v3380 = vpow.pop %v3379
  %v3381 = vsub.f32 %v3366, %v3377
  %v3382 = vmul.f32 %v3381, 1.442695
  %v3383 = vpow.pop %v3382
  %v3384 = vmul.f32 %v3380, %v3302
  %v3385 = vadd.f32 %v3380, %v3383
  %v3386 = vmul.f32 %v3383, %v3306
  %v3387 = vadd.f32 %v3384, %v3386
  %v3388 = vrcp.pop %v3385
  %v3389 = vmul.f32 %v3387, %v3388
  %v3390 = vmax.f32 %v3371, %v3374
  %v3391 = vsub.f32 %v3371, %v3390
  %v3392 = vmul.f32 %v3391, 1.442695
  %v3393 = vpow.pop %v3392
  %v3394 = vsub.f32 %v3374, %v3390
  %v3395 = vmul.f32 %v3394, 1.442695
  %v3396 = vpow.pop %v3395
  %v3397 = vmul.f32 %v3393, %v3302
  %v3398 = vadd.f32 %v3393, %v3396
  %v3399 = vmul.f32 %v3396, %v3306
  %v3400 = vadd.f32 %v3397, %v3399
  %v3401 = vrcp.pop %v3398
  %v3402 = vmul.f32 %v3400, %v3401
  %s3403 = scalar_lea.vmem %s6, 96
  %v3404 = vld [vmem:[%s3403] sm:$0xf]
  %v3405 = vld [vmem:[%s3403 + $0x4] sm:$0xf]
  %v3406 = vld [vmem:[%s3403 + $0x8] sm:$0xf]
  %v3407 = vld [vmem:[%s3403 + $0xc] sm:$0xf]
  %v3408 = vld [vmem:[%s3403 + $0x10] sm:$0xf]
  %v3409 = vld [vmem:[%s3403 + $0x14] sm:$0xf]
  %v3410 = vld [vmem:[%s3403 + $0x18] sm:$0xf]
  %v3411 = vld [vmem:[%s3403 + $0x1c] sm:$0xf]
  %v3412 = vpack.c.bf16 %v3402, %v3389
  %v3421 = vunpack.c.l.b16 %v3404
  %v3422 = vunpack.c.l.b16 %v3405
  %v3423 = vunpack.c.l.b16 %v3406
  %v3424 = vunpack.c.l.b16 %v3407
  %v3425 = vunpack.c.l.b16 %v3408
  %v3426 = vunpack.c.l.b16 %v3409
  %v3427 = vunpack.c.l.b16 %v3410
  %v3428 = vunpack.c.l.b16 %v3411
  %v3429 = vpack.c.b16 %v3422, %v3421
  %v3430 = vpack.c.b16 %v3424, %v3423
  %v3431 = vpack.c.b16 %v3426, %v3425
  %v3432 = vpack.c.b16 %v3428, %v3427
  %v3438 = vsel %vm96, %v3412, 0
  %3440 = vmatprep.subr.bf16.mxu0 0
  %3441 = vmatpush1.bf16.msra.mxu0 0
  %3442 = vmatprep.subr.bf16.mxu0 0
  %3443 = vmatpush1.bf16.msra.mxu0 0
  %3444 = vmatprep.subr.bf16.mxu0 0
  %3445 = vmatpush1.bf16.msra.mxu0 0
  %3446 = vmatprep.subr.bf16.mxu0 0
  %3447 = vmatpush1.bf16.msra.mxu0 0
  %3448 = vmatprep.subr.bf16.mxu0 0
  %3449 = vmatpush1.bf16.msra.mxu0 %v3432
  %3450 = vmatprep.subr.bf16.mxu0 0
  %3451 = vmatpush1.bf16.msra.mxu0 %v3431
  %3452 = vmatprep.subr.bf16.mxu0 0
  %3453 = vmatpush1.bf16.msra.mxu0 %v3430
  %3454 = vmatprep.subr.bf16.mxu0 0
  %3455 = vmatpush1.bf16.msra.mxu0 %v3429
  %3456 = vmatprep.subr.bf16.mxu0 0
  %3457 = vmatpush2.bf16.msra.mxu0 0
  %3458 = vmatprep.subr.bf16.mxu0 0
  %3459 = vmatpush2.bf16.msra.mxu0 0
  %3460 = vmatprep.subr.bf16.mxu0 0
  %3461 = vmatpush2.bf16.msra.mxu0 0
  %3462 = vmatprep.subr.bf16.mxu0 0
  %3463 = vmatpush2.bf16.msra.mxu0 0
  %3464 = vmatprep.subr.bf16.mxu0 0
  %3465 = vmatpush2.bf16.msra.mxu0 0
  %3466 = vmatprep.subr.bf16.mxu0 0
  %3467 = vmatpush2.bf16.msra.mxu0 0
  %3468 = vmatprep.subr.bf16.mxu0 0
  %3469 = vmatpush2.bf16.msra.mxu0 0
  %3470 = vmatprep.subr.bf16.mxu0 0
  %3471 = vmatpush2.bf16.msra.mxu0 0
  %3472 = vmatprep.mubr.bf16.mxu0 0
  %3473 = vmatmul.mubr.bf16.gmra.mxu0 %v3438
  %v3474 = vpop.f32.mrf.mxu0
  %v3475 = vadd.f32 0.0, %v3474
  %v3476 = vpop.f32.mrf.mxu0
  %v3477 = vpop.f32.mrf.mxu0
  %v3478 = vadd.f32 0.0, %v3477
  %v3479 = vpop.f32.mrf.mxu0
  %3480 = vdwg.mxu0
  %v3481 = vadd.f32 %v3056, %v3475
  %v3482 = vadd.f32 %v3057, %v3478
  %v3483 = vlaneseq
  %v3484 = vshrl.u32 %v3483, 7
  %v3485 = vsub.s32 2, %v3484
  %v3486 = vrot.slane %v3059, %v3485
  %v3487 = vadd.f32 %v3481, %v3486
  %v3488 = vadd.f32 %v3482, %v3486
  %v3489 = vmul.f32 %v3257, 0.5
  %v3490 = vmul.f32 %v3259, 0.5
  %v3491 = vmul.f32 %v3261, 0.5
  %v3492 = vmul.f32 %v3263, 0.5
  %v3493 = vmul.f32 %v3257, 0.70710677
  %v3494 = vmul.f32 %v3259, 0.70710677
  %v3495 = vmul.f32 %v3261, 0.70710677
  %v3496 = vmul.f32 %v3263, 0.70710677
  %v3497 = vand.u32 2147483647, %v3493
  %v3498 = vand.u32 2147483647, %v3494
  %v3499 = vand.u32 2147483647, %v3495
  %v3500 = vand.u32 2147483647, %v3496
  %v3501 = vmul.f32 %v3497, 0.3275911
  %v3502 = vmul.f32 %v3498, 0.3275911
  %v3503 = vmul.f32 %v3499, 0.3275911
  %v3504 = vmul.f32 %v3500, 0.3275911
  %v3505 = vadd.f32 %v3501, 1.0
  %v3506 = vadd.f32 %v3502, 1.0
  %v3507 = vadd.f32 %v3503, 1.0
  %v3508 = vadd.f32 %v3504, 1.0
  %v3509 = vrcp.pop %v3505
  %v3510 = vmul.f32 1.0, %v3509
  %v3511 = vrcp.pop %v3506
  %v3512 = vmul.f32 1.0, %v3511
  %v3513 = vrcp.pop %v3507
  %v3514 = vmul.f32 1.0, %v3513
  %v3515 = vrcp.pop %v3508
  %v3516 = vmul.f32 1.0, %v3515
  %v3517 = vmul.f32 %v3510, 1.0614054
  %v3518 = vmul.f32 %v3512, 1.0614054
  %v3519 = vmul.f32 %v3514, 1.0614054
  %v3520 = vmul.f32 %v3516, 1.0614054
  %v3521 = vadd.f32 %v3517, -1.4531521
  %v3522 = vadd.f32 %v3518, -1.4531521
  %v3523 = vadd.f32 %v3519, -1.4531521
  %v3524 = vadd.f32 %v3520, -1.4531521
  %v3525 = vmul.f32 %v3510, %v3521
  %v3526 = vmul.f32 %v3512, %v3522
  %v3527 = vmul.f32 %v3514, %v3523
  %v3528 = vmul.f32 %v3516, %v3524
  %v3529 = vadd.f32 %v3525, 1.4214138
  %v3530 = vadd.f32 %v3526, 1.4214138
  %v3531 = vadd.f32 %v3527, 1.4214138
  %v3532 = vadd.f32 %v3528, 1.4214138
  %v3533 = vmul.f32 %v3510, %v3529
  %v3534 = vmul.f32 %v3512, %v3530
  %v3535 = vmul.f32 %v3514, %v3531
  %v3536 = vmul.f32 %v3516, %v3532
  %v3537 = vadd.f32 %v3533, -0.28449672
  %v3538 = vadd.f32 %v3534, -0.28449672
  %v3539 = vadd.f32 %v3535, -0.28449672
  %v3540 = vadd.f32 %v3536, -0.28449672
  %v3541 = vmul.f32 %v3510, %v3537
  %v3542 = vmul.f32 %v3512, %v3538
  %v3543 = vmul.f32 %v3514, %v3539
  %v3544 = vmul.f32 %v3516, %v3540
  %v3545 = vadd.f32 %v3541, 0.2548296
  %v3546 = vadd.f32 %v3542, 0.2548296
  %v3547 = vadd.f32 %v3543, 0.2548296
  %v3548 = vadd.f32 %v3544, 0.2548296
  %v3549 = vmul.f32 %v3510, %v3545
  %v3550 = vmul.f32 %v3512, %v3546
  %v3551 = vmul.f32 %v3514, %v3547
  %v3552 = vmul.f32 %v3516, %v3548
  %v3553 = vsub.f32 0.0, %v3497
  %v3554 = vsub.f32 0.0, %v3498
  %v3555 = vsub.f32 0.0, %v3499
  %v3556 = vsub.f32 0.0, %v3500
  %v3557 = vmul.f32 %v3553, %v3497
  %v3558 = vmul.f32 %v3554, %v3498
  %v3559 = vmul.f32 %v3555, %v3499
  %v3560 = vmul.f32 %v3556, %v3500
  %v3561 = vmul.f32 %v3557, 1.442695
  %v3562 = vpow.pop %v3561
  %v3563 = vmul.f32 %v3558, 1.442695
  %v3564 = vpow.pop %v3563
  %v3565 = vmul.f32 %v3559, 1.442695
  %v3566 = vpow.pop %v3565
  %v3567 = vmul.f32 %v3560, 1.442695
  %v3568 = vpow.pop %v3567
  %v3569 = vmul.f32 %v3549, %v3562
  %v3570 = vmul.f32 %v3550, %v3564
  %v3571 = vmul.f32 %v3551, %v3566
  %v3572 = vmul.f32 %v3552, %v3568
  %v3573 = vsub.f32 1.0, %v3569
  %v3574 = vsub.f32 1.0, %v3570
  %v3575 = vsub.f32 1.0, %v3571
  %v3576 = vsub.f32 1.0, %v3572
  %vm3577 = vcmp.ge.f32.partialorder %v3493, 0.0
  %vm3578 = vcmp.ge.f32.partialorder %v3494, 0.0
  %vm3579 = vcmp.ge.f32.partialorder %v3495, 0.0
  %vm3580 = vcmp.ge.f32.partialorder %v3496, 0.0
  %v3581 = vsub.f32 0.0, %v3573
  %v3582 = vsub.f32 0.0, %v3574
  %v3583 = vsub.f32 0.0, %v3575
  %v3584 = vsub.f32 0.0, %v3576
  %v3585 = vsel %vm3577, %v3573, %v3581
  %v3586 = vsel %vm3578, %v3574, %v3582
  %v3587 = vsel %vm3579, %v3575, %v3583
  %v3588 = vsel %vm3580, %v3576, %v3584
  %v3589 = vadd.f32 %v3585, 1.0
  %v3590 = vadd.f32 %v3586, 1.0
  %v3591 = vadd.f32 %v3587, 1.0
  %v3592 = vadd.f32 %v3588, 1.0
  %v3593 = vmul.f32 %v3489, %v3589
  %v3594 = vmul.f32 %v3490, %v3590
  %v3595 = vmul.f32 %v3491, %v3591
  %v3596 = vmul.f32 %v3492, %v3592
  %s3597 = scalar_lea.vmem %s8, 384
  %v3598 = vld [vmem:[%s3597] sm:$0xf]
  %v3599 = vld [vmem:[%s3597 + $0x4] sm:$0xf]
  %v3600 = vld [vmem:[%s3597 + $0x8] sm:$0xf]
  %v3601 = vld [vmem:[%s3597 + $0xc] sm:$0xf]
  %v3602 = vld [vmem:[%s3597 + $0x10] sm:$0xf]
  %v3603 = vld [vmem:[%s3597 + $0x14] sm:$0xf]
  %v3604 = vld [vmem:[%s3597 + $0x18] sm:$0xf]
  %v3605 = vld [vmem:[%s3597 + $0x1c] sm:$0xf]
  %v3606 = vld [vmem:[%s3597 + $0x20] sm:$0xf]
  %v3607 = vld [vmem:[%s3597 + $0x24] sm:$0xf]
  %v3608 = vld [vmem:[%s3597 + $0x28] sm:$0xf]
  %v3609 = vld [vmem:[%s3597 + $0x2c] sm:$0xf]
  %v3610 = vld [vmem:[%s3597 + $0x30] sm:$0xf]
  %v3611 = vld [vmem:[%s3597 + $0x34] sm:$0xf]
  %v3612 = vld [vmem:[%s3597 + $0x38] sm:$0xf]
  %v3613 = vld [vmem:[%s3597 + $0x3c] sm:$0xf]
  %v3614 = vld [vmem:[%s3597 + $0x40] sm:$0xf]
  %v3615 = vld [vmem:[%s3597 + $0x44] sm:$0xf]
  %v3616 = vld [vmem:[%s3597 + $0x48] sm:$0xf]
  %v3617 = vld [vmem:[%s3597 + $0x4c] sm:$0xf]
  %v3618 = vld [vmem:[%s3597 + $0x50] sm:$0xf]
  %v3619 = vld [vmem:[%s3597 + $0x54] sm:$0xf]
  %v3620 = vld [vmem:[%s3597 + $0x58] sm:$0xf]
  %v3621 = vld [vmem:[%s3597 + $0x5c] sm:$0xf]
  %v3622 = vld [vmem:[%s3597 + $0x60] sm:$0xf]
  %v3623 = vld [vmem:[%s3597 + $0x64] sm:$0xf]
  %v3624 = vld [vmem:[%s3597 + $0x68] sm:$0xf]
  %v3625 = vld [vmem:[%s3597 + $0x6c] sm:$0xf]
  %v3626 = vld [vmem:[%s3597 + $0x70] sm:$0xf]
  %v3627 = vld [vmem:[%s3597 + $0x74] sm:$0xf]
  %v3628 = vld [vmem:[%s3597 + $0x78] sm:$0xf]
  %v3629 = vld [vmem:[%s3597 + $0x7c] sm:$0xf]
  %v3630 = vpack.c.bf16 %v3595, %v3593
  %v3631 = vpack.c.bf16 %v3596, %v3594
  %v3632 = vlaneseq
  %v3633 = vshrl.u32 %v3632, 7
  %v3634 = vsub.s32 3, %v3633
  %v3635 = vrot.slane %v3059, %v3634
  %v3668 = vunpack.c.l.b16 %v3598
  %v3669 = vunpack.c.l.b16 %v3599
  %v3670 = vunpack.c.l.b16 %v3600
  %v3671 = vunpack.c.l.b16 %v3601
  %v3672 = vunpack.c.l.b16 %v3602
  %v3673 = vunpack.c.l.b16 %v3603
  %v3674 = vunpack.c.l.b16 %v3604
  %v3675 = vunpack.c.l.b16 %v3605
  %v3676 = vunpack.c.l.b16 %v3606
  %v3677 = vunpack.c.l.b16 %v3607
  %v3678 = vunpack.c.l.b16 %v3608
  %v3679 = vunpack.c.l.b16 %v3609
  %v3680 = vunpack.c.l.b16 %v3610
  %v3681 = vunpack.c.l.b16 %v3611
  %v3682 = vunpack.c.l.b16 %v3612
  %v3683 = vunpack.c.l.b16 %v3613
  %v3684 = vunpack.c.l.b16 %v3614
  %v3685 = vunpack.c.l.b16 %v3615
  %v3686 = vunpack.c.l.b16 %v3616
  %v3687 = vunpack.c.l.b16 %v3617
  %v3688 = vunpack.c.l.b16 %v3618
  %v3689 = vunpack.c.l.b16 %v3619
  %v3690 = vunpack.c.l.b16 %v3620
  %v3691 = vunpack.c.l.b16 %v3621
  %v3692 = vunpack.c.l.b16 %v3622
  %v3693 = vunpack.c.l.b16 %v3623
  %v3694 = vunpack.c.l.b16 %v3624
  %v3695 = vunpack.c.l.b16 %v3625
  %v3696 = vunpack.c.l.b16 %v3626
  %v3697 = vunpack.c.l.b16 %v3627
  %v3698 = vunpack.c.l.b16 %v3628
  %v3699 = vunpack.c.l.b16 %v3629
  %v3700 = vpack.c.b16 %v3669, %v3668
  %v3701 = vpack.c.b16 %v3671, %v3670
  %v3702 = vpack.c.b16 %v3673, %v3672
  %v3703 = vpack.c.b16 %v3675, %v3674
  %v3704 = vpack.c.b16 %v3677, %v3676
  %v3705 = vpack.c.b16 %v3679, %v3678
  %v3706 = vpack.c.b16 %v3681, %v3680
  %v3707 = vpack.c.b16 %v3683, %v3682
  %v3708 = vpack.c.b16 %v3685, %v3684
  %v3709 = vpack.c.b16 %v3687, %v3686
  %v3710 = vpack.c.b16 %v3689, %v3688
  %v3711 = vpack.c.b16 %v3691, %v3690
  %v3712 = vpack.c.b16 %v3693, %v3692
  %v3713 = vpack.c.b16 %v3695, %v3694
  %v3714 = vpack.c.b16 %v3697, %v3696
  %v3715 = vpack.c.b16 %v3699, %v3698
  %3732 = vmatprep.subr.bf16.mxu0 0
  %3733 = vmatpush1.bf16.msra.mxu0 %v3707
  %3734 = vmatprep.subr.bf16.mxu0 0
  %3735 = vmatpush1.bf16.msra.mxu0 %v3706
  %3736 = vmatprep.subr.bf16.mxu0 0
  %3737 = vmatpush1.bf16.msra.mxu0 %v3705
  %3738 = vmatprep.subr.bf16.mxu0 0
  %3739 = vmatpush1.bf16.msra.mxu0 %v3704
  %3740 = vmatprep.subr.bf16.mxu0 0
  %3741 = vmatpush1.bf16.msra.mxu0 %v3703
  %3742 = vmatprep.subr.bf16.mxu0 0
  %3743 = vmatpush1.bf16.msra.mxu0 %v3702
  %3744 = vmatprep.subr.bf16.mxu0 0
  %3745 = vmatpush1.bf16.msra.mxu0 %v3701
  %3746 = vmatprep.subr.bf16.mxu0 0
  %3747 = vmatpush1.bf16.msra.mxu0 %v3700
  %3748 = vmatprep.subr.bf16.mxu0 0
  %3749 = vmatpush2.bf16.msra.mxu0 %v3715
  %3750 = vmatprep.subr.bf16.mxu0 0
  %3751 = vmatpush2.bf16.msra.mxu0 %v3714
  %3752 = vmatprep.subr.bf16.mxu0 0
  %3753 = vmatpush2.bf16.msra.mxu0 %v3713
  %3754 = vmatprep.subr.bf16.mxu0 0
  %3755 = vmatpush2.bf16.msra.mxu0 %v3712
  %3756 = vmatprep.subr.bf16.mxu0 0
  %3757 = vmatpush2.bf16.msra.mxu0 %v3711
  %3758 = vmatprep.subr.bf16.mxu0 0
  %3759 = vmatpush2.bf16.msra.mxu0 %v3710
  %3760 = vmatprep.subr.bf16.mxu0 0
  %3761 = vmatpush2.bf16.msra.mxu0 %v3709
  %3762 = vmatprep.subr.bf16.mxu0 0
  %3763 = vmatpush2.bf16.msra.mxu0 %v3708
  %3764 = vmatprep.mubr.bf16.mxu0 %v3631
  %3765 = vmatmul.mubr.bf16.gmra.mxu0 %v3630
  %v3766 = vpop.f32.mrf.mxu0
  %v3767 = vadd.f32 %v3635, %v3766
  %v3768 = vpop.f32.mrf.mxu0
  %v3769 = vpop.f32.mrf.mxu0
  %v3770 = vadd.f32 %v3635, %v3769
  %v3771 = vpop.f32.mrf.mxu0
  %3772 = vdwg.mxu0
  %v3773 = vadd.f32 %v3487, %v3767
  %v3774 = vadd.f32 %v3488, %v3770
  %s3775 = scalar_lea.vmem %s7, 192
  %v3776 = vld [vmem:[%s3775] sm:$0xff]
  %v3777 = vld [vmem:[%s3775 + $0x8] sm:$0xff]
  %v3778 = vld [vmem:[%s3775 + $0x10] sm:$0xff]
  %v3779 = vld [vmem:[%s3775 + $0x18] sm:$0xff]
  %v3780 = vld [vmem:[%s3775 + $0x20] sm:$0xff]
  %v3781 = vld [vmem:[%s3775 + $0x28] sm:$0xff]
  %v3782 = vld [vmem:[%s3775 + $0x30] sm:$0xff]
  %v3783 = vld [vmem:[%s3775 + $0x38] sm:$0xff]
  %v3784 = vpack.c.bf16 %v3774, %v3773
  %v3793 = vunpack.c.l.b16 %v3776
  %v3794 = vunpack.c.h.b16 %v3776
  %v3795 = vunpack.c.l.b16 %v3777
  %v3796 = vunpack.c.h.b16 %v3777
  %v3797 = vunpack.c.l.b16 %v3778
  %v3798 = vunpack.c.h.b16 %v3778
  %v3799 = vunpack.c.l.b16 %v3779
  %v3800 = vunpack.c.h.b16 %v3779
  %v3801 = vunpack.c.l.b16 %v3780
  %v3802 = vunpack.c.h.b16 %v3780
  %v3803 = vunpack.c.l.b16 %v3781
  %v3804 = vunpack.c.h.b16 %v3781
  %v3805 = vunpack.c.l.b16 %v3782
  %v3806 = vunpack.c.h.b16 %v3782
  %v3807 = vunpack.c.l.b16 %v3783
  %v3808 = vunpack.c.h.b16 %v3783
  %v3809 = vpack.c.b16 %v3795, %v3793
  %v3810 = vpack.c.b16 %v3796, %v3794
  %v3811 = vpack.c.b16 %v3799, %v3797
  %v3812 = vpack.c.b16 %v3800, %v3798
  %v3813 = vpack.c.b16 %v3803, %v3801
  %v3814 = vpack.c.b16 %v3804, %v3802
  %v3815 = vpack.c.b16 %v3807, %v3805
  %v3816 = vpack.c.b16 %v3808, %v3806
  %v3826 = vsel %vm96, %v3784, 0
  %3828 = vmatprep.subr.bf16.mxu0 0
  %3829 = vmatpush1.bf16.msra.mxu0 0
  %3830 = vmatprep.subr.bf16.mxu0 0
  %3831 = vmatpush1.bf16.msra.mxu0 0
  %3832 = vmatprep.subr.bf16.mxu0 0
  %3833 = vmatpush1.bf16.msra.mxu0 0
  %3834 = vmatprep.subr.bf16.mxu0 0
  %3835 = vmatpush1.bf16.msra.mxu0 0
  %3836 = vmatprep.subr.bf16.mxu0 %v3816
  %3837 = vmatpush1.bf16.msra.mxu0 %v3815
  %3838 = vmatprep.subr.bf16.mxu0 %v3814
  %3839 = vmatpush1.bf16.msra.mxu0 %v3813
  %3840 = vmatprep.subr.bf16.mxu0 %v3812
  %3841 = vmatpush1.bf16.msra.mxu0 %v3811
  %3842 = vmatprep.subr.bf16.mxu0 %v3810
  %3843 = vmatpush1.bf16.msra.mxu0 %v3809
  %3844 = vmatprep.subr.bf16.mxu0 0
  %3845 = vmatpush2.bf16.msra.mxu0 0
  %3846 = vmatprep.subr.bf16.mxu0 0
  %3847 = vmatpush2.bf16.msra.mxu0 0
  %3848 = vmatprep.subr.bf16.mxu0 0
  %3849 = vmatpush2.bf16.msra.mxu0 0
  %3850 = vmatprep.subr.bf16.mxu0 0
  %3851 = vmatpush2.bf16.msra.mxu0 0
  %3852 = vmatprep.subr.bf16.mxu0 0
  %3853 = vmatpush2.bf16.msra.mxu0 0
  %3854 = vmatprep.subr.bf16.mxu0 0
  %3855 = vmatpush2.bf16.msra.mxu0 0
  %3856 = vmatprep.subr.bf16.mxu0 0
  %3857 = vmatpush2.bf16.msra.mxu0 0
  %3858 = vmatprep.subr.bf16.mxu0 0
  %3859 = vmatpush2.bf16.msra.mxu0 0
  %3860 = vmatprep.mubr.bf16.mxu0 0
  %3861 = vmatmul.mubr.bf16.gmra.mxu0 %v3826
  %v3862 = vpop.f32.mrf.mxu0
  %v3863 = vadd.f32 %v3122, %v3862
  %v3864 = vpop.f32.mrf.mxu0
  %v3865 = vadd.f32 %v3126, %v3864
  %v3866 = vpop.f32.mrf.mxu0
  %v3867 = vadd.f32 %v3122, %v3866
  %v3868 = vpop.f32.mrf.mxu0
  %v3869 = vadd.f32 %v3126, %v3868
  %3870 = vdwg.mxu0
  %v3871 = vmul.f32 %v3863, 0.5
  %v3872 = vmul.f32 %v3865, 0.5
  %v3873 = vmul.f32 %v3867, 0.5
  %v3874 = vmul.f32 %v3869, 0.5
  %v3875 = vmul.f32 %v3863, 0.70710677
  %v3876 = vmul.f32 %v3865, 0.70710677
  %v3877 = vmul.f32 %v3867, 0.70710677
  %v3878 = vmul.f32 %v3869, 0.70710677
  %v3879 = vand.u32 2147483647, %v3875
  %v3880 = vand.u32 2147483647, %v3876
  %v3881 = vand.u32 2147483647, %v3877
  %v3882 = vand.u32 2147483647, %v3878
  %v3883 = vmul.f32 %v3879, 0.3275911
  %v3884 = vmul.f32 %v3880, 0.3275911
  %v3885 = vmul.f32 %v3881, 0.3275911
  %v3886 = vmul.f32 %v3882, 0.3275911
  %v3887 = vadd.f32 %v3883, 1.0
  %v3888 = vadd.f32 %v3884, 1.0
  %v3889 = vadd.f32 %v3885, 1.0
  %v3890 = vadd.f32 %v3886, 1.0
  %v3891 = vrcp.pop %v3887
  %v3892 = vmul.f32 1.0, %v3891
  %v3893 = vrcp.pop %v3888
  %v3894 = vmul.f32 1.0, %v3893
  %v3895 = vrcp.pop %v3889
  %v3896 = vmul.f32 1.0, %v3895
  %v3897 = vrcp.pop %v3890
  %v3898 = vmul.f32 1.0, %v3897
  %v3899 = vmul.f32 %v3892, 1.0614054
  %v3900 = vmul.f32 %v3894, 1.0614054
  %v3901 = vmul.f32 %v3896, 1.0614054
  %v3902 = vmul.f32 %v3898, 1.0614054
  %v3903 = vadd.f32 %v3899, -1.4531521
  %v3904 = vadd.f32 %v3900, -1.4531521
  %v3905 = vadd.f32 %v3901, -1.4531521
  %v3906 = vadd.f32 %v3902, -1.4531521
  %v3907 = vmul.f32 %v3892, %v3903
  %v3908 = vmul.f32 %v3894, %v3904
  %v3909 = vmul.f32 %v3896, %v3905
  %v3910 = vmul.f32 %v3898, %v3906
  %v3911 = vadd.f32 %v3907, 1.4214138
  %v3912 = vadd.f32 %v3908, 1.4214138
  %v3913 = vadd.f32 %v3909, 1.4214138
  %v3914 = vadd.f32 %v3910, 1.4214138
  %v3915 = vmul.f32 %v3892, %v3911
  %v3916 = vmul.f32 %v3894, %v3912
  %v3917 = vmul.f32 %v3896, %v3913
  %v3918 = vmul.f32 %v3898, %v3914
  %v3919 = vadd.f32 %v3915, -0.28449672
  %v3920 = vadd.f32 %v3916, -0.28449672
  %v3921 = vadd.f32 %v3917, -0.28449672
  %v3922 = vadd.f32 %v3918, -0.28449672
  %v3923 = vmul.f32 %v3892, %v3919
  %v3924 = vmul.f32 %v3894, %v3920
  %v3925 = vmul.f32 %v3896, %v3921
  %v3926 = vmul.f32 %v3898, %v3922
  %v3927 = vadd.f32 %v3923, 0.2548296
  %v3928 = vadd.f32 %v3924, 0.2548296
  %v3929 = vadd.f32 %v3925, 0.2548296
  %v3930 = vadd.f32 %v3926, 0.2548296
  %v3931 = vmul.f32 %v3892, %v3927
  %v3932 = vmul.f32 %v3894, %v3928
  %v3933 = vmul.f32 %v3896, %v3929
  %v3934 = vmul.f32 %v3898, %v3930
  %v3935 = vsub.f32 0.0, %v3879
  %v3936 = vsub.f32 0.0, %v3880
  %v3937 = vsub.f32 0.0, %v3881
  %v3938 = vsub.f32 0.0, %v3882
  %v3939 = vmul.f32 %v3935, %v3879
  %v3940 = vmul.f32 %v3936, %v3880
  %v3941 = vmul.f32 %v3937, %v3881
  %v3942 = vmul.f32 %v3938, %v3882
  %v3943 = vmul.f32 %v3939, 1.442695
  %v3944 = vpow.pop %v3943
  %v3945 = vmul.f32 %v3940, 1.442695
  %v3946 = vpow.pop %v3945
  %v3947 = vmul.f32 %v3941, 1.442695
  %v3948 = vpow.pop %v3947
  %v3949 = vmul.f32 %v3942, 1.442695
  %v3950 = vpow.pop %v3949
  %v3951 = vmul.f32 %v3931, %v3944
  %v3952 = vmul.f32 %v3932, %v3946
  %v3953 = vmul.f32 %v3933, %v3948
  %v3954 = vmul.f32 %v3934, %v3950
  %v3955 = vsub.f32 1.0, %v3951
  %v3956 = vsub.f32 1.0, %v3952
  %v3957 = vsub.f32 1.0, %v3953
  %v3958 = vsub.f32 1.0, %v3954
  %vm3959 = vcmp.ge.f32.partialorder %v3875, 0.0
  %vm3960 = vcmp.ge.f32.partialorder %v3876, 0.0
  %vm3961 = vcmp.ge.f32.partialorder %v3877, 0.0
  %vm3962 = vcmp.ge.f32.partialorder %v3878, 0.0
  %v3963 = vsub.f32 0.0, %v3955
  %v3964 = vsub.f32 0.0, %v3956
  %v3965 = vsub.f32 0.0, %v3957
  %v3966 = vsub.f32 0.0, %v3958
  %v3967 = vsel %vm3959, %v3955, %v3963
  %v3968 = vsel %vm3960, %v3956, %v3964
  %v3969 = vsel %vm3961, %v3957, %v3965
  %v3970 = vsel %vm3962, %v3958, %v3966
  %v3971 = vadd.f32 %v3967, 1.0
  %v3972 = vadd.f32 %v3968, 1.0
  %v3973 = vadd.f32 %v3969, 1.0
  %v3974 = vadd.f32 %v3970, 1.0
  %v3975 = vmul.f32 %v3871, %v3971
  %v3976 = vmul.f32 %v3872, %v3972
  %v3977 = vmul.f32 %v3873, %v3973
  %v3978 = vmul.f32 %v3874, %v3974
  %v3979 = vpack.c.bf16 %v3977, %v3975
  %v3980 = vpack.c.bf16 %v3978, %v3976
  %3981 = vmatprep.subr.bf16.mxu0 0
  %3982 = vmatpush1.bf16.msra.mxu0 %v3707
  %3983 = vmatprep.subr.bf16.mxu0 0
  %3984 = vmatpush1.bf16.msra.mxu0 %v3706
  %3985 = vmatprep.subr.bf16.mxu0 0
  %3986 = vmatpush1.bf16.msra.mxu0 %v3705
  %3987 = vmatprep.subr.bf16.mxu0 0
  %3988 = vmatpush1.bf16.msra.mxu0 %v3704
  %3989 = vmatprep.subr.bf16.mxu0 0
  %3990 = vmatpush1.bf16.msra.mxu0 %v3703
  %3991 = vmatprep.subr.bf16.mxu0 0
  %3992 = vmatpush1.bf16.msra.mxu0 %v3702
  %3993 = vmatprep.subr.bf16.mxu0 0
  %3994 = vmatpush1.bf16.msra.mxu0 %v3701
  %3995 = vmatprep.subr.bf16.mxu0 0
  %3996 = vmatpush1.bf16.msra.mxu0 %v3700
  %3997 = vmatprep.subr.bf16.mxu0 0
  %3998 = vmatpush2.bf16.msra.mxu0 %v3715
  %3999 = vmatprep.subr.bf16.mxu0 0
  %4000 = vmatpush2.bf16.msra.mxu0 %v3714
  %4001 = vmatprep.subr.bf16.mxu0 0
  %4002 = vmatpush2.bf16.msra.mxu0 %v3713
  %4003 = vmatprep.subr.bf16.mxu0 0
  %4004 = vmatpush2.bf16.msra.mxu0 %v3712
  %4005 = vmatprep.subr.bf16.mxu0 0
  %4006 = vmatpush2.bf16.msra.mxu0 %v3711
  %4007 = vmatprep.subr.bf16.mxu0 0
  %4008 = vmatpush2.bf16.msra.mxu0 %v3710
  %4009 = vmatprep.subr.bf16.mxu0 0
  %4010 = vmatpush2.bf16.msra.mxu0 %v3709
  %4011 = vmatprep.subr.bf16.mxu0 0
  %4012 = vmatpush2.bf16.msra.mxu0 %v3708
  %4013 = vmatprep.mubr.bf16.mxu0 %v3980
  %4014 = vmatmul.mubr.bf16.gmra.mxu0 %v3979
  %v4015 = vpop.f32.mrf.mxu0
  %v4016 = vadd.f32 %v3635, %v4015
  %v4017 = vpop.f32.mrf.mxu0
  %v4018 = vpop.f32.mrf.mxu0
  %v4019 = vadd.f32 %v3635, %v4018
  %v4020 = vpop.f32.mrf.mxu0
  %4021 = vdwg.mxu0
  %v4022 = vadd.f32 %v3773, %v4016
  %v4023 = vadd.f32 %v3774, %v4019
  %v4024 = vld [vmem:[%s1] sm:$0xff]
  %v4025 = vld [vmem:[%s1 + $0x8] sm:$0xff]
  %v4026 = vld [vmem:[%s11] sm:$0xf]
  %v4027 = vpack.c.bf16 %v4023, %v4022
  %vm4028 = vcmask 130048
  %v4030 = vsel %vm4028, %v4026, 0
  %4032 = vmatprep.subr.bf16.mxu0 0
  %4033 = vmatpush1.bf16.msra.mxu0 0
  %4034 = vmatprep.subr.bf16.mxu0 0
  %4035 = vmatpush1.bf16.msra.mxu0 0
  %4036 = vmatprep.subr.bf16.mxu0 0
  %4037 = vmatpush1.bf16.msra.mxu0 0
  %4038 = vmatprep.subr.bf16.mxu0 0
  %4039 = vmatpush1.bf16.msra.mxu0 0
  %4040 = vmatprep.subr.bf16.mxu0 0
  %4041 = vmatpush1.bf16.msra.mxu0 0
  %4042 = vmatprep.subr.bf16.mxu0 0
  %4043 = vmatpush1.bf16.msra.mxu0 0
  %4044 = vmatprep.subr.bf16.mxu0 0
  %4045 = vmatpush1.bf16.msra.mxu0 0
  %4046 = vmatprep.subr.bf16.mxu0 0
  %4047 = vmatpush1.bf16.msra.mxu0 %v4027
  %4048 = vmatprep.subr.bf16.mxu0 0
  %4049 = vmatpush2.bf16.msra.mxu0 0
  %4050 = vmatprep.subr.bf16.mxu0 0
  %4051 = vmatpush2.bf16.msra.mxu0 0
  %4052 = vmatprep.subr.bf16.mxu0 0
  %4053 = vmatpush2.bf16.msra.mxu0 0
  %4054 = vmatprep.subr.bf16.mxu0 0
  %4055 = vmatpush2.bf16.msra.mxu0 0
  %4056 = vmatprep.subr.bf16.mxu0 0
  %4057 = vmatpush2.bf16.msra.mxu0 0
  %4058 = vmatprep.subr.bf16.mxu0 0
  %4059 = vmatpush2.bf16.msra.mxu0 0
  %4060 = vmatprep.subr.bf16.mxu0 0
  %4061 = vmatpush2.bf16.msra.mxu0 0
  %4062 = vmatprep.subr.bf16.mxu0 0
  %4063 = vmatpush2.bf16.msra.mxu0 0
  %4064 = vmatprep.mubr.bf16.mxu0 0
  %4065 = vmatmul.mubr.bf16.gmra.mxu0 %v4030
  %v4066 = vpop.f32.mrf.mxu0
  %v4067 = vadd.f32 0.0, %v4066
  %v4068 = vpop.f32.mrf.mxu0
  %v4069 = vpop.f32.mrf.mxu0
  %v4070 = vpop.f32.mrf.mxu0
  %4071 = vdwg.mxu0
  %v4072 = vadd.f32 %v4024, %v4025
  %v4073 = vmul.f32 %v4072, 0.5
  %v4074 = vadd.f32 %v4073, %v4067
  %s4075 = sld [smem:[#allocation2]]
  %v4076 = vstv %s4075
  %v4077 = vadd.f32 %v4074, %v4076
  %4078 = vst.msk [vmem:[%s13] sm:$0xff] %vm96, %v4077
  // Predicated region
  $region54: #{restrans_forward.1} parent=0 // pred_check
    _
  $region55: #{restrans_forward.1} parent=0 // pred_check_branch
    %4080 = sbr.rel (0) target = $region57
  $region56: #{restrans_forward.1} parent=0 // pred_region
    _
  $region57: #{restrans_forward.1} parent=0 // pred_fallthru
    _
  // Predicated region
  $region58: #{restrans_forward.1} parent=0 // pred_check
    _
  $region59: #{restrans_forward.1} parent=0 // pred_check_branch
    %4082 = sbr.rel (0) target = $region61
  $region60: #{restrans_forward.1} parent=0 // pred_region
    _
  $region61: #{restrans_forward.1} parent=0 // pred_fallthru
    _

</llo_original>
